<compile_context>
chip_gen: v6e
topology: v6e:2x2x1
jax: 0.10.0
libtpu: 0.0.40
codegen_flags: <defaults>
</compile_context>

<pallas_src>
import functools

import jax
import jax.numpy as jnp
from jax.experimental import pallas as pl
from jax.experimental.pallas import tpu as pltpu

_NEG_BIG = -1e30  # additive softmax mask value for non-edges


def _gatv2_heads(x, w_src_ref, b_src_ref, w_dst_ref, b_dst_ref, attn_ref,
                 bias, *, num_heads, head_dim, slope):
    """One full GATv2Conv layer (all heads) on traced values, lane-dense.

    x:    [N, Din] f32 value (all nodes, dst == src set).
    bias: [N, N]  f32 additive mask (0 where edge j->i exists, -1e30 else).
    attn_ref: SMEM ref of shape (num_heads*head_dim,) read as scalars.
    Returns [N, num_heads*head_dim] f32 (heads flattened, head-major).
    """
    # Fused projections for ALL heads: two lane-dense MXU matmuls (H*F lanes).
    fs = jnp.dot(x, w_src_ref[...], preferred_element_type=jnp.float32) + b_src_ref[...]
    fd = jnp.dot(x, w_dst_ref[...], preferred_element_type=jnp.float32) + b_dst_ref[...]
    # Transposed copy of fs so the per-feature rows needed by the score loop
    # are sublane slices (cheap) instead of 16-lane column slices (relayouts).
    fs_t = fs.T                                   # [H*F, N]  (one XLU transpose)
    fs_bf = fs.astype(jnp.bfloat16)               # bf16 operand for the PV matmul

    cols = []
    for h in range(num_heads):                    # static unroll over heads
        lo = h * head_dim
        # Lane-dense score accumulation: src axis on lanes, unrolled f-loop.
        #   score[i, j] = sum_f attn[f] * leaky_relu(fd[i, f] + fs[j, f])  + mask
        score = bias                              # [N, N] f32 (init with mask)
        for f in range(head_dim):
            r = lo + f
            a_r = attn_ref[r]                     # scalar read from SMEM
            e = fd[:, r:r + 1] + fs_t[r:r + 1, :]             # [N,1]+[1,N] -> [N,N]
            score = score + a_r * jnp.where(e > 0, e, slope * e)

        # Masked softmax over incoming edges j (in-degree >= 1 assumed, so the
        # -1e30 entries underflow to exactly 0 after the exp).
        m = jnp.max(score, axis=-1, keepdims=True)            # [N, 1]
        p = jnp.exp(score - m)                                 # [N, N]
        denom = jnp.sum(p, axis=-1, keepdims=True)             # [N, 1]

        # Aggregate on the MXU with bf16 operands / f32 accumulation; exact
        # f32 normalization of the tiny [N, F] result (nearly free).
        out_h = jnp.dot(p.astype(jnp.bfloat16), fs_bf[:, lo:lo + head_dim],
                        preferred_element_type=jnp.float32)    # [N, F]
        cols.append(out_h / denom)

    # Heads flattened head-major == torch `.view(nodes, heads * feat)`:
    # a single lane-dense [N, H*F] value, no per-head 16-lane stores.
    return jnp.concatenate(cols, axis=-1) if num_heads > 1 else cols[0]


def _fused_gat_kernel(adj_ref, x_ref,
                      w_src1_ref, b_src1_ref, w_dst1_ref, b_dst1_ref, attn1_ref,
                      w_src2_ref, b_src2_ref, w_dst2_ref, b_dst2_ref, attn2_ref,
                      out_ref, *, num_heads, out_dim, slope):
    """conv1 (H heads) -> conv2 (1 head), fused in a single pallas_call."""
    # Additive softmax mask built in-kernel from the int8 adjacency (1 byte
    # per entry over HBM); shared by both conv layers.
    adj = adj_ref[...].astype(jnp.float32)                     # [N, N]
    bias = jnp.where(adj > 0.5, jnp.float32(0.0), jnp.float32(_NEG_BIG))

    x = x_ref[...]                                             # [N, Din]
    h = _gatv2_heads(x, w_src1_ref, b_src1_ref, w_dst1_ref, b_dst1_ref,
                     attn1_ref, bias, num_heads=num_heads, head_dim=out_dim,
                     slope=slope)                              # [N, H*F] stays on-chip
    out = _gatv2_heads(h, w_src2_ref, b_src2_ref, w_dst2_ref, b_dst2_ref,
                       attn2_ref, bias, num_heads=1, head_dim=out_dim,
                       slope=slope)                            # [N, F]
    out_ref[...] = out                                         # single full-width store


def multi_head_gat_layer(adj, x, params, *, num_heads, out_dim, negative_slope=0.2):
    """Forward of MultiHeadGATLayer: conv1 -> flatten heads -> conv2 -> squeeze.

    adj: [N, N] (adj[i, j] != 0 iff edge j->i), x: [N, in_dim] f32.
    params = (conv1_params, conv2_params), each (W_src, b_src, W_dst, b_dst, attn)
    with W_*: [din, heads*out_dim], b_*/attn: [1, heads*out_dim].
    """
    # TODO(synk): graphs that don't fit VMEM need the unfused per-layer path:
    # dst-row grid ("parallel", >=2 steps so v7x's two TensorCores both work),
    # flash-style online-softmax tiling over the src axis with per-generation
    # (TQ, TS) sizes / vmem_limit_bytes, and fs precomputed once outside the
    # dst grid instead of per tile.
    (w_src1, b_src1, w_dst1, b_dst1, attn1), \
        (w_src2, b_src2, w_dst2, b_dst2, attn2) = params
    n, _ = x.shape

    adj_i8 = (adj > 0).astype(jnp.int8)        # 1-byte adjacency stream
    attn1_flat = attn1.reshape(-1)             # SMEM scalar tables
    attn2_flat = attn2.reshape(-1)

    vmem = pl.BlockSpec(memory_space=pltpu.MemorySpace.VMEM)
    smem = pl.BlockSpec(memory_space=pltpu.MemorySpace.SMEM)

    kernel = functools.partial(_fused_gat_kernel, num_heads=num_heads,
                               out_dim=out_dim, slope=negative_slope)
    return pl.pallas_call(
        kernel,
        out_shape=jax.ShapeDtypeStruct((n, out_dim), jnp.float32),
        in_specs=[vmem, vmem,                   # adj (int8), x
                  vmem, vmem, vmem, vmem, smem,  # conv1: W_src, b_src, W_dst, b_dst, attn
                  vmem, vmem, vmem, vmem, smem],  # conv2
        out_specs=vmem,
    )(adj_i8, x, w_src1, b_src1, w_dst1, b_dst1, attn1_flat,
      w_src2, b_src2, w_dst2, b_dst2, attn2_flat)


# ----------------------------- pure-JAX reference ----------------------------
def _gatv2_ref(x, w_src, b_src, w_dst, b_dst, attn, adj, num_heads, head_dim,
               neg_slope):
    n = x.shape[0]
    fs = (x @ w_src + b_src).reshape(n, num_heads, head_dim)
    fd = (x @ w_dst + b_dst).reshape(n, num_heads, head_dim)
    a = attn.reshape(num_heads, head_dim)
    e = fs[None, :, :, :] + fd[:, None, :, :]              # [dst, src, H, F]
    e = jnp.where(e > 0, e, neg_slope * e)
    s = jnp.einsum("ijhf,hf->ijh", e, a)
    s = s + ((adj - 1.0) * 1e30)[:, :, None]
    s = s - jnp.max(s, axis=1, keepdims=True)
    p = jnp.exp(s)
    alpha = p / jnp.sum(p, axis=1, keepdims=True)
    out = jnp.einsum("ijh,jhf->ihf", alpha, fs)             # [dst, H, F]
    return out.reshape(n, num_heads * head_dim)


def _ref_forward(adj, x, params, num_heads, out_dim, neg_slope=0.2):
    p1, p2 = params
    h = _gatv2_ref(x, *p1, adj, num_heads, out_dim, neg_slope)
    h = _gatv2_ref(h, *p2, adj, 1, out_dim, neg_slope)
    return h


# ------------------------------------ main ------------------------------------
if __name__ == "__main__":
    N = 16          # nodes
    IN_DIM = 8
    OUT_DIM = 16
    HEADS = 4

    key = jax.random.PRNGKey(0)
    keys = jax.random.split(key, 4)

    # Node features.
    x = jax.random.normal(keys[0], (N, IN_DIM), dtype=jnp.float32)

    # Dense adjacency: adj[i, j] = 1 iff edge j -> i; self-loops guarantee
    # in-degree >= 1 for every node (required by GATv2Conv semantics).
    adj = (jax.random.uniform(keys[1], (N, N)) < 0.3).astype(jnp.float32)
    adj = jnp.maximum(adj, jnp.eye(N, dtype=jnp.float32))

    def init_conv(kk, din, dout, heads):
        k = jax.random.split(kk, 5)
        hf = heads * dout
        return (0.1 * jax.random.normal(k[0], (din, hf), jnp.float32),   # W_src
                0.1 * jax.random.normal(k[1], (1, hf), jnp.float32),     # b_src
                0.1 * jax.random.normal(k[2], (din, hf), jnp.float32),   # W_dst
                0.1 * jax.random.normal(k[3], (1, hf), jnp.float32),     # b_dst
                0.1 * jax.random.normal(k[4], (1, hf), jnp.float32))     # attn

    params = (
        init_conv(keys[2], IN_DIM, OUT_DIM, HEADS),            # conv1
        init_conv(keys[3], OUT_DIM * HEADS, OUT_DIM, 1),       # conv2
    )

    out = multi_head_gat_layer(adj, x, params, num_heads=HEADS, out_dim=OUT_DIM)
    out = jax.block_until_ready(out)

    ref = _ref_forward(adj, x, params, HEADS, OUT_DIM)
    assert out.shape == (N, OUT_DIM), out.shape
    # Tolerance 2e-2: the aggregation matmuls use bf16 operands (per perf
    # review, MXU-native); measured error after two stacked layers is ~1e-3,
    # so this leaves a comfortable margin.  Softmax normalization itself is an
    # exact f32 divide (the previous approx-reciprocal was removed).
    assert jnp.allclose(out, ref, rtol=2e-2, atol=2e-2), "mismatch vs reference"

    print("KERNEL_OK")
</pallas_src>

<mosaic_0001>
module attributes {stable_mosaic.version = 11 : i64} {
  func.func @_fused_gat_kernel(%arg0: memref<16x16xi8, #tpu.memory_space<vmem>>, %arg1: memref<16x8xf32, #tpu.memory_space<vmem>>, %arg2: memref<8x64xf32, #tpu.memory_space<vmem>>, %arg3: memref<1x64xf32, #tpu.memory_space<vmem>>, %arg4: memref<8x64xf32, #tpu.memory_space<vmem>>, %arg5: memref<1x64xf32, #tpu.memory_space<vmem>>, %arg6: memref<64xf32, #tpu.memory_space<smem>>, %arg7: memref<64x16xf32, #tpu.memory_space<vmem>>, %arg8: memref<1x16xf32, #tpu.memory_space<vmem>>, %arg9: memref<64x16xf32, #tpu.memory_space<vmem>>, %arg10: memref<1x16xf32, #tpu.memory_space<vmem>>, %arg11: memref<16xf32, #tpu.memory_space<smem>>, %arg12: memref<16x16xf32, #tpu.memory_space<vmem>>) attributes {dimension_semantics = [], scalar_prefetch = 0 : i64, scratch_operands = 0 : i64, tpu.core_type = #tpu.core_type<tc>} {
    %c0 = arith.constant 0 : index
    %c0_0 = arith.constant 0 : index
    %0 = vector.load %arg0[%c0, %c0_0] : memref<16x16xi8, #tpu.memory_space<vmem>>, vector<16x16xi8>
    %1 = arith.sitofp %0 : vector<16x16xi8> to vector<16x16xf32>
    %cst = arith.constant 5.000000e-01 : f32
    %2 = vector.broadcast %cst : f32 to vector<16x16xf32>
    %3 = arith.cmpf ogt, %1, %2 : vector<16x16xf32>
    %cst_1 = arith.constant 0.000000e+00 : f32
    %cst_2 = arith.constant -1.000000e+30 : f32
    %4 = vector.broadcast %cst_1 : f32 to vector<16x16xf32>
    %5 = vector.broadcast %cst_2 : f32 to vector<16x16xf32>
    %6 = arith.select %3, %4, %5 : vector<16x16xi1>, vector<16x16xf32>
    %c0_3 = arith.constant 0 : index
    %c0_4 = arith.constant 0 : index
    %7 = vector.load %arg1[%c0_3, %c0_4] : memref<16x8xf32, #tpu.memory_space<vmem>>, vector<16x8xf32>
    %c0_5 = arith.constant 0 : index
    %c0_6 = arith.constant 0 : index
    %8 = vector.load %arg2[%c0_5, %c0_6] : memref<8x64xf32, #tpu.memory_space<vmem>>, vector<8x64xf32>
    %cst_7 = arith.constant dense<0.000000e+00> : vector<16x64xf32>
    %9 = tpu.matmul %7, %8, %cst_7 {dimension_numbers = #tpu.dot_dimension_numbers<[1], [0], [0], [1], [0, 0, 1, 1], [], []>} : vector<16x8xf32>, vector<8x64xf32>, vector<16x64xf32> -> vector<16x64xf32>
    %c0_8 = arith.constant 0 : index
    %c0_9 = arith.constant 0 : index
    %10 = vector.load %arg3[%c0_8, %c0_9] : memref<1x64xf32, #tpu.memory_space<vmem>>, vector<1x64xf32>
    %11 = vector.broadcast %10 : vector<1x64xf32> to vector<16x64xf32>
    %12 = arith.addf %9, %11 : vector<16x64xf32>
    %c0_10 = arith.constant 0 : index
    %c0_11 = arith.constant 0 : index
    %13 = vector.load %arg4[%c0_10, %c0_11] : memref<8x64xf32, #tpu.memory_space<vmem>>, vector<8x64xf32>
    %cst_12 = arith.constant dense<0.000000e+00> : vector<16x64xf32>
    %14 = tpu.matmul %7, %13, %cst_12 {dimension_numbers = #tpu.dot_dimension_numbers<[1], [0], [0], [1], [0, 0, 1, 1], [], []>} : vector<16x8xf32>, vector<8x64xf32>, vector<16x64xf32> -> vector<16x64xf32>
    %c0_13 = arith.constant 0 : index
    %c0_14 = arith.constant 0 : index
    %15 = vector.load %arg5[%c0_13, %c0_14] : memref<1x64xf32, #tpu.memory_space<vmem>>, vector<1x64xf32>
    %16 = vector.broadcast %15 : vector<1x64xf32> to vector<16x64xf32>
    %17 = arith.addf %14, %16 : vector<16x64xf32>
    %18 = tpu.transpose %12, [1, 0] : vector<16x64xf32> -> vector<64x16xf32>
    %19 = arith.truncf %12 : vector<16x64xf32> to vector<16x64xbf16>
    %c0_15 = arith.constant 0 : index
    %20 = memref.load %arg6[%c0_15] : memref<64xf32, #tpu.memory_space<smem>>
    %21 = vector.extract_strided_slice %17 {offsets = [0, 0], sizes = [16, 1], strides = [1, 1]} : vector<16x64xf32> to vector<16x1xf32>
    %22 = vector.extract_strided_slice %18 {offsets = [0, 0], sizes = [1, 16], strides = [1, 1]} : vector<64x16xf32> to vector<1x16xf32>
    %23 = vector.broadcast %21 : vector<16x1xf32> to vector<16x16xf32>
    %24 = vector.broadcast %22 : vector<1x16xf32> to vector<16x16xf32>
    %25 = arith.addf %23, %24 : vector<16x16xf32>
    %cst_16 = arith.constant 0.000000e+00 : f32
    %26 = vector.broadcast %cst_16 : f32 to vector<16x16xf32>
    %27 = arith.cmpf ogt, %25, %26 : vector<16x16xf32>
    %cst_17 = arith.constant 2.000000e-01 : f32
    %28 = vector.broadcast %cst_17 : f32 to vector<16x16xf32>
    %29 = arith.mulf %28, %25 : vector<16x16xf32>
    %30 = arith.select %27, %25, %29 : vector<16x16xi1>, vector<16x16xf32>
    %31 = vector.broadcast %20 : f32 to vector<16x16xf32>
    %32 = arith.mulf %31, %30 : vector<16x16xf32>
    %33 = arith.addf %6, %32 : vector<16x16xf32>
    %c1 = arith.constant 1 : index
    %34 = memref.load %arg6[%c1] : memref<64xf32, #tpu.memory_space<smem>>
    %35 = vector.extract_strided_slice %17 {offsets = [0, 1], sizes = [16, 1], strides = [1, 1]} : vector<16x64xf32> to vector<16x1xf32>
    %36 = vector.extract_strided_slice %18 {offsets = [1, 0], sizes = [1, 16], strides = [1, 1]} : vector<64x16xf32> to vector<1x16xf32>
    %37 = vector.broadcast %35 : vector<16x1xf32> to vector<16x16xf32>
    %38 = vector.broadcast %36 : vector<1x16xf32> to vector<16x16xf32>
    %39 = arith.addf %37, %38 : vector<16x16xf32>
    %cst_18 = arith.constant 0.000000e+00 : f32
    %40 = vector.broadcast %cst_18 : f32 to vector<16x16xf32>
    %41 = arith.cmpf ogt, %39, %40 : vector<16x16xf32>
    %cst_19 = arith.constant 2.000000e-01 : f32
    %42 = vector.broadcast %cst_19 : f32 to vector<16x16xf32>
    %43 = arith.mulf %42, %39 : vector<16x16xf32>
    %44 = arith.select %41, %39, %43 : vector<16x16xi1>, vector<16x16xf32>
    %45 = vector.broadcast %34 : f32 to vector<16x16xf32>
    %46 = arith.mulf %45, %44 : vector<16x16xf32>
    %47 = arith.addf %33, %46 : vector<16x16xf32>
    %c2 = arith.constant 2 : index
    %48 = memref.load %arg6[%c2] : memref<64xf32, #tpu.memory_space<smem>>
    %49 = vector.extract_strided_slice %17 {offsets = [0, 2], sizes = [16, 1], strides = [1, 1]} : vector<16x64xf32> to vector<16x1xf32>
    %50 = vector.extract_strided_slice %18 {offsets = [2, 0], sizes = [1, 16], strides = [1, 1]} : vector<64x16xf32> to vector<1x16xf32>
    %51 = vector.broadcast %49 : vector<16x1xf32> to vector<16x16xf32>
    %52 = vector.broadcast %50 : vector<1x16xf32> to vector<16x16xf32>
    %53 = arith.addf %51, %52 : vector<16x16xf32>
    %cst_20 = arith.constant 0.000000e+00 : f32
    %54 = vector.broadcast %cst_20 : f32 to vector<16x16xf32>
    %55 = arith.cmpf ogt, %53, %54 : vector<16x16xf32>
    %cst_21 = arith.constant 2.000000e-01 : f32
    %56 = vector.broadcast %cst_21 : f32 to vector<16x16xf32>
    %57 = arith.mulf %56, %53 : vector<16x16xf32>
    %58 = arith.select %55, %53, %57 : vector<16x16xi1>, vector<16x16xf32>
    %59 = vector.broadcast %48 : f32 to vector<16x16xf32>
    %60 = arith.mulf %59, %58 : vector<16x16xf32>
    %61 = arith.addf %47, %60 : vector<16x16xf32>
    %c3 = arith.constant 3 : index
    %62 = memref.load %arg6[%c3] : memref<64xf32, #tpu.memory_space<smem>>
    %63 = vector.extract_strided_slice %17 {offsets = [0, 3], sizes = [16, 1], strides = [1, 1]} : vector<16x64xf32> to vector<16x1xf32>
    %64 = vector.extract_strided_slice %18 {offsets = [3, 0], sizes = [1, 16], strides = [1, 1]} : vector<64x16xf32> to vector<1x16xf32>
    %65 = vector.broadcast %63 : vector<16x1xf32> to vector<16x16xf32>
    %66 = vector.broadcast %64 : vector<1x16xf32> to vector<16x16xf32>
    %67 = arith.addf %65, %66 : vector<16x16xf32>
    %cst_22 = arith.constant 0.000000e+00 : f32
    %68 = vector.broadcast %cst_22 : f32 to vector<16x16xf32>
    %69 = arith.cmpf ogt, %67, %68 : vector<16x16xf32>
    %cst_23 = arith.constant 2.000000e-01 : f32
    %70 = vector.broadcast %cst_23 : f32 to vector<16x16xf32>
    %71 = arith.mulf %70, %67 : vector<16x16xf32>
    %72 = arith.select %69, %67, %71 : vector<16x16xi1>, vector<16x16xf32>
    %73 = vector.broadcast %62 : f32 to vector<16x16xf32>
    %74 = arith.mulf %73, %72 : vector<16x16xf32>
    %75 = arith.addf %61, %74 : vector<16x16xf32>
    %c4 = arith.constant 4 : index
    %76 = memref.load %arg6[%c4] : memref<64xf32, #tpu.memory_space<smem>>
    %77 = vector.extract_strided_slice %17 {offsets = [0, 4], sizes = [16, 1], strides = [1, 1]} : vector<16x64xf32> to vector<16x1xf32>
    %78 = vector.extract_strided_slice %18 {offsets = [4, 0], sizes = [1, 16], strides = [1, 1]} : vector<64x16xf32> to vector<1x16xf32>
    %79 = vector.broadcast %77 : vector<16x1xf32> to vector<16x16xf32>
    %80 = vector.broadcast %78 : vector<1x16xf32> to vector<16x16xf32>
    %81 = arith.addf %79, %80 : vector<16x16xf32>
    %cst_24 = arith.constant 0.000000e+00 : f32
    %82 = vector.broadcast %cst_24 : f32 to vector<16x16xf32>
    %83 = arith.cmpf ogt, %81, %82 : vector<16x16xf32>
    %cst_25 = arith.constant 2.000000e-01 : f32
    %84 = vector.broadcast %cst_25 : f32 to vector<16x16xf32>
    %85 = arith.mulf %84, %81 : vector<16x16xf32>
    %86 = arith.select %83, %81, %85 : vector<16x16xi1>, vector<16x16xf32>
    %87 = vector.broadcast %76 : f32 to vector<16x16xf32>
    %88 = arith.mulf %87, %86 : vector<16x16xf32>
    %89 = arith.addf %75, %88 : vector<16x16xf32>
    %c5 = arith.constant 5 : index
    %90 = memref.load %arg6[%c5] : memref<64xf32, #tpu.memory_space<smem>>
    %91 = vector.extract_strided_slice %17 {offsets = [0, 5], sizes = [16, 1], strides = [1, 1]} : vector<16x64xf32> to vector<16x1xf32>
    %92 = vector.extract_strided_slice %18 {offsets = [5, 0], sizes = [1, 16], strides = [1, 1]} : vector<64x16xf32> to vector<1x16xf32>
    %93 = vector.broadcast %91 : vector<16x1xf32> to vector<16x16xf32>
    %94 = vector.broadcast %92 : vector<1x16xf32> to vector<16x16xf32>
    %95 = arith.addf %93, %94 : vector<16x16xf32>
    %cst_26 = arith.constant 0.000000e+00 : f32
    %96 = vector.broadcast %cst_26 : f32 to vector<16x16xf32>
    %97 = arith.cmpf ogt, %95, %96 : vector<16x16xf32>
    %cst_27 = arith.constant 2.000000e-01 : f32
    %98 = vector.broadcast %cst_27 : f32 to vector<16x16xf32>
    %99 = arith.mulf %98, %95 : vector<16x16xf32>
    %100 = arith.select %97, %95, %99 : vector<16x16xi1>, vector<16x16xf32>
    %101 = vector.broadcast %90 : f32 to vector<16x16xf32>
    %102 = arith.mulf %101, %100 : vector<16x16xf32>
    %103 = arith.addf %89, %102 : vector<16x16xf32>
    %c6 = arith.constant 6 : index
    %104 = memref.load %arg6[%c6] : memref<64xf32, #tpu.memory_space<smem>>
    %105 = vector.extract_strided_slice %17 {offsets = [0, 6], sizes = [16, 1], strides = [1, 1]} : vector<16x64xf32> to vector<16x1xf32>
    %106 = vector.extract_strided_slice %18 {offsets = [6, 0], sizes = [1, 16], strides = [1, 1]} : vector<64x16xf32> to vector<1x16xf32>
    %107 = vector.broadcast %105 : vector<16x1xf32> to vector<16x16xf32>
    %108 = vector.broadcast %106 : vector<1x16xf32> to vector<16x16xf32>
    %109 = arith.addf %107, %108 : vector<16x16xf32>
    %cst_28 = arith.constant 0.000000e+00 : f32
    %110 = vector.broadcast %cst_28 : f32 to vector<16x16xf32>
    %111 = arith.cmpf ogt, %109, %110 : vector<16x16xf32>
    %cst_29 = arith.constant 2.000000e-01 : f32
    %112 = vector.broadcast %cst_29 : f32 to vector<16x16xf32>
    %113 = arith.mulf %112, %109 : vector<16x16xf32>
    %114 = arith.select %111, %109, %113 : vector<16x16xi1>, vector<16x16xf32>
    %115 = vector.broadcast %104 : f32 to vector<16x16xf32>
    %116 = arith.mulf %115, %114 : vector<16x16xf32>
    %117 = arith.addf %103, %116 : vector<16x16xf32>
    %c7 = arith.constant 7 : index
    %118 = memref.load %arg6[%c7] : memref<64xf32, #tpu.memory_space<smem>>
    %119 = vector.extract_strided_slice %17 {offsets = [0, 7], sizes = [16, 1], strides = [1, 1]} : vector<16x64xf32> to vector<16x1xf32>
    %120 = vector.extract_strided_slice %18 {offsets = [7, 0], sizes = [1, 16], strides = [1, 1]} : vector<64x16xf32> to vector<1x16xf32>
    %121 = vector.broadcast %119 : vector<16x1xf32> to vector<16x16xf32>
    %122 = vector.broadcast %120 : vector<1x16xf32> to vector<16x16xf32>
    %123 = arith.addf %121, %122 : vector<16x16xf32>
    %cst_30 = arith.constant 0.000000e+00 : f32
    %124 = vector.broadcast %cst_30 : f32 to vector<16x16xf32>
    %125 = arith.cmpf ogt, %123, %124 : vector<16x16xf32>
    %cst_31 = arith.constant 2.000000e-01 : f32
    %126 = vector.broadcast %cst_31 : f32 to vector<16x16xf32>
    %127 = arith.mulf %126, %123 : vector<16x16xf32>
    %128 = arith.select %125, %123, %127 : vector<16x16xi1>, vector<16x16xf32>
    %129 = vector.broadcast %118 : f32 to vector<16x16xf32>
    %130 = arith.mulf %129, %128 : vector<16x16xf32>
    %131 = arith.addf %117, %130 : vector<16x16xf32>
    %c8 = arith.constant 8 : index
    %132 = memref.load %arg6[%c8] : memref<64xf32, #tpu.memory_space<smem>>
    %133 = vector.extract_strided_slice %17 {offsets = [0, 8], sizes = [16, 1], strides = [1, 1]} : vector<16x64xf32> to vector<16x1xf32>
    %134 = vector.extract_strided_slice %18 {offsets = [8, 0], sizes = [1, 16], strides = [1, 1]} : vector<64x16xf32> to vector<1x16xf32>
    %135 = vector.broadcast %133 : vector<16x1xf32> to vector<16x16xf32>
    %136 = vector.broadcast %134 : vector<1x16xf32> to vector<16x16xf32>
    %137 = arith.addf %135, %136 : vector<16x16xf32>
    %cst_32 = arith.constant 0.000000e+00 : f32
    %138 = vector.broadcast %cst_32 : f32 to vector<16x16xf32>
    %139 = arith.cmpf ogt, %137, %138 : vector<16x16xf32>
    %cst_33 = arith.constant 2.000000e-01 : f32
    %140 = vector.broadcast %cst_33 : f32 to vector<16x16xf32>
    %141 = arith.mulf %140, %137 : vector<16x16xf32>
    %142 = arith.select %139, %137, %141 : vector<16x16xi1>, vector<16x16xf32>
    %143 = vector.broadcast %132 : f32 to vector<16x16xf32>
    %144 = arith.mulf %143, %142 : vector<16x16xf32>
    %145 = arith.addf %131, %144 : vector<16x16xf32>
    %c9 = arith.constant 9 : index
    %146 = memref.load %arg6[%c9] : memref<64xf32, #tpu.memory_space<smem>>
    %147 = vector.extract_strided_slice %17 {offsets = [0, 9], sizes = [16, 1], strides = [1, 1]} : vector<16x64xf32> to vector<16x1xf32>
    %148 = vector.extract_strided_slice %18 {offsets = [9, 0], sizes = [1, 16], strides = [1, 1]} : vector<64x16xf32> to vector<1x16xf32>
    %149 = vector.broadcast %147 : vector<16x1xf32> to vector<16x16xf32>
    %150 = vector.broadcast %148 : vector<1x16xf32> to vector<16x16xf32>
    %151 = arith.addf %149, %150 : vector<16x16xf32>
    %cst_34 = arith.constant 0.000000e+00 : f32
    %152 = vector.broadcast %cst_34 : f32 to vector<16x16xf32>
    %153 = arith.cmpf ogt, %151, %152 : vector<16x16xf32>
    %cst_35 = arith.constant 2.000000e-01 : f32
    %154 = vector.broadcast %cst_35 : f32 to vector<16x16xf32>
    %155 = arith.mulf %154, %151 : vector<16x16xf32>
    %156 = arith.select %153, %151, %155 : vector<16x16xi1>, vector<16x16xf32>
    %157 = vector.broadcast %146 : f32 to vector<16x16xf32>
    %158 = arith.mulf %157, %156 : vector<16x16xf32>
    %159 = arith.addf %145, %158 : vector<16x16xf32>
    %c10 = arith.constant 10 : index
    %160 = memref.load %arg6[%c10] : memref<64xf32, #tpu.memory_space<smem>>
    %161 = vector.extract_strided_slice %17 {offsets = [0, 10], sizes = [16, 1], strides = [1, 1]} : vector<16x64xf32> to vector<16x1xf32>
    %162 = vector.extract_strided_slice %18 {offsets = [10, 0], sizes = [1, 16], strides = [1, 1]} : vector<64x16xf32> to vector<1x16xf32>
    %163 = vector.broadcast %161 : vector<16x1xf32> to vector<16x16xf32>
    %164 = vector.broadcast %162 : vector<1x16xf32> to vector<16x16xf32>
    %165 = arith.addf %163, %164 : vector<16x16xf32>
    %cst_36 = arith.constant 0.000000e+00 : f32
    %166 = vector.broadcast %cst_36 : f32 to vector<16x16xf32>
    %167 = arith.cmpf ogt, %165, %166 : vector<16x16xf32>
    %cst_37 = arith.constant 2.000000e-01 : f32
    %168 = vector.broadcast %cst_37 : f32 to vector<16x16xf32>
    %169 = arith.mulf %168, %165 : vector<16x16xf32>
    %170 = arith.select %167, %165, %169 : vector<16x16xi1>, vector<16x16xf32>
    %171 = vector.broadcast %160 : f32 to vector<16x16xf32>
    %172 = arith.mulf %171, %170 : vector<16x16xf32>
    %173 = arith.addf %159, %172 : vector<16x16xf32>
    %c11 = arith.constant 11 : index
    %174 = memref.load %arg6[%c11] : memref<64xf32, #tpu.memory_space<smem>>
    %175 = vector.extract_strided_slice %17 {offsets = [0, 11], sizes = [16, 1], strides = [1, 1]} : vector<16x64xf32> to vector<16x1xf32>
    %176 = vector.extract_strided_slice %18 {offsets = [11, 0], sizes = [1, 16], strides = [1, 1]} : vector<64x16xf32> to vector<1x16xf32>
    %177 = vector.broadcast %175 : vector<16x1xf32> to vector<16x16xf32>
    %178 = vector.broadcast %176 : vector<1x16xf32> to vector<16x16xf32>
    %179 = arith.addf %177, %178 : vector<16x16xf32>
    %cst_38 = arith.constant 0.000000e+00 : f32
    %180 = vector.broadcast %cst_38 : f32 to vector<16x16xf32>
    %181 = arith.cmpf ogt, %179, %180 : vector<16x16xf32>
    %cst_39 = arith.constant 2.000000e-01 : f32
    %182 = vector.broadcast %cst_39 : f32 to vector<16x16xf32>
    %183 = arith.mulf %182, %179 : vector<16x16xf32>
    %184 = arith.select %181, %179, %183 : vector<16x16xi1>, vector<16x16xf32>
    %185 = vector.broadcast %174 : f32 to vector<16x16xf32>
    %186 = arith.mulf %185, %184 : vector<16x16xf32>
    %187 = arith.addf %173, %186 : vector<16x16xf32>
    %c12 = arith.constant 12 : index
    %188 = memref.load %arg6[%c12] : memref<64xf32, #tpu.memory_space<smem>>
    %189 = vector.extract_strided_slice %17 {offsets = [0, 12], sizes = [16, 1], strides = [1, 1]} : vector<16x64xf32> to vector<16x1xf32>
    %190 = vector.extract_strided_slice %18 {offsets = [12, 0], sizes = [1, 16], strides = [1, 1]} : vector<64x16xf32> to vector<1x16xf32>
    %191 = vector.broadcast %189 : vector<16x1xf32> to vector<16x16xf32>
    %192 = vector.broadcast %190 : vector<1x16xf32> to vector<16x16xf32>
    %193 = arith.addf %191, %192 : vector<16x16xf32>
    %cst_40 = arith.constant 0.000000e+00 : f32
    %194 = vector.broadcast %cst_40 : f32 to vector<16x16xf32>
    %195 = arith.cmpf ogt, %193, %194 : vector<16x16xf32>
    %cst_41 = arith.constant 2.000000e-01 : f32
    %196 = vector.broadcast %cst_41 : f32 to vector<16x16xf32>
    %197 = arith.mulf %196, %193 : vector<16x16xf32>
    %198 = arith.select %195, %193, %197 : vector<16x16xi1>, vector<16x16xf32>
    %199 = vector.broadcast %188 : f32 to vector<16x16xf32>
    %200 = arith.mulf %199, %198 : vector<16x16xf32>
    %201 = arith.addf %187, %200 : vector<16x16xf32>
    %c13 = arith.constant 13 : index
    %202 = memref.load %arg6[%c13] : memref<64xf32, #tpu.memory_space<smem>>
    %203 = vector.extract_strided_slice %17 {offsets = [0, 13], sizes = [16, 1], strides = [1, 1]} : vector<16x64xf32> to vector<16x1xf32>
    %204 = vector.extract_strided_slice %18 {offsets = [13, 0], sizes = [1, 16], strides = [1, 1]} : vector<64x16xf32> to vector<1x16xf32>
    %205 = vector.broadcast %203 : vector<16x1xf32> to vector<16x16xf32>
    %206 = vector.broadcast %204 : vector<1x16xf32> to vector<16x16xf32>
    %207 = arith.addf %205, %206 : vector<16x16xf32>
    %cst_42 = arith.constant 0.000000e+00 : f32
    %208 = vector.broadcast %cst_42 : f32 to vector<16x16xf32>
    %209 = arith.cmpf ogt, %207, %208 : vector<16x16xf32>
    %cst_43 = arith.constant 2.000000e-01 : f32
    %210 = vector.broadcast %cst_43 : f32 to vector<16x16xf32>
    %211 = arith.mulf %210, %207 : vector<16x16xf32>
    %212 = arith.select %209, %207, %211 : vector<16x16xi1>, vector<16x16xf32>
    %213 = vector.broadcast %202 : f32 to vector<16x16xf32>
    %214 = arith.mulf %213, %212 : vector<16x16xf32>
    %215 = arith.addf %201, %214 : vector<16x16xf32>
    %c14 = arith.constant 14 : index
    %216 = memref.load %arg6[%c14] : memref<64xf32, #tpu.memory_space<smem>>
    %217 = vector.extract_strided_slice %17 {offsets = [0, 14], sizes = [16, 1], strides = [1, 1]} : vector<16x64xf32> to vector<16x1xf32>
    %218 = vector.extract_strided_slice %18 {offsets = [14, 0], sizes = [1, 16], strides = [1, 1]} : vector<64x16xf32> to vector<1x16xf32>
    %219 = vector.broadcast %217 : vector<16x1xf32> to vector<16x16xf32>
    %220 = vector.broadcast %218 : vector<1x16xf32> to vector<16x16xf32>
    %221 = arith.addf %219, %220 : vector<16x16xf32>
    %cst_44 = arith.constant 0.000000e+00 : f32
    %222 = vector.broadcast %cst_44 : f32 to vector<16x16xf32>
    %223 = arith.cmpf ogt, %221, %222 : vector<16x16xf32>
    %cst_45 = arith.constant 2.000000e-01 : f32
    %224 = vector.broadcast %cst_45 : f32 to vector<16x16xf32>
    %225 = arith.mulf %224, %221 : vector<16x16xf32>
    %226 = arith.select %223, %221, %225 : vector<16x16xi1>, vector<16x16xf32>
    %227 = vector.broadcast %216 : f32 to vector<16x16xf32>
    %228 = arith.mulf %227, %226 : vector<16x16xf32>
    %229 = arith.addf %215, %228 : vector<16x16xf32>
    %c15 = arith.constant 15 : index
    %230 = memref.load %arg6[%c15] : memref<64xf32, #tpu.memory_space<smem>>
    %231 = vector.extract_strided_slice %17 {offsets = [0, 15], sizes = [16, 1], strides = [1, 1]} : vector<16x64xf32> to vector<16x1xf32>
    %232 = vector.extract_strided_slice %18 {offsets = [15, 0], sizes = [1, 16], strides = [1, 1]} : vector<64x16xf32> to vector<1x16xf32>
    %233 = vector.broadcast %231 : vector<16x1xf32> to vector<16x16xf32>
    %234 = vector.broadcast %232 : vector<1x16xf32> to vector<16x16xf32>
    %235 = arith.addf %233, %234 : vector<16x16xf32>
    %cst_46 = arith.constant 0.000000e+00 : f32
    %236 = vector.broadcast %cst_46 : f32 to vector<16x16xf32>
    %237 = arith.cmpf ogt, %235, %236 : vector<16x16xf32>
    %cst_47 = arith.constant 2.000000e-01 : f32
    %238 = vector.broadcast %cst_47 : f32 to vector<16x16xf32>
    %239 = arith.mulf %238, %235 : vector<16x16xf32>
    %240 = arith.select %237, %235, %239 : vector<16x16xi1>, vector<16x16xf32>
    %241 = vector.broadcast %230 : f32 to vector<16x16xf32>
    %242 = arith.mulf %241, %240 : vector<16x16xf32>
    %243 = arith.addf %229, %242 : vector<16x16xf32>
    %cst_48 = arith.constant dense<0xFF800000> : vector<16xf32>
    %244 = vector.multi_reduction <maximumf>, %243, %cst_48 [1] : vector<16x16xf32> to vector<16xf32>
    %245 = vector.shape_cast %244 : vector<16xf32> to vector<16x1xf32>
    %246 = vector.broadcast %245 : vector<16x1xf32> to vector<16x16xf32>
    %247 = arith.subf %243, %246 : vector<16x16xf32>
    %248 = math.exp %247 : vector<16x16xf32>
    %cst_49 = arith.constant dense<0.000000e+00> : vector<16xf32>
    %249 = vector.multi_reduction <add>, %248, %cst_49 [1] : vector<16x16xf32> to vector<16xf32>
    %250 = vector.shape_cast %249 : vector<16xf32> to vector<16x1xf32>
    %251 = arith.truncf %248 : vector<16x16xf32> to vector<16x16xbf16>
    %252 = vector.extract_strided_slice %19 {offsets = [0, 0], sizes = [16, 16], strides = [1, 1]} : vector<16x64xbf16> to vector<16x16xbf16>
    %cst_50 = arith.constant dense<0.000000e+00> : vector<16x16xf32>
    %253 = tpu.matmul %251, %252, %cst_50 {dimension_numbers = #tpu.dot_dimension_numbers<[1], [0], [0], [1], [0, 0, 1, 1], [], []>} : vector<16x16xbf16>, vector<16x16xbf16>, vector<16x16xf32> -> vector<16x16xf32>
    %254 = vector.broadcast %250 : vector<16x1xf32> to vector<16x16xf32>
    %255 = arith.divf %253, %254 : vector<16x16xf32>
    %c16 = arith.constant 16 : index
    %256 = memref.load %arg6[%c16] : memref<64xf32, #tpu.memory_space<smem>>
    %257 = vector.extract_strided_slice %17 {offsets = [0, 16], sizes = [16, 1], strides = [1, 1]} : vector<16x64xf32> to vector<16x1xf32>
    %258 = vector.extract_strided_slice %18 {offsets = [16, 0], sizes = [1, 16], strides = [1, 1]} : vector<64x16xf32> to vector<1x16xf32>
    %259 = vector.broadcast %257 : vector<16x1xf32> to vector<16x16xf32>
    %260 = vector.broadcast %258 : vector<1x16xf32> to vector<16x16xf32>
    %261 = arith.addf %259, %260 : vector<16x16xf32>
    %cst_51 = arith.constant 0.000000e+00 : f32
    %262 = vector.broadcast %cst_51 : f32 to vector<16x16xf32>
    %263 = arith.cmpf ogt, %261, %262 : vector<16x16xf32>
    %cst_52 = arith.constant 2.000000e-01 : f32
    %264 = vector.broadcast %cst_52 : f32 to vector<16x16xf32>
    %265 = arith.mulf %264, %261 : vector<16x16xf32>
    %266 = arith.select %263, %261, %265 : vector<16x16xi1>, vector<16x16xf32>
    %267 = vector.broadcast %256 : f32 to vector<16x16xf32>
    %268 = arith.mulf %267, %266 : vector<16x16xf32>
    %269 = arith.addf %6, %268 : vector<16x16xf32>
    %c17 = arith.constant 17 : index
    %270 = memref.load %arg6[%c17] : memref<64xf32, #tpu.memory_space<smem>>
    %271 = vector.extract_strided_slice %17 {offsets = [0, 17], sizes = [16, 1], strides = [1, 1]} : vector<16x64xf32> to vector<16x1xf32>
    %272 = vector.extract_strided_slice %18 {offsets = [17, 0], sizes = [1, 16], strides = [1, 1]} : vector<64x16xf32> to vector<1x16xf32>
    %273 = vector.broadcast %271 : vector<16x1xf32> to vector<16x16xf32>
    %274 = vector.broadcast %272 : vector<1x16xf32> to vector<16x16xf32>
    %275 = arith.addf %273, %274 : vector<16x16xf32>
    %cst_53 = arith.constant 0.000000e+00 : f32
    %276 = vector.broadcast %cst_53 : f32 to vector<16x16xf32>
    %277 = arith.cmpf ogt, %275, %276 : vector<16x16xf32>
    %cst_54 = arith.constant 2.000000e-01 : f32
    %278 = vector.broadcast %cst_54 : f32 to vector<16x16xf32>
    %279 = arith.mulf %278, %275 : vector<16x16xf32>
    %280 = arith.select %277, %275, %279 : vector<16x16xi1>, vector<16x16xf32>
    %281 = vector.broadcast %270 : f32 to vector<16x16xf32>
    %282 = arith.mulf %281, %280 : vector<16x16xf32>
    %283 = arith.addf %269, %282 : vector<16x16xf32>
    %c18 = arith.constant 18 : index
    %284 = memref.load %arg6[%c18] : memref<64xf32, #tpu.memory_space<smem>>
    %285 = vector.extract_strided_slice %17 {offsets = [0, 18], sizes = [16, 1], strides = [1, 1]} : vector<16x64xf32> to vector<16x1xf32>
    %286 = vector.extract_strided_slice %18 {offsets = [18, 0], sizes = [1, 16], strides = [1, 1]} : vector<64x16xf32> to vector<1x16xf32>
    %287 = vector.broadcast %285 : vector<16x1xf32> to vector<16x16xf32>
    %288 = vector.broadcast %286 : vector<1x16xf32> to vector<16x16xf32>
    %289 = arith.addf %287, %288 : vector<16x16xf32>
    %cst_55 = arith.constant 0.000000e+00 : f32
    %290 = vector.broadcast %cst_55 : f32 to vector<16x16xf32>
    %291 = arith.cmpf ogt, %289, %290 : vector<16x16xf32>
    %cst_56 = arith.constant 2.000000e-01 : f32
    %292 = vector.broadcast %cst_56 : f32 to vector<16x16xf32>
    %293 = arith.mulf %292, %289 : vector<16x16xf32>
    %294 = arith.select %291, %289, %293 : vector<16x16xi1>, vector<16x16xf32>
    %295 = vector.broadcast %284 : f32 to vector<16x16xf32>
    %296 = arith.mulf %295, %294 : vector<16x16xf32>
    %297 = arith.addf %283, %296 : vector<16x16xf32>
    %c19 = arith.constant 19 : index
    %298 = memref.load %arg6[%c19] : memref<64xf32, #tpu.memory_space<smem>>
    %299 = vector.extract_strided_slice %17 {offsets = [0, 19], sizes = [16, 1], strides = [1, 1]} : vector<16x64xf32> to vector<16x1xf32>
    %300 = vector.extract_strided_slice %18 {offsets = [19, 0], sizes = [1, 16], strides = [1, 1]} : vector<64x16xf32> to vector<1x16xf32>
    %301 = vector.broadcast %299 : vector<16x1xf32> to vector<16x16xf32>
    %302 = vector.broadcast %300 : vector<1x16xf32> to vector<16x16xf32>
    %303 = arith.addf %301, %302 : vector<16x16xf32>
    %cst_57 = arith.constant 0.000000e+00 : f32
    %304 = vector.broadcast %cst_57 : f32 to vector<16x16xf32>
    %305 = arith.cmpf ogt, %303, %304 : vector<16x16xf32>
    %cst_58 = arith.constant 2.000000e-01 : f32
    %306 = vector.broadcast %cst_58 : f32 to vector<16x16xf32>
    %307 = arith.mulf %306, %303 : vector<16x16xf32>
    %308 = arith.select %305, %303, %307 : vector<16x16xi1>, vector<16x16xf32>
    %309 = vector.broadcast %298 : f32 to vector<16x16xf32>
    %310 = arith.mulf %309, %308 : vector<16x16xf32>
    %311 = arith.addf %297, %310 : vector<16x16xf32>
    %c20 = arith.constant 20 : index
    %312 = memref.load %arg6[%c20] : memref<64xf32, #tpu.memory_space<smem>>
    %313 = vector.extract_strided_slice %17 {offsets = [0, 20], sizes = [16, 1], strides = [1, 1]} : vector<16x64xf32> to vector<16x1xf32>
    %314 = vector.extract_strided_slice %18 {offsets = [20, 0], sizes = [1, 16], strides = [1, 1]} : vector<64x16xf32> to vector<1x16xf32>
    %315 = vector.broadcast %313 : vector<16x1xf32> to vector<16x16xf32>
    %316 = vector.broadcast %314 : vector<1x16xf32> to vector<16x16xf32>
    %317 = arith.addf %315, %316 : vector<16x16xf32>
    %cst_59 = arith.constant 0.000000e+00 : f32
    %318 = vector.broadcast %cst_59 : f32 to vector<16x16xf32>
    %319 = arith.cmpf ogt, %317, %318 : vector<16x16xf32>
    %cst_60 = arith.constant 2.000000e-01 : f32
    %320 = vector.broadcast %cst_60 : f32 to vector<16x16xf32>
    %321 = arith.mulf %320, %317 : vector<16x16xf32>
    %322 = arith.select %319, %317, %321 : vector<16x16xi1>, vector<16x16xf32>
    %323 = vector.broadcast %312 : f32 to vector<16x16xf32>
    %324 = arith.mulf %323, %322 : vector<16x16xf32>
    %325 = arith.addf %311, %324 : vector<16x16xf32>
    %c21 = arith.constant 21 : index
    %326 = memref.load %arg6[%c21] : memref<64xf32, #tpu.memory_space<smem>>
    %327 = vector.extract_strided_slice %17 {offsets = [0, 21], sizes = [16, 1], strides = [1, 1]} : vector<16x64xf32> to vector<16x1xf32>
    %328 = vector.extract_strided_slice %18 {offsets = [21, 0], sizes = [1, 16], strides = [1, 1]} : vector<64x16xf32> to vector<1x16xf32>
    %329 = vector.broadcast %327 : vector<16x1xf32> to vector<16x16xf32>
    %330 = vector.broadcast %328 : vector<1x16xf32> to vector<16x16xf32>
    %331 = arith.addf %329, %330 : vector<16x16xf32>
    %cst_61 = arith.constant 0.000000e+00 : f32
    %332 = vector.broadcast %cst_61 : f32 to vector<16x16xf32>
    %333 = arith.cmpf ogt, %331, %332 : vector<16x16xf32>
    %cst_62 = arith.constant 2.000000e-01 : f32
    %334 = vector.broadcast %cst_62 : f32 to vector<16x16xf32>
    %335 = arith.mulf %334, %331 : vector<16x16xf32>
    %336 = arith.select %333, %331, %335 : vector<16x16xi1>, vector<16x16xf32>
    %337 = vector.broadcast %326 : f32 to vector<16x16xf32>
    %338 = arith.mulf %337, %336 : vector<16x16xf32>
    %339 = arith.addf %325, %338 : vector<16x16xf32>
    %c22 = arith.constant 22 : index
    %340 = memref.load %arg6[%c22] : memref<64xf32, #tpu.memory_space<smem>>
    %341 = vector.extract_strided_slice %17 {offsets = [0, 22], sizes = [16, 1], strides = [1, 1]} : vector<16x64xf32> to vector<16x1xf32>
    %342 = vector.extract_strided_slice %18 {offsets = [22, 0], sizes = [1, 16], strides = [1, 1]} : vector<64x16xf32> to vector<1x16xf32>
    %343 = vector.broadcast %341 : vector<16x1xf32> to vector<16x16xf32>
    %344 = vector.broadcast %342 : vector<1x16xf32> to vector<16x16xf32>
    %345 = arith.addf %343, %344 : vector<16x16xf32>
    %cst_63 = arith.constant 0.000000e+00 : f32
    %346 = vector.broadcast %cst_63 : f32 to vector<16x16xf32>
    %347 = arith.cmpf ogt, %345, %346 : vector<16x16xf32>
    %cst_64 = arith.constant 2.000000e-01 : f32
    %348 = vector.broadcast %cst_64 : f32 to vector<16x16xf32>
    %349 = arith.mulf %348, %345 : vector<16x16xf32>
    %350 = arith.select %347, %345, %349 : vector<16x16xi1>, vector<16x16xf32>
    %351 = vector.broadcast %340 : f32 to vector<16x16xf32>
    %352 = arith.mulf %351, %350 : vector<16x16xf32>
    %353 = arith.addf %339, %352 : vector<16x16xf32>
    %c23 = arith.constant 23 : index
    %354 = memref.load %arg6[%c23] : memref<64xf32, #tpu.memory_space<smem>>
    %355 = vector.extract_strided_slice %17 {offsets = [0, 23], sizes = [16, 1], strides = [1, 1]} : vector<16x64xf32> to vector<16x1xf32>
    %356 = vector.extract_strided_slice %18 {offsets = [23, 0], sizes = [1, 16], strides = [1, 1]} : vector<64x16xf32> to vector<1x16xf32>
    %357 = vector.broadcast %355 : vector<16x1xf32> to vector<16x16xf32>
    %358 = vector.broadcast %356 : vector<1x16xf32> to vector<16x16xf32>
    %359 = arith.addf %357, %358 : vector<16x16xf32>
    %cst_65 = arith.constant 0.000000e+00 : f32
    %360 = vector.broadcast %cst_65 : f32 to vector<16x16xf32>
    %361 = arith.cmpf ogt, %359, %360 : vector<16x16xf32>
    %cst_66 = arith.constant 2.000000e-01 : f32
    %362 = vector.broadcast %cst_66 : f32 to vector<16x16xf32>
    %363 = arith.mulf %362, %359 : vector<16x16xf32>
    %364 = arith.select %361, %359, %363 : vector<16x16xi1>, vector<16x16xf32>
    %365 = vector.broadcast %354 : f32 to vector<16x16xf32>
    %366 = arith.mulf %365, %364 : vector<16x16xf32>
    %367 = arith.addf %353, %366 : vector<16x16xf32>
    %c24 = arith.constant 24 : index
    %368 = memref.load %arg6[%c24] : memref<64xf32, #tpu.memory_space<smem>>
    %369 = vector.extract_strided_slice %17 {offsets = [0, 24], sizes = [16, 1], strides = [1, 1]} : vector<16x64xf32> to vector<16x1xf32>
    %370 = vector.extract_strided_slice %18 {offsets = [24, 0], sizes = [1, 16], strides = [1, 1]} : vector<64x16xf32> to vector<1x16xf32>
    %371 = vector.broadcast %369 : vector<16x1xf32> to vector<16x16xf32>
    %372 = vector.broadcast %370 : vector<1x16xf32> to vector<16x16xf32>
    %373 = arith.addf %371, %372 : vector<16x16xf32>
    %cst_67 = arith.constant 0.000000e+00 : f32
    %374 = vector.broadcast %cst_67 : f32 to vector<16x16xf32>
    %375 = arith.cmpf ogt, %373, %374 : vector<16x16xf32>
    %cst_68 = arith.constant 2.000000e-01 : f32
    %376 = vector.broadcast %cst_68 : f32 to vector<16x16xf32>
    %377 = arith.mulf %376, %373 : vector<16x16xf32>
    %378 = arith.select %375, %373, %377 : vector<16x16xi1>, vector<16x16xf32>
    %379 = vector.broadcast %368 : f32 to vector<16x16xf32>
    %380 = arith.mulf %379, %378 : vector<16x16xf32>
    %381 = arith.addf %367, %380 : vector<16x16xf32>
    %c25 = arith.constant 25 : index
    %382 = memref.load %arg6[%c25] : memref<64xf32, #tpu.memory_space<smem>>
    %383 = vector.extract_strided_slice %17 {offsets = [0, 25], sizes = [16, 1], strides = [1, 1]} : vector<16x64xf32> to vector<16x1xf32>
    %384 = vector.extract_strided_slice %18 {offsets = [25, 0], sizes = [1, 16], strides = [1, 1]} : vector<64x16xf32> to vector<1x16xf32>
    %385 = vector.broadcast %383 : vector<16x1xf32> to vector<16x16xf32>
    %386 = vector.broadcast %384 : vector<1x16xf32> to vector<16x16xf32>
    %387 = arith.addf %385, %386 : vector<16x16xf32>
    %cst_69 = arith.constant 0.000000e+00 : f32
    %388 = vector.broadcast %cst_69 : f32 to vector<16x16xf32>
    %389 = arith.cmpf ogt, %387, %388 : vector<16x16xf32>
    %cst_70 = arith.constant 2.000000e-01 : f32
    %390 = vector.broadcast %cst_70 : f32 to vector<16x16xf32>
    %391 = arith.mulf %390, %387 : vector<16x16xf32>
    %392 = arith.select %389, %387, %391 : vector<16x16xi1>, vector<16x16xf32>
    %393 = vector.broadcast %382 : f32 to vector<16x16xf32>
    %394 = arith.mulf %393, %392 : vector<16x16xf32>
    %395 = arith.addf %381, %394 : vector<16x16xf32>
    %c26 = arith.constant 26 : index
    %396 = memref.load %arg6[%c26] : memref<64xf32, #tpu.memory_space<smem>>
    %397 = vector.extract_strided_slice %17 {offsets = [0, 26], sizes = [16, 1], strides = [1, 1]} : vector<16x64xf32> to vector<16x1xf32>
    %398 = vector.extract_strided_slice %18 {offsets = [26, 0], sizes = [1, 16], strides = [1, 1]} : vector<64x16xf32> to vector<1x16xf32>
    %399 = vector.broadcast %397 : vector<16x1xf32> to vector<16x16xf32>
    %400 = vector.broadcast %398 : vector<1x16xf32> to vector<16x16xf32>
    %401 = arith.addf %399, %400 : vector<16x16xf32>
    %cst_71 = arith.constant 0.000000e+00 : f32
    %402 = vector.broadcast %cst_71 : f32 to vector<16x16xf32>
    %403 = arith.cmpf ogt, %401, %402 : vector<16x16xf32>
    %cst_72 = arith.constant 2.000000e-01 : f32
    %404 = vector.broadcast %cst_72 : f32 to vector<16x16xf32>
    %405 = arith.mulf %404, %401 : vector<16x16xf32>
    %406 = arith.select %403, %401, %405 : vector<16x16xi1>, vector<16x16xf32>
    %407 = vector.broadcast %396 : f32 to vector<16x16xf32>
    %408 = arith.mulf %407, %406 : vector<16x16xf32>
    %409 = arith.addf %395, %408 : vector<16x16xf32>
    %c27 = arith.constant 27 : index
    %410 = memref.load %arg6[%c27] : memref<64xf32, #tpu.memory_space<smem>>
    %411 = vector.extract_strided_slice %17 {offsets = [0, 27], sizes = [16, 1], strides = [1, 1]} : vector<16x64xf32> to vector<16x1xf32>
    %412 = vector.extract_strided_slice %18 {offsets = [27, 0], sizes = [1, 16], strides = [1, 1]} : vector<64x16xf32> to vector<1x16xf32>
    %413 = vector.broadcast %411 : vector<16x1xf32> to vector<16x16xf32>
    %414 = vector.broadcast %412 : vector<1x16xf32> to vector<16x16xf32>
    %415 = arith.addf %413, %414 : vector<16x16xf32>
    %cst_73 = arith.constant 0.000000e+00 : f32
    %416 = vector.broadcast %cst_73 : f32 to vector<16x16xf32>
    %417 = arith.cmpf ogt, %415, %416 : vector<16x16xf32>
    %cst_74 = arith.constant 2.000000e-01 : f32
    %418 = vector.broadcast %cst_74 : f32 to vector<16x16xf32>
    %419 = arith.mulf %418, %415 : vector<16x16xf32>
    %420 = arith.select %417, %415, %419 : vector<16x16xi1>, vector<16x16xf32>
    %421 = vector.broadcast %410 : f32 to vector<16x16xf32>
    %422 = arith.mulf %421, %420 : vector<16x16xf32>
    %423 = arith.addf %409, %422 : vector<16x16xf32>
    %c28 = arith.constant 28 : index
    %424 = memref.load %arg6[%c28] : memref<64xf32, #tpu.memory_space<smem>>
    %425 = vector.extract_strided_slice %17 {offsets = [0, 28], sizes = [16, 1], strides = [1, 1]} : vector<16x64xf32> to vector<16x1xf32>
    %426 = vector.extract_strided_slice %18 {offsets = [28, 0], sizes = [1, 16], strides = [1, 1]} : vector<64x16xf32> to vector<1x16xf32>
    %427 = vector.broadcast %425 : vector<16x1xf32> to vector<16x16xf32>
    %428 = vector.broadcast %426 : vector<1x16xf32> to vector<16x16xf32>
    %429 = arith.addf %427, %428 : vector<16x16xf32>
    %cst_75 = arith.constant 0.000000e+00 : f32
    %430 = vector.broadcast %cst_75 : f32 to vector<16x16xf32>
    %431 = arith.cmpf ogt, %429, %430 : vector<16x16xf32>
    %cst_76 = arith.constant 2.000000e-01 : f32
    %432 = vector.broadcast %cst_76 : f32 to vector<16x16xf32>
    %433 = arith.mulf %432, %429 : vector<16x16xf32>
    %434 = arith.select %431, %429, %433 : vector<16x16xi1>, vector<16x16xf32>
    %435 = vector.broadcast %424 : f32 to vector<16x16xf32>
    %436 = arith.mulf %435, %434 : vector<16x16xf32>
    %437 = arith.addf %423, %436 : vector<16x16xf32>
    %c29 = arith.constant 29 : index
    %438 = memref.load %arg6[%c29] : memref<64xf32, #tpu.memory_space<smem>>
    %439 = vector.extract_strided_slice %17 {offsets = [0, 29], sizes = [16, 1], strides = [1, 1]} : vector<16x64xf32> to vector<16x1xf32>
    %440 = vector.extract_strided_slice %18 {offsets = [29, 0], sizes = [1, 16], strides = [1, 1]} : vector<64x16xf32> to vector<1x16xf32>
    %441 = vector.broadcast %439 : vector<16x1xf32> to vector<16x16xf32>
    %442 = vector.broadcast %440 : vector<1x16xf32> to vector<16x16xf32>
    %443 = arith.addf %441, %442 : vector<16x16xf32>
    %cst_77 = arith.constant 0.000000e+00 : f32
    %444 = vector.broadcast %cst_77 : f32 to vector<16x16xf32>
    %445 = arith.cmpf ogt, %443, %444 : vector<16x16xf32>
    %cst_78 = arith.constant 2.000000e-01 : f32
    %446 = vector.broadcast %cst_78 : f32 to vector<16x16xf32>
    %447 = arith.mulf %446, %443 : vector<16x16xf32>
    %448 = arith.select %445, %443, %447 : vector<16x16xi1>, vector<16x16xf32>
    %449 = vector.broadcast %438 : f32 to vector<16x16xf32>
    %450 = arith.mulf %449, %448 : vector<16x16xf32>
    %451 = arith.addf %437, %450 : vector<16x16xf32>
    %c30 = arith.constant 30 : index
    %452 = memref.load %arg6[%c30] : memref<64xf32, #tpu.memory_space<smem>>
    %453 = vector.extract_strided_slice %17 {offsets = [0, 30], sizes = [16, 1], strides = [1, 1]} : vector<16x64xf32> to vector<16x1xf32>
    %454 = vector.extract_strided_slice %18 {offsets = [30, 0], sizes = [1, 16], strides = [1, 1]} : vector<64x16xf32> to vector<1x16xf32>
    %455 = vector.broadcast %453 : vector<16x1xf32> to vector<16x16xf32>
    %456 = vector.broadcast %454 : vector<1x16xf32> to vector<16x16xf32>
    %457 = arith.addf %455, %456 : vector<16x16xf32>
    %cst_79 = arith.constant 0.000000e+00 : f32
    %458 = vector.broadcast %cst_79 : f32 to vector<16x16xf32>
    %459 = arith.cmpf ogt, %457, %458 : vector<16x16xf32>
    %cst_80 = arith.constant 2.000000e-01 : f32
    %460 = vector.broadcast %cst_80 : f32 to vector<16x16xf32>
    %461 = arith.mulf %460, %457 : vector<16x16xf32>
    %462 = arith.select %459, %457, %461 : vector<16x16xi1>, vector<16x16xf32>
    %463 = vector.broadcast %452 : f32 to vector<16x16xf32>
    %464 = arith.mulf %463, %462 : vector<16x16xf32>
    %465 = arith.addf %451, %464 : vector<16x16xf32>
    %c31 = arith.constant 31 : index
    %466 = memref.load %arg6[%c31] : memref<64xf32, #tpu.memory_space<smem>>
    %467 = vector.extract_strided_slice %17 {offsets = [0, 31], sizes = [16, 1], strides = [1, 1]} : vector<16x64xf32> to vector<16x1xf32>
    %468 = vector.extract_strided_slice %18 {offsets = [31, 0], sizes = [1, 16], strides = [1, 1]} : vector<64x16xf32> to vector<1x16xf32>
    %469 = vector.broadcast %467 : vector<16x1xf32> to vector<16x16xf32>
    %470 = vector.broadcast %468 : vector<1x16xf32> to vector<16x16xf32>
    %471 = arith.addf %469, %470 : vector<16x16xf32>
    %cst_81 = arith.constant 0.000000e+00 : f32
    %472 = vector.broadcast %cst_81 : f32 to vector<16x16xf32>
    %473 = arith.cmpf ogt, %471, %472 : vector<16x16xf32>
    %cst_82 = arith.constant 2.000000e-01 : f32
    %474 = vector.broadcast %cst_82 : f32 to vector<16x16xf32>
    %475 = arith.mulf %474, %471 : vector<16x16xf32>
    %476 = arith.select %473, %471, %475 : vector<16x16xi1>, vector<16x16xf32>
    %477 = vector.broadcast %466 : f32 to vector<16x16xf32>
    %478 = arith.mulf %477, %476 : vector<16x16xf32>
    %479 = arith.addf %465, %478 : vector<16x16xf32>
    %cst_83 = arith.constant dense<0xFF800000> : vector<16xf32>
    %480 = vector.multi_reduction <maximumf>, %479, %cst_83 [1] : vector<16x16xf32> to vector<16xf32>
    %481 = vector.shape_cast %480 : vector<16xf32> to vector<16x1xf32>
    %482 = vector.broadcast %481 : vector<16x1xf32> to vector<16x16xf32>
    %483 = arith.subf %479, %482 : vector<16x16xf32>
    %484 = math.exp %483 : vector<16x16xf32>
    %cst_84 = arith.constant dense<0.000000e+00> : vector<16xf32>
    %485 = vector.multi_reduction <add>, %484, %cst_84 [1] : vector<16x16xf32> to vector<16xf32>
    %486 = vector.shape_cast %485 : vector<16xf32> to vector<16x1xf32>
    %487 = arith.truncf %484 : vector<16x16xf32> to vector<16x16xbf16>
    %488 = vector.extract_strided_slice %19 {offsets = [0, 16], sizes = [16, 16], strides = [1, 1]} : vector<16x64xbf16> to vector<16x16xbf16>
    %cst_85 = arith.constant dense<0.000000e+00> : vector<16x16xf32>
    %489 = tpu.matmul %487, %488, %cst_85 {dimension_numbers = #tpu.dot_dimension_numbers<[1], [0], [0], [1], [0, 0, 1, 1], [], []>} : vector<16x16xbf16>, vector<16x16xbf16>, vector<16x16xf32> -> vector<16x16xf32>
    %490 = vector.broadcast %486 : vector<16x1xf32> to vector<16x16xf32>
    %491 = arith.divf %489, %490 : vector<16x16xf32>
    %c32 = arith.constant 32 : index
    %492 = memref.load %arg6[%c32] : memref<64xf32, #tpu.memory_space<smem>>
    %493 = vector.extract_strided_slice %17 {offsets = [0, 32], sizes = [16, 1], strides = [1, 1]} : vector<16x64xf32> to vector<16x1xf32>
    %494 = vector.extract_strided_slice %18 {offsets = [32, 0], sizes = [1, 16], strides = [1, 1]} : vector<64x16xf32> to vector<1x16xf32>
    %495 = vector.broadcast %493 : vector<16x1xf32> to vector<16x16xf32>
    %496 = vector.broadcast %494 : vector<1x16xf32> to vector<16x16xf32>
    %497 = arith.addf %495, %496 : vector<16x16xf32>
    %cst_86 = arith.constant 0.000000e+00 : f32
    %498 = vector.broadcast %cst_86 : f32 to vector<16x16xf32>
    %499 = arith.cmpf ogt, %497, %498 : vector<16x16xf32>
    %cst_87 = arith.constant 2.000000e-01 : f32
    %500 = vector.broadcast %cst_87 : f32 to vector<16x16xf32>
    %501 = arith.mulf %500, %497 : vector<16x16xf32>
    %502 = arith.select %499, %497, %501 : vector<16x16xi1>, vector<16x16xf32>
    %503 = vector.broadcast %492 : f32 to vector<16x16xf32>
    %504 = arith.mulf %503, %502 : vector<16x16xf32>
    %505 = arith.addf %6, %504 : vector<16x16xf32>
    %c33 = arith.constant 33 : index
    %506 = memref.load %arg6[%c33] : memref<64xf32, #tpu.memory_space<smem>>
    %507 = vector.extract_strided_slice %17 {offsets = [0, 33], sizes = [16, 1], strides = [1, 1]} : vector<16x64xf32> to vector<16x1xf32>
    %508 = vector.extract_strided_slice %18 {offsets = [33, 0], sizes = [1, 16], strides = [1, 1]} : vector<64x16xf32> to vector<1x16xf32>
    %509 = vector.broadcast %507 : vector<16x1xf32> to vector<16x16xf32>
    %510 = vector.broadcast %508 : vector<1x16xf32> to vector<16x16xf32>
    %511 = arith.addf %509, %510 : vector<16x16xf32>
    %cst_88 = arith.constant 0.000000e+00 : f32
    %512 = vector.broadcast %cst_88 : f32 to vector<16x16xf32>
    %513 = arith.cmpf ogt, %511, %512 : vector<16x16xf32>
    %cst_89 = arith.constant 2.000000e-01 : f32
    %514 = vector.broadcast %cst_89 : f32 to vector<16x16xf32>
    %515 = arith.mulf %514, %511 : vector<16x16xf32>
    %516 = arith.select %513, %511, %515 : vector<16x16xi1>, vector<16x16xf32>
    %517 = vector.broadcast %506 : f32 to vector<16x16xf32>
    %518 = arith.mulf %517, %516 : vector<16x16xf32>
    %519 = arith.addf %505, %518 : vector<16x16xf32>
    %c34 = arith.constant 34 : index
    %520 = memref.load %arg6[%c34] : memref<64xf32, #tpu.memory_space<smem>>
    %521 = vector.extract_strided_slice %17 {offsets = [0, 34], sizes = [16, 1], strides = [1, 1]} : vector<16x64xf32> to vector<16x1xf32>
    %522 = vector.extract_strided_slice %18 {offsets = [34, 0], sizes = [1, 16], strides = [1, 1]} : vector<64x16xf32> to vector<1x16xf32>
    %523 = vector.broadcast %521 : vector<16x1xf32> to vector<16x16xf32>
    %524 = vector.broadcast %522 : vector<1x16xf32> to vector<16x16xf32>
    %525 = arith.addf %523, %524 : vector<16x16xf32>
    %cst_90 = arith.constant 0.000000e+00 : f32
    %526 = vector.broadcast %cst_90 : f32 to vector<16x16xf32>
    %527 = arith.cmpf ogt, %525, %526 : vector<16x16xf32>
    %cst_91 = arith.constant 2.000000e-01 : f32
    %528 = vector.broadcast %cst_91 : f32 to vector<16x16xf32>
    %529 = arith.mulf %528, %525 : vector<16x16xf32>
    %530 = arith.select %527, %525, %529 : vector<16x16xi1>, vector<16x16xf32>
    %531 = vector.broadcast %520 : f32 to vector<16x16xf32>
    %532 = arith.mulf %531, %530 : vector<16x16xf32>
    %533 = arith.addf %519, %532 : vector<16x16xf32>
    %c35 = arith.constant 35 : index
    %534 = memref.load %arg6[%c35] : memref<64xf32, #tpu.memory_space<smem>>
    %535 = vector.extract_strided_slice %17 {offsets = [0, 35], sizes = [16, 1], strides = [1, 1]} : vector<16x64xf32> to vector<16x1xf32>
    %536 = vector.extract_strided_slice %18 {offsets = [35, 0], sizes = [1, 16], strides = [1, 1]} : vector<64x16xf32> to vector<1x16xf32>
    %537 = vector.broadcast %535 : vector<16x1xf32> to vector<16x16xf32>
    %538 = vector.broadcast %536 : vector<1x16xf32> to vector<16x16xf32>
    %539 = arith.addf %537, %538 : vector<16x16xf32>
    %cst_92 = arith.constant 0.000000e+00 : f32
    %540 = vector.broadcast %cst_92 : f32 to vector<16x16xf32>
    %541 = arith.cmpf ogt, %539, %540 : vector<16x16xf32>
    %cst_93 = arith.constant 2.000000e-01 : f32
    %542 = vector.broadcast %cst_93 : f32 to vector<16x16xf32>
    %543 = arith.mulf %542, %539 : vector<16x16xf32>
    %544 = arith.select %541, %539, %543 : vector<16x16xi1>, vector<16x16xf32>
    %545 = vector.broadcast %534 : f32 to vector<16x16xf32>
    %546 = arith.mulf %545, %544 : vector<16x16xf32>
    %547 = arith.addf %533, %546 : vector<16x16xf32>
    %c36 = arith.constant 36 : index
    %548 = memref.load %arg6[%c36] : memref<64xf32, #tpu.memory_space<smem>>
    %549 = vector.extract_strided_slice %17 {offsets = [0, 36], sizes = [16, 1], strides = [1, 1]} : vector<16x64xf32> to vector<16x1xf32>
    %550 = vector.extract_strided_slice %18 {offsets = [36, 0], sizes = [1, 16], strides = [1, 1]} : vector<64x16xf32> to vector<1x16xf32>
    %551 = vector.broadcast %549 : vector<16x1xf32> to vector<16x16xf32>
    %552 = vector.broadcast %550 : vector<1x16xf32> to vector<16x16xf32>
    %553 = arith.addf %551, %552 : vector<16x16xf32>
    %cst_94 = arith.constant 0.000000e+00 : f32
    %554 = vector.broadcast %cst_94 : f32 to vector<16x16xf32>
    %555 = arith.cmpf ogt, %553, %554 : vector<16x16xf32>
    %cst_95 = arith.constant 2.000000e-01 : f32
    %556 = vector.broadcast %cst_95 : f32 to vector<16x16xf32>
    %557 = arith.mulf %556, %553 : vector<16x16xf32>
    %558 = arith.select %555, %553, %557 : vector<16x16xi1>, vector<16x16xf32>
    %559 = vector.broadcast %548 : f32 to vector<16x16xf32>
    %560 = arith.mulf %559, %558 : vector<16x16xf32>
    %561 = arith.addf %547, %560 : vector<16x16xf32>
    %c37 = arith.constant 37 : index
    %562 = memref.load %arg6[%c37] : memref<64xf32, #tpu.memory_space<smem>>
    %563 = vector.extract_strided_slice %17 {offsets = [0, 37], sizes = [16, 1], strides = [1, 1]} : vector<16x64xf32> to vector<16x1xf32>
    %564 = vector.extract_strided_slice %18 {offsets = [37, 0], sizes = [1, 16], strides = [1, 1]} : vector<64x16xf32> to vector<1x16xf32>
    %565 = vector.broadcast %563 : vector<16x1xf32> to vector<16x16xf32>
    %566 = vector.broadcast %564 : vector<1x16xf32> to vector<16x16xf32>
    %567 = arith.addf %565, %566 : vector<16x16xf32>
    %cst_96 = arith.constant 0.000000e+00 : f32
    %568 = vector.broadcast %cst_96 : f32 to vector<16x16xf32>
    %569 = arith.cmpf ogt, %567, %568 : vector<16x16xf32>
    %cst_97 = arith.constant 2.000000e-01 : f32
    %570 = vector.broadcast %cst_97 : f32 to vector<16x16xf32>
    %571 = arith.mulf %570, %567 : vector<16x16xf32>
    %572 = arith.select %569, %567, %571 : vector<16x16xi1>, vector<16x16xf32>
    %573 = vector.broadcast %562 : f32 to vector<16x16xf32>
    %574 = arith.mulf %573, %572 : vector<16x16xf32>
    %575 = arith.addf %561, %574 : vector<16x16xf32>
    %c38 = arith.constant 38 : index
    %576 = memref.load %arg6[%c38] : memref<64xf32, #tpu.memory_space<smem>>
    %577 = vector.extract_strided_slice %17 {offsets = [0, 38], sizes = [16, 1], strides = [1, 1]} : vector<16x64xf32> to vector<16x1xf32>
    %578 = vector.extract_strided_slice %18 {offsets = [38, 0], sizes = [1, 16], strides = [1, 1]} : vector<64x16xf32> to vector<1x16xf32>
    %579 = vector.broadcast %577 : vector<16x1xf32> to vector<16x16xf32>
    %580 = vector.broadcast %578 : vector<1x16xf32> to vector<16x16xf32>
    %581 = arith.addf %579, %580 : vector<16x16xf32>
    %cst_98 = arith.constant 0.000000e+00 : f32
    %582 = vector.broadcast %cst_98 : f32 to vector<16x16xf32>
    %583 = arith.cmpf ogt, %581, %582 : vector<16x16xf32>
    %cst_99 = arith.constant 2.000000e-01 : f32
    %584 = vector.broadcast %cst_99 : f32 to vector<16x16xf32>
    %585 = arith.mulf %584, %581 : vector<16x16xf32>
    %586 = arith.select %583, %581, %585 : vector<16x16xi1>, vector<16x16xf32>
    %587 = vector.broadcast %576 : f32 to vector<16x16xf32>
    %588 = arith.mulf %587, %586 : vector<16x16xf32>
    %589 = arith.addf %575, %588 : vector<16x16xf32>
    %c39 = arith.constant 39 : index
    %590 = memref.load %arg6[%c39] : memref<64xf32, #tpu.memory_space<smem>>
    %591 = vector.extract_strided_slice %17 {offsets = [0, 39], sizes = [16, 1], strides = [1, 1]} : vector<16x64xf32> to vector<16x1xf32>
    %592 = vector.extract_strided_slice %18 {offsets = [39, 0], sizes = [1, 16], strides = [1, 1]} : vector<64x16xf32> to vector<1x16xf32>
    %593 = vector.broadcast %591 : vector<16x1xf32> to vector<16x16xf32>
    %594 = vector.broadcast %592 : vector<1x16xf32> to vector<16x16xf32>
    %595 = arith.addf %593, %594 : vector<16x16xf32>
    %cst_100 = arith.constant 0.000000e+00 : f32
    %596 = vector.broadcast %cst_100 : f32 to vector<16x16xf32>
    %597 = arith.cmpf ogt, %595, %596 : vector<16x16xf32>
    %cst_101 = arith.constant 2.000000e-01 : f32
    %598 = vector.broadcast %cst_101 : f32 to vector<16x16xf32>
    %599 = arith.mulf %598, %595 : vector<16x16xf32>
    %600 = arith.select %597, %595, %599 : vector<16x16xi1>, vector<16x16xf32>
    %601 = vector.broadcast %590 : f32 to vector<16x16xf32>
    %602 = arith.mulf %601, %600 : vector<16x16xf32>
    %603 = arith.addf %589, %602 : vector<16x16xf32>
    %c40 = arith.constant 40 : index
    %604 = memref.load %arg6[%c40] : memref<64xf32, #tpu.memory_space<smem>>
    %605 = vector.extract_strided_slice %17 {offsets = [0, 40], sizes = [16, 1], strides = [1, 1]} : vector<16x64xf32> to vector<16x1xf32>
    %606 = vector.extract_strided_slice %18 {offsets = [40, 0], sizes = [1, 16], strides = [1, 1]} : vector<64x16xf32> to vector<1x16xf32>
    %607 = vector.broadcast %605 : vector<16x1xf32> to vector<16x16xf32>
    %608 = vector.broadcast %606 : vector<1x16xf32> to vector<16x16xf32>
    %609 = arith.addf %607, %608 : vector<16x16xf32>
    %cst_102 = arith.constant 0.000000e+00 : f32
    %610 = vector.broadcast %cst_102 : f32 to vector<16x16xf32>
    %611 = arith.cmpf ogt, %609, %610 : vector<16x16xf32>
    %cst_103 = arith.constant 2.000000e-01 : f32
    %612 = vector.broadcast %cst_103 : f32 to vector<16x16xf32>
    %613 = arith.mulf %612, %609 : vector<16x16xf32>
    %614 = arith.select %611, %609, %613 : vector<16x16xi1>, vector<16x16xf32>
    %615 = vector.broadcast %604 : f32 to vector<16x16xf32>
    %616 = arith.mulf %615, %614 : vector<16x16xf32>
    %617 = arith.addf %603, %616 : vector<16x16xf32>
    %c41 = arith.constant 41 : index
    %618 = memref.load %arg6[%c41] : memref<64xf32, #tpu.memory_space<smem>>
    %619 = vector.extract_strided_slice %17 {offsets = [0, 41], sizes = [16, 1], strides = [1, 1]} : vector<16x64xf32> to vector<16x1xf32>
    %620 = vector.extract_strided_slice %18 {offsets = [41, 0], sizes = [1, 16], strides = [1, 1]} : vector<64x16xf32> to vector<1x16xf32>
    %621 = vector.broadcast %619 : vector<16x1xf32> to vector<16x16xf32>
    %622 = vector.broadcast %620 : vector<1x16xf32> to vector<16x16xf32>
    %623 = arith.addf %621, %622 : vector<16x16xf32>
    %cst_104 = arith.constant 0.000000e+00 : f32
    %624 = vector.broadcast %cst_104 : f32 to vector<16x16xf32>
    %625 = arith.cmpf ogt, %623, %624 : vector<16x16xf32>
    %cst_105 = arith.constant 2.000000e-01 : f32
    %626 = vector.broadcast %cst_105 : f32 to vector<16x16xf32>
    %627 = arith.mulf %626, %623 : vector<16x16xf32>
    %628 = arith.select %625, %623, %627 : vector<16x16xi1>, vector<16x16xf32>
    %629 = vector.broadcast %618 : f32 to vector<16x16xf32>
    %630 = arith.mulf %629, %628 : vector<16x16xf32>
    %631 = arith.addf %617, %630 : vector<16x16xf32>
    %c42 = arith.constant 42 : index
    %632 = memref.load %arg6[%c42] : memref<64xf32, #tpu.memory_space<smem>>
    %633 = vector.extract_strided_slice %17 {offsets = [0, 42], sizes = [16, 1], strides = [1, 1]} : vector<16x64xf32> to vector<16x1xf32>
    %634 = vector.extract_strided_slice %18 {offsets = [42, 0], sizes = [1, 16], strides = [1, 1]} : vector<64x16xf32> to vector<1x16xf32>
    %635 = vector.broadcast %633 : vector<16x1xf32> to vector<16x16xf32>
    %636 = vector.broadcast %634 : vector<1x16xf32> to vector<16x16xf32>
    %637 = arith.addf %635, %636 : vector<16x16xf32>
    %cst_106 = arith.constant 0.000000e+00 : f32
    %638 = vector.broadcast %cst_106 : f32 to vector<16x16xf32>
    %639 = arith.cmpf ogt, %637, %638 : vector<16x16xf32>
    %cst_107 = arith.constant 2.000000e-01 : f32
    %640 = vector.broadcast %cst_107 : f32 to vector<16x16xf32>
    %641 = arith.mulf %640, %637 : vector<16x16xf32>
    %642 = arith.select %639, %637, %641 : vector<16x16xi1>, vector<16x16xf32>
    %643 = vector.broadcast %632 : f32 to vector<16x16xf32>
    %644 = arith.mulf %643, %642 : vector<16x16xf32>
    %645 = arith.addf %631, %644 : vector<16x16xf32>
    %c43 = arith.constant 43 : index
    %646 = memref.load %arg6[%c43] : memref<64xf32, #tpu.memory_space<smem>>
    %647 = vector.extract_strided_slice %17 {offsets = [0, 43], sizes = [16, 1], strides = [1, 1]} : vector<16x64xf32> to vector<16x1xf32>
    %648 = vector.extract_strided_slice %18 {offsets = [43, 0], sizes = [1, 16], strides = [1, 1]} : vector<64x16xf32> to vector<1x16xf32>
    %649 = vector.broadcast %647 : vector<16x1xf32> to vector<16x16xf32>
    %650 = vector.broadcast %648 : vector<1x16xf32> to vector<16x16xf32>
    %651 = arith.addf %649, %650 : vector<16x16xf32>
    %cst_108 = arith.constant 0.000000e+00 : f32
    %652 = vector.broadcast %cst_108 : f32 to vector<16x16xf32>
    %653 = arith.cmpf ogt, %651, %652 : vector<16x16xf32>
    %cst_109 = arith.constant 2.000000e-01 : f32
    %654 = vector.broadcast %cst_109 : f32 to vector<16x16xf32>
    %655 = arith.mulf %654, %651 : vector<16x16xf32>
    %656 = arith.select %653, %651, %655 : vector<16x16xi1>, vector<16x16xf32>
    %657 = vector.broadcast %646 : f32 to vector<16x16xf32>
    %658 = arith.mulf %657, %656 : vector<16x16xf32>
    %659 = arith.addf %645, %658 : vector<16x16xf32>
    %c44 = arith.constant 44 : index
    %660 = memref.load %arg6[%c44] : memref<64xf32, #tpu.memory_space<smem>>
    %661 = vector.extract_strided_slice %17 {offsets = [0, 44], sizes = [16, 1], strides = [1, 1]} : vector<16x64xf32> to vector<16x1xf32>
    %662 = vector.extract_strided_slice %18 {offsets = [44, 0], sizes = [1, 16], strides = [1, 1]} : vector<64x16xf32> to vector<1x16xf32>
    %663 = vector.broadcast %661 : vector<16x1xf32> to vector<16x16xf32>
    %664 = vector.broadcast %662 : vector<1x16xf32> to vector<16x16xf32>
    %665 = arith.addf %663, %664 : vector<16x16xf32>
    %cst_110 = arith.constant 0.000000e+00 : f32
    %666 = vector.broadcast %cst_110 : f32 to vector<16x16xf32>
    %667 = arith.cmpf ogt, %665, %666 : vector<16x16xf32>
    %cst_111 = arith.constant 2.000000e-01 : f32
    %668 = vector.broadcast %cst_111 : f32 to vector<16x16xf32>
    %669 = arith.mulf %668, %665 : vector<16x16xf32>
    %670 = arith.select %667, %665, %669 : vector<16x16xi1>, vector<16x16xf32>
    %671 = vector.broadcast %660 : f32 to vector<16x16xf32>
    %672 = arith.mulf %671, %670 : vector<16x16xf32>
    %673 = arith.addf %659, %672 : vector<16x16xf32>
    %c45 = arith.constant 45 : index
    %674 = memref.load %arg6[%c45] : memref<64xf32, #tpu.memory_space<smem>>
    %675 = vector.extract_strided_slice %17 {offsets = [0, 45], sizes = [16, 1], strides = [1, 1]} : vector<16x64xf32> to vector<16x1xf32>
    %676 = vector.extract_strided_slice %18 {offsets = [45, 0], sizes = [1, 16], strides = [1, 1]} : vector<64x16xf32> to vector<1x16xf32>
    %677 = vector.broadcast %675 : vector<16x1xf32> to vector<16x16xf32>
    %678 = vector.broadcast %676 : vector<1x16xf32> to vector<16x16xf32>
    %679 = arith.addf %677, %678 : vector<16x16xf32>
    %cst_112 = arith.constant 0.000000e+00 : f32
    %680 = vector.broadcast %cst_112 : f32 to vector<16x16xf32>
    %681 = arith.cmpf ogt, %679, %680 : vector<16x16xf32>
    %cst_113 = arith.constant 2.000000e-01 : f32
    %682 = vector.broadcast %cst_113 : f32 to vector<16x16xf32>
    %683 = arith.mulf %682, %679 : vector<16x16xf32>
    %684 = arith.select %681, %679, %683 : vector<16x16xi1>, vector<16x16xf32>
    %685 = vector.broadcast %674 : f32 to vector<16x16xf32>
    %686 = arith.mulf %685, %684 : vector<16x16xf32>
    %687 = arith.addf %673, %686 : vector<16x16xf32>
    %c46 = arith.constant 46 : index
    %688 = memref.load %arg6[%c46] : memref<64xf32, #tpu.memory_space<smem>>
    %689 = vector.extract_strided_slice %17 {offsets = [0, 46], sizes = [16, 1], strides = [1, 1]} : vector<16x64xf32> to vector<16x1xf32>
    %690 = vector.extract_strided_slice %18 {offsets = [46, 0], sizes = [1, 16], strides = [1, 1]} : vector<64x16xf32> to vector<1x16xf32>
    %691 = vector.broadcast %689 : vector<16x1xf32> to vector<16x16xf32>
    %692 = vector.broadcast %690 : vector<1x16xf32> to vector<16x16xf32>
    %693 = arith.addf %691, %692 : vector<16x16xf32>
    %cst_114 = arith.constant 0.000000e+00 : f32
    %694 = vector.broadcast %cst_114 : f32 to vector<16x16xf32>
    %695 = arith.cmpf ogt, %693, %694 : vector<16x16xf32>
    %cst_115 = arith.constant 2.000000e-01 : f32
    %696 = vector.broadcast %cst_115 : f32 to vector<16x16xf32>
    %697 = arith.mulf %696, %693 : vector<16x16xf32>
    %698 = arith.select %695, %693, %697 : vector<16x16xi1>, vector<16x16xf32>
    %699 = vector.broadcast %688 : f32 to vector<16x16xf32>
    %700 = arith.mulf %699, %698 : vector<16x16xf32>
    %701 = arith.addf %687, %700 : vector<16x16xf32>
    %c47 = arith.constant 47 : index
    %702 = memref.load %arg6[%c47] : memref<64xf32, #tpu.memory_space<smem>>
    %703 = vector.extract_strided_slice %17 {offsets = [0, 47], sizes = [16, 1], strides = [1, 1]} : vector<16x64xf32> to vector<16x1xf32>
    %704 = vector.extract_strided_slice %18 {offsets = [47, 0], sizes = [1, 16], strides = [1, 1]} : vector<64x16xf32> to vector<1x16xf32>
    %705 = vector.broadcast %703 : vector<16x1xf32> to vector<16x16xf32>
    %706 = vector.broadcast %704 : vector<1x16xf32> to vector<16x16xf32>
    %707 = arith.addf %705, %706 : vector<16x16xf32>
    %cst_116 = arith.constant 0.000000e+00 : f32
    %708 = vector.broadcast %cst_116 : f32 to vector<16x16xf32>
    %709 = arith.cmpf ogt, %707, %708 : vector<16x16xf32>
    %cst_117 = arith.constant 2.000000e-01 : f32
    %710 = vector.broadcast %cst_117 : f32 to vector<16x16xf32>
    %711 = arith.mulf %710, %707 : vector<16x16xf32>
    %712 = arith.select %709, %707, %711 : vector<16x16xi1>, vector<16x16xf32>
    %713 = vector.broadcast %702 : f32 to vector<16x16xf32>
    %714 = arith.mulf %713, %712 : vector<16x16xf32>
    %715 = arith.addf %701, %714 : vector<16x16xf32>
    %cst_118 = arith.constant dense<0xFF800000> : vector<16xf32>
    %716 = vector.multi_reduction <maximumf>, %715, %cst_118 [1] : vector<16x16xf32> to vector<16xf32>
    %717 = vector.shape_cast %716 : vector<16xf32> to vector<16x1xf32>
    %718 = vector.broadcast %717 : vector<16x1xf32> to vector<16x16xf32>
    %719 = arith.subf %715, %718 : vector<16x16xf32>
    %720 = math.exp %719 : vector<16x16xf32>
    %cst_119 = arith.constant dense<0.000000e+00> : vector<16xf32>
    %721 = vector.multi_reduction <add>, %720, %cst_119 [1] : vector<16x16xf32> to vector<16xf32>
    %722 = vector.shape_cast %721 : vector<16xf32> to vector<16x1xf32>
    %723 = arith.truncf %720 : vector<16x16xf32> to vector<16x16xbf16>
    %724 = vector.extract_strided_slice %19 {offsets = [0, 32], sizes = [16, 16], strides = [1, 1]} : vector<16x64xbf16> to vector<16x16xbf16>
    %cst_120 = arith.constant dense<0.000000e+00> : vector<16x16xf32>
    %725 = tpu.matmul %723, %724, %cst_120 {dimension_numbers = #tpu.dot_dimension_numbers<[1], [0], [0], [1], [0, 0, 1, 1], [], []>} : vector<16x16xbf16>, vector<16x16xbf16>, vector<16x16xf32> -> vector<16x16xf32>
    %726 = vector.broadcast %722 : vector<16x1xf32> to vector<16x16xf32>
    %727 = arith.divf %725, %726 : vector<16x16xf32>
    %c48 = arith.constant 48 : index
    %728 = memref.load %arg6[%c48] : memref<64xf32, #tpu.memory_space<smem>>
    %729 = vector.extract_strided_slice %17 {offsets = [0, 48], sizes = [16, 1], strides = [1, 1]} : vector<16x64xf32> to vector<16x1xf32>
    %730 = vector.extract_strided_slice %18 {offsets = [48, 0], sizes = [1, 16], strides = [1, 1]} : vector<64x16xf32> to vector<1x16xf32>
    %731 = vector.broadcast %729 : vector<16x1xf32> to vector<16x16xf32>
    %732 = vector.broadcast %730 : vector<1x16xf32> to vector<16x16xf32>
    %733 = arith.addf %731, %732 : vector<16x16xf32>
    %cst_121 = arith.constant 0.000000e+00 : f32
    %734 = vector.broadcast %cst_121 : f32 to vector<16x16xf32>
    %735 = arith.cmpf ogt, %733, %734 : vector<16x16xf32>
    %cst_122 = arith.constant 2.000000e-01 : f32
    %736 = vector.broadcast %cst_122 : f32 to vector<16x16xf32>
    %737 = arith.mulf %736, %733 : vector<16x16xf32>
    %738 = arith.select %735, %733, %737 : vector<16x16xi1>, vector<16x16xf32>
    %739 = vector.broadcast %728 : f32 to vector<16x16xf32>
    %740 = arith.mulf %739, %738 : vector<16x16xf32>
    %741 = arith.addf %6, %740 : vector<16x16xf32>
    %c49 = arith.constant 49 : index
    %742 = memref.load %arg6[%c49] : memref<64xf32, #tpu.memory_space<smem>>
    %743 = vector.extract_strided_slice %17 {offsets = [0, 49], sizes = [16, 1], strides = [1, 1]} : vector<16x64xf32> to vector<16x1xf32>
    %744 = vector.extract_strided_slice %18 {offsets = [49, 0], sizes = [1, 16], strides = [1, 1]} : vector<64x16xf32> to vector<1x16xf32>
    %745 = vector.broadcast %743 : vector<16x1xf32> to vector<16x16xf32>
    %746 = vector.broadcast %744 : vector<1x16xf32> to vector<16x16xf32>
    %747 = arith.addf %745, %746 : vector<16x16xf32>
    %cst_123 = arith.constant 0.000000e+00 : f32
    %748 = vector.broadcast %cst_123 : f32 to vector<16x16xf32>
    %749 = arith.cmpf ogt, %747, %748 : vector<16x16xf32>
    %cst_124 = arith.constant 2.000000e-01 : f32
    %750 = vector.broadcast %cst_124 : f32 to vector<16x16xf32>
    %751 = arith.mulf %750, %747 : vector<16x16xf32>
    %752 = arith.select %749, %747, %751 : vector<16x16xi1>, vector<16x16xf32>
    %753 = vector.broadcast %742 : f32 to vector<16x16xf32>
    %754 = arith.mulf %753, %752 : vector<16x16xf32>
    %755 = arith.addf %741, %754 : vector<16x16xf32>
    %c50 = arith.constant 50 : index
    %756 = memref.load %arg6[%c50] : memref<64xf32, #tpu.memory_space<smem>>
    %757 = vector.extract_strided_slice %17 {offsets = [0, 50], sizes = [16, 1], strides = [1, 1]} : vector<16x64xf32> to vector<16x1xf32>
    %758 = vector.extract_strided_slice %18 {offsets = [50, 0], sizes = [1, 16], strides = [1, 1]} : vector<64x16xf32> to vector<1x16xf32>
    %759 = vector.broadcast %757 : vector<16x1xf32> to vector<16x16xf32>
    %760 = vector.broadcast %758 : vector<1x16xf32> to vector<16x16xf32>
    %761 = arith.addf %759, %760 : vector<16x16xf32>
    %cst_125 = arith.constant 0.000000e+00 : f32
    %762 = vector.broadcast %cst_125 : f32 to vector<16x16xf32>
    %763 = arith.cmpf ogt, %761, %762 : vector<16x16xf32>
    %cst_126 = arith.constant 2.000000e-01 : f32
    %764 = vector.broadcast %cst_126 : f32 to vector<16x16xf32>
    %765 = arith.mulf %764, %761 : vector<16x16xf32>
    %766 = arith.select %763, %761, %765 : vector<16x16xi1>, vector<16x16xf32>
    %767 = vector.broadcast %756 : f32 to vector<16x16xf32>
    %768 = arith.mulf %767, %766 : vector<16x16xf32>
    %769 = arith.addf %755, %768 : vector<16x16xf32>
    %c51 = arith.constant 51 : index
    %770 = memref.load %arg6[%c51] : memref<64xf32, #tpu.memory_space<smem>>
    %771 = vector.extract_strided_slice %17 {offsets = [0, 51], sizes = [16, 1], strides = [1, 1]} : vector<16x64xf32> to vector<16x1xf32>
    %772 = vector.extract_strided_slice %18 {offsets = [51, 0], sizes = [1, 16], strides = [1, 1]} : vector<64x16xf32> to vector<1x16xf32>
    %773 = vector.broadcast %771 : vector<16x1xf32> to vector<16x16xf32>
    %774 = vector.broadcast %772 : vector<1x16xf32> to vector<16x16xf32>
    %775 = arith.addf %773, %774 : vector<16x16xf32>
    %cst_127 = arith.constant 0.000000e+00 : f32
    %776 = vector.broadcast %cst_127 : f32 to vector<16x16xf32>
    %777 = arith.cmpf ogt, %775, %776 : vector<16x16xf32>
    %cst_128 = arith.constant 2.000000e-01 : f32
    %778 = vector.broadcast %cst_128 : f32 to vector<16x16xf32>
    %779 = arith.mulf %778, %775 : vector<16x16xf32>
    %780 = arith.select %777, %775, %779 : vector<16x16xi1>, vector<16x16xf32>
    %781 = vector.broadcast %770 : f32 to vector<16x16xf32>
    %782 = arith.mulf %781, %780 : vector<16x16xf32>
    %783 = arith.addf %769, %782 : vector<16x16xf32>
    %c52 = arith.constant 52 : index
    %784 = memref.load %arg6[%c52] : memref<64xf32, #tpu.memory_space<smem>>
    %785 = vector.extract_strided_slice %17 {offsets = [0, 52], sizes = [16, 1], strides = [1, 1]} : vector<16x64xf32> to vector<16x1xf32>
    %786 = vector.extract_strided_slice %18 {offsets = [52, 0], sizes = [1, 16], strides = [1, 1]} : vector<64x16xf32> to vector<1x16xf32>
    %787 = vector.broadcast %785 : vector<16x1xf32> to vector<16x16xf32>
    %788 = vector.broadcast %786 : vector<1x16xf32> to vector<16x16xf32>
    %789 = arith.addf %787, %788 : vector<16x16xf32>
    %cst_129 = arith.constant 0.000000e+00 : f32
    %790 = vector.broadcast %cst_129 : f32 to vector<16x16xf32>
    %791 = arith.cmpf ogt, %789, %790 : vector<16x16xf32>
    %cst_130 = arith.constant 2.000000e-01 : f32
    %792 = vector.broadcast %cst_130 : f32 to vector<16x16xf32>
    %793 = arith.mulf %792, %789 : vector<16x16xf32>
    %794 = arith.select %791, %789, %793 : vector<16x16xi1>, vector<16x16xf32>
    %795 = vector.broadcast %784 : f32 to vector<16x16xf32>
    %796 = arith.mulf %795, %794 : vector<16x16xf32>
    %797 = arith.addf %783, %796 : vector<16x16xf32>
    %c53 = arith.constant 53 : index
    %798 = memref.load %arg6[%c53] : memref<64xf32, #tpu.memory_space<smem>>
    %799 = vector.extract_strided_slice %17 {offsets = [0, 53], sizes = [16, 1], strides = [1, 1]} : vector<16x64xf32> to vector<16x1xf32>
    %800 = vector.extract_strided_slice %18 {offsets = [53, 0], sizes = [1, 16], strides = [1, 1]} : vector<64x16xf32> to vector<1x16xf32>
    %801 = vector.broadcast %799 : vector<16x1xf32> to vector<16x16xf32>
    %802 = vector.broadcast %800 : vector<1x16xf32> to vector<16x16xf32>
    %803 = arith.addf %801, %802 : vector<16x16xf32>
    %cst_131 = arith.constant 0.000000e+00 : f32
    %804 = vector.broadcast %cst_131 : f32 to vector<16x16xf32>
    %805 = arith.cmpf ogt, %803, %804 : vector<16x16xf32>
    %cst_132 = arith.constant 2.000000e-01 : f32
    %806 = vector.broadcast %cst_132 : f32 to vector<16x16xf32>
    %807 = arith.mulf %806, %803 : vector<16x16xf32>
    %808 = arith.select %805, %803, %807 : vector<16x16xi1>, vector<16x16xf32>
    %809 = vector.broadcast %798 : f32 to vector<16x16xf32>
    %810 = arith.mulf %809, %808 : vector<16x16xf32>
    %811 = arith.addf %797, %810 : vector<16x16xf32>
    %c54 = arith.constant 54 : index
    %812 = memref.load %arg6[%c54] : memref<64xf32, #tpu.memory_space<smem>>
    %813 = vector.extract_strided_slice %17 {offsets = [0, 54], sizes = [16, 1], strides = [1, 1]} : vector<16x64xf32> to vector<16x1xf32>
    %814 = vector.extract_strided_slice %18 {offsets = [54, 0], sizes = [1, 16], strides = [1, 1]} : vector<64x16xf32> to vector<1x16xf32>
    %815 = vector.broadcast %813 : vector<16x1xf32> to vector<16x16xf32>
    %816 = vector.broadcast %814 : vector<1x16xf32> to vector<16x16xf32>
    %817 = arith.addf %815, %816 : vector<16x16xf32>
    %cst_133 = arith.constant 0.000000e+00 : f32
    %818 = vector.broadcast %cst_133 : f32 to vector<16x16xf32>
    %819 = arith.cmpf ogt, %817, %818 : vector<16x16xf32>
    %cst_134 = arith.constant 2.000000e-01 : f32
    %820 = vector.broadcast %cst_134 : f32 to vector<16x16xf32>
    %821 = arith.mulf %820, %817 : vector<16x16xf32>
    %822 = arith.select %819, %817, %821 : vector<16x16xi1>, vector<16x16xf32>
    %823 = vector.broadcast %812 : f32 to vector<16x16xf32>
    %824 = arith.mulf %823, %822 : vector<16x16xf32>
    %825 = arith.addf %811, %824 : vector<16x16xf32>
    %c55 = arith.constant 55 : index
    %826 = memref.load %arg6[%c55] : memref<64xf32, #tpu.memory_space<smem>>
    %827 = vector.extract_strided_slice %17 {offsets = [0, 55], sizes = [16, 1], strides = [1, 1]} : vector<16x64xf32> to vector<16x1xf32>
    %828 = vector.extract_strided_slice %18 {offsets = [55, 0], sizes = [1, 16], strides = [1, 1]} : vector<64x16xf32> to vector<1x16xf32>
    %829 = vector.broadcast %827 : vector<16x1xf32> to vector<16x16xf32>
    %830 = vector.broadcast %828 : vector<1x16xf32> to vector<16x16xf32>
    %831 = arith.addf %829, %830 : vector<16x16xf32>
    %cst_135 = arith.constant 0.000000e+00 : f32
    %832 = vector.broadcast %cst_135 : f32 to vector<16x16xf32>
    %833 = arith.cmpf ogt, %831, %832 : vector<16x16xf32>
    %cst_136 = arith.constant 2.000000e-01 : f32
    %834 = vector.broadcast %cst_136 : f32 to vector<16x16xf32>
    %835 = arith.mulf %834, %831 : vector<16x16xf32>
    %836 = arith.select %833, %831, %835 : vector<16x16xi1>, vector<16x16xf32>
    %837 = vector.broadcast %826 : f32 to vector<16x16xf32>
    %838 = arith.mulf %837, %836 : vector<16x16xf32>
    %839 = arith.addf %825, %838 : vector<16x16xf32>
    %c56 = arith.constant 56 : index
    %840 = memref.load %arg6[%c56] : memref<64xf32, #tpu.memory_space<smem>>
    %841 = vector.extract_strided_slice %17 {offsets = [0, 56], sizes = [16, 1], strides = [1, 1]} : vector<16x64xf32> to vector<16x1xf32>
    %842 = vector.extract_strided_slice %18 {offsets = [56, 0], sizes = [1, 16], strides = [1, 1]} : vector<64x16xf32> to vector<1x16xf32>
    %843 = vector.broadcast %841 : vector<16x1xf32> to vector<16x16xf32>
    %844 = vector.broadcast %842 : vector<1x16xf32> to vector<16x16xf32>
    %845 = arith.addf %843, %844 : vector<16x16xf32>
    %cst_137 = arith.constant 0.000000e+00 : f32
    %846 = vector.broadcast %cst_137 : f32 to vector<16x16xf32>
    %847 = arith.cmpf ogt, %845, %846 : vector<16x16xf32>
    %cst_138 = arith.constant 2.000000e-01 : f32
    %848 = vector.broadcast %cst_138 : f32 to vector<16x16xf32>
    %849 = arith.mulf %848, %845 : vector<16x16xf32>
    %850 = arith.select %847, %845, %849 : vector<16x16xi1>, vector<16x16xf32>
    %851 = vector.broadcast %840 : f32 to vector<16x16xf32>
    %852 = arith.mulf %851, %850 : vector<16x16xf32>
    %853 = arith.addf %839, %852 : vector<16x16xf32>
    %c57 = arith.constant 57 : index
    %854 = memref.load %arg6[%c57] : memref<64xf32, #tpu.memory_space<smem>>
    %855 = vector.extract_strided_slice %17 {offsets = [0, 57], sizes = [16, 1], strides = [1, 1]} : vector<16x64xf32> to vector<16x1xf32>
    %856 = vector.extract_strided_slice %18 {offsets = [57, 0], sizes = [1, 16], strides = [1, 1]} : vector<64x16xf32> to vector<1x16xf32>
    %857 = vector.broadcast %855 : vector<16x1xf32> to vector<16x16xf32>
    %858 = vector.broadcast %856 : vector<1x16xf32> to vector<16x16xf32>
    %859 = arith.addf %857, %858 : vector<16x16xf32>
    %cst_139 = arith.constant 0.000000e+00 : f32
    %860 = vector.broadcast %cst_139 : f32 to vector<16x16xf32>
    %861 = arith.cmpf ogt, %859, %860 : vector<16x16xf32>
    %cst_140 = arith.constant 2.000000e-01 : f32
    %862 = vector.broadcast %cst_140 : f32 to vector<16x16xf32>
    %863 = arith.mulf %862, %859 : vector<16x16xf32>
    %864 = arith.select %861, %859, %863 : vector<16x16xi1>, vector<16x16xf32>
    %865 = vector.broadcast %854 : f32 to vector<16x16xf32>
    %866 = arith.mulf %865, %864 : vector<16x16xf32>
    %867 = arith.addf %853, %866 : vector<16x16xf32>
    %c58 = arith.constant 58 : index
    %868 = memref.load %arg6[%c58] : memref<64xf32, #tpu.memory_space<smem>>
    %869 = vector.extract_strided_slice %17 {offsets = [0, 58], sizes = [16, 1], strides = [1, 1]} : vector<16x64xf32> to vector<16x1xf32>
    %870 = vector.extract_strided_slice %18 {offsets = [58, 0], sizes = [1, 16], strides = [1, 1]} : vector<64x16xf32> to vector<1x16xf32>
    %871 = vector.broadcast %869 : vector<16x1xf32> to vector<16x16xf32>
    %872 = vector.broadcast %870 : vector<1x16xf32> to vector<16x16xf32>
    %873 = arith.addf %871, %872 : vector<16x16xf32>
    %cst_141 = arith.constant 0.000000e+00 : f32
    %874 = vector.broadcast %cst_141 : f32 to vector<16x16xf32>
    %875 = arith.cmpf ogt, %873, %874 : vector<16x16xf32>
    %cst_142 = arith.constant 2.000000e-01 : f32
    %876 = vector.broadcast %cst_142 : f32 to vector<16x16xf32>
    %877 = arith.mulf %876, %873 : vector<16x16xf32>
    %878 = arith.select %875, %873, %877 : vector<16x16xi1>, vector<16x16xf32>
    %879 = vector.broadcast %868 : f32 to vector<16x16xf32>
    %880 = arith.mulf %879, %878 : vector<16x16xf32>
    %881 = arith.addf %867, %880 : vector<16x16xf32>
    %c59 = arith.constant 59 : index
    %882 = memref.load %arg6[%c59] : memref<64xf32, #tpu.memory_space<smem>>
    %883 = vector.extract_strided_slice %17 {offsets = [0, 59], sizes = [16, 1], strides = [1, 1]} : vector<16x64xf32> to vector<16x1xf32>
    %884 = vector.extract_strided_slice %18 {offsets = [59, 0], sizes = [1, 16], strides = [1, 1]} : vector<64x16xf32> to vector<1x16xf32>
    %885 = vector.broadcast %883 : vector<16x1xf32> to vector<16x16xf32>
    %886 = vector.broadcast %884 : vector<1x16xf32> to vector<16x16xf32>
    %887 = arith.addf %885, %886 : vector<16x16xf32>
    %cst_143 = arith.constant 0.000000e+00 : f32
    %888 = vector.broadcast %cst_143 : f32 to vector<16x16xf32>
    %889 = arith.cmpf ogt, %887, %888 : vector<16x16xf32>
    %cst_144 = arith.constant 2.000000e-01 : f32
    %890 = vector.broadcast %cst_144 : f32 to vector<16x16xf32>
    %891 = arith.mulf %890, %887 : vector<16x16xf32>
    %892 = arith.select %889, %887, %891 : vector<16x16xi1>, vector<16x16xf32>
    %893 = vector.broadcast %882 : f32 to vector<16x16xf32>
    %894 = arith.mulf %893, %892 : vector<16x16xf32>
    %895 = arith.addf %881, %894 : vector<16x16xf32>
    %c60 = arith.constant 60 : index
    %896 = memref.load %arg6[%c60] : memref<64xf32, #tpu.memory_space<smem>>
    %897 = vector.extract_strided_slice %17 {offsets = [0, 60], sizes = [16, 1], strides = [1, 1]} : vector<16x64xf32> to vector<16x1xf32>
    %898 = vector.extract_strided_slice %18 {offsets = [60, 0], sizes = [1, 16], strides = [1, 1]} : vector<64x16xf32> to vector<1x16xf32>
    %899 = vector.broadcast %897 : vector<16x1xf32> to vector<16x16xf32>
    %900 = vector.broadcast %898 : vector<1x16xf32> to vector<16x16xf32>
    %901 = arith.addf %899, %900 : vector<16x16xf32>
    %cst_145 = arith.constant 0.000000e+00 : f32
    %902 = vector.broadcast %cst_145 : f32 to vector<16x16xf32>
    %903 = arith.cmpf ogt, %901, %902 : vector<16x16xf32>
    %cst_146 = arith.constant 2.000000e-01 : f32
    %904 = vector.broadcast %cst_146 : f32 to vector<16x16xf32>
    %905 = arith.mulf %904, %901 : vector<16x16xf32>
    %906 = arith.select %903, %901, %905 : vector<16x16xi1>, vector<16x16xf32>
    %907 = vector.broadcast %896 : f32 to vector<16x16xf32>
    %908 = arith.mulf %907, %906 : vector<16x16xf32>
    %909 = arith.addf %895, %908 : vector<16x16xf32>
    %c61 = arith.constant 61 : index
    %910 = memref.load %arg6[%c61] : memref<64xf32, #tpu.memory_space<smem>>
    %911 = vector.extract_strided_slice %17 {offsets = [0, 61], sizes = [16, 1], strides = [1, 1]} : vector<16x64xf32> to vector<16x1xf32>
    %912 = vector.extract_strided_slice %18 {offsets = [61, 0], sizes = [1, 16], strides = [1, 1]} : vector<64x16xf32> to vector<1x16xf32>
    %913 = vector.broadcast %911 : vector<16x1xf32> to vector<16x16xf32>
    %914 = vector.broadcast %912 : vector<1x16xf32> to vector<16x16xf32>
    %915 = arith.addf %913, %914 : vector<16x16xf32>
    %cst_147 = arith.constant 0.000000e+00 : f32
    %916 = vector.broadcast %cst_147 : f32 to vector<16x16xf32>
    %917 = arith.cmpf ogt, %915, %916 : vector<16x16xf32>
    %cst_148 = arith.constant 2.000000e-01 : f32
    %918 = vector.broadcast %cst_148 : f32 to vector<16x16xf32>
    %919 = arith.mulf %918, %915 : vector<16x16xf32>
    %920 = arith.select %917, %915, %919 : vector<16x16xi1>, vector<16x16xf32>
    %921 = vector.broadcast %910 : f32 to vector<16x16xf32>
    %922 = arith.mulf %921, %920 : vector<16x16xf32>
    %923 = arith.addf %909, %922 : vector<16x16xf32>
    %c62 = arith.constant 62 : index
    %924 = memref.load %arg6[%c62] : memref<64xf32, #tpu.memory_space<smem>>
    %925 = vector.extract_strided_slice %17 {offsets = [0, 62], sizes = [16, 1], strides = [1, 1]} : vector<16x64xf32> to vector<16x1xf32>
    %926 = vector.extract_strided_slice %18 {offsets = [62, 0], sizes = [1, 16], strides = [1, 1]} : vector<64x16xf32> to vector<1x16xf32>
    %927 = vector.broadcast %925 : vector<16x1xf32> to vector<16x16xf32>
    %928 = vector.broadcast %926 : vector<1x16xf32> to vector<16x16xf32>
    %929 = arith.addf %927, %928 : vector<16x16xf32>
    %cst_149 = arith.constant 0.000000e+00 : f32
    %930 = vector.broadcast %cst_149 : f32 to vector<16x16xf32>
    %931 = arith.cmpf ogt, %929, %930 : vector<16x16xf32>
    %cst_150 = arith.constant 2.000000e-01 : f32
    %932 = vector.broadcast %cst_150 : f32 to vector<16x16xf32>
    %933 = arith.mulf %932, %929 : vector<16x16xf32>
    %934 = arith.select %931, %929, %933 : vector<16x16xi1>, vector<16x16xf32>
    %935 = vector.broadcast %924 : f32 to vector<16x16xf32>
    %936 = arith.mulf %935, %934 : vector<16x16xf32>
    %937 = arith.addf %923, %936 : vector<16x16xf32>
    %c63 = arith.constant 63 : index
    %938 = memref.load %arg6[%c63] : memref<64xf32, #tpu.memory_space<smem>>
    %939 = vector.extract_strided_slice %17 {offsets = [0, 63], sizes = [16, 1], strides = [1, 1]} : vector<16x64xf32> to vector<16x1xf32>
    %940 = vector.extract_strided_slice %18 {offsets = [63, 0], sizes = [1, 16], strides = [1, 1]} : vector<64x16xf32> to vector<1x16xf32>
    %941 = vector.broadcast %939 : vector<16x1xf32> to vector<16x16xf32>
    %942 = vector.broadcast %940 : vector<1x16xf32> to vector<16x16xf32>
    %943 = arith.addf %941, %942 : vector<16x16xf32>
    %cst_151 = arith.constant 0.000000e+00 : f32
    %944 = vector.broadcast %cst_151 : f32 to vector<16x16xf32>
    %945 = arith.cmpf ogt, %943, %944 : vector<16x16xf32>
    %cst_152 = arith.constant 2.000000e-01 : f32
    %946 = vector.broadcast %cst_152 : f32 to vector<16x16xf32>
    %947 = arith.mulf %946, %943 : vector<16x16xf32>
    %948 = arith.select %945, %943, %947 : vector<16x16xi1>, vector<16x16xf32>
    %949 = vector.broadcast %938 : f32 to vector<16x16xf32>
    %950 = arith.mulf %949, %948 : vector<16x16xf32>
    %951 = arith.addf %937, %950 : vector<16x16xf32>
    %cst_153 = arith.constant dense<0xFF800000> : vector<16xf32>
    %952 = vector.multi_reduction <maximumf>, %951, %cst_153 [1] : vector<16x16xf32> to vector<16xf32>
    %953 = vector.shape_cast %952 : vector<16xf32> to vector<16x1xf32>
    %954 = vector.broadcast %953 : vector<16x1xf32> to vector<16x16xf32>
    %955 = arith.subf %951, %954 : vector<16x16xf32>
    %956 = math.exp %955 : vector<16x16xf32>
    %cst_154 = arith.constant dense<0.000000e+00> : vector<16xf32>
    %957 = vector.multi_reduction <add>, %956, %cst_154 [1] : vector<16x16xf32> to vector<16xf32>
    %958 = vector.shape_cast %957 : vector<16xf32> to vector<16x1xf32>
    %959 = arith.truncf %956 : vector<16x16xf32> to vector<16x16xbf16>
    %960 = vector.extract_strided_slice %19 {offsets = [0, 48], sizes = [16, 16], strides = [1, 1]} : vector<16x64xbf16> to vector<16x16xbf16>
    %cst_155 = arith.constant dense<0.000000e+00> : vector<16x16xf32>
    %961 = tpu.matmul %959, %960, %cst_155 {dimension_numbers = #tpu.dot_dimension_numbers<[1], [0], [0], [1], [0, 0, 1, 1], [], []>} : vector<16x16xbf16>, vector<16x16xbf16>, vector<16x16xf32> -> vector<16x16xf32>
    %962 = vector.broadcast %958 : vector<16x1xf32> to vector<16x16xf32>
    %963 = arith.divf %961, %962 : vector<16x16xf32>
    %964 = tpu.concatenate %255, %491, %727, %963 in 1 : vector<16x16xf32>, vector<16x16xf32>, vector<16x16xf32>, vector<16x16xf32> -> vector<16x64xf32>
    %c0_156 = arith.constant 0 : index
    %c0_157 = arith.constant 0 : index
    %965 = vector.load %arg7[%c0_156, %c0_157] : memref<64x16xf32, #tpu.memory_space<vmem>>, vector<64x16xf32>
    %cst_158 = arith.constant dense<0.000000e+00> : vector<16x16xf32>
    %966 = tpu.matmul %964, %965, %cst_158 {dimension_numbers = #tpu.dot_dimension_numbers<[1], [0], [0], [1], [0, 0, 1, 1], [], []>} : vector<16x64xf32>, vector<64x16xf32>, vector<16x16xf32> -> vector<16x16xf32>
    %c0_159 = arith.constant 0 : index
    %c0_160 = arith.constant 0 : index
    %967 = vector.load %arg8[%c0_159, %c0_160] : memref<1x16xf32, #tpu.memory_space<vmem>>, vector<1x16xf32>
    %968 = vector.broadcast %967 : vector<1x16xf32> to vector<16x16xf32>
    %969 = arith.addf %966, %968 : vector<16x16xf32>
    %c0_161 = arith.constant 0 : index
    %c0_162 = arith.constant 0 : index
    %970 = vector.load %arg9[%c0_161, %c0_162] : memref<64x16xf32, #tpu.memory_space<vmem>>, vector<64x16xf32>
    %cst_163 = arith.constant dense<0.000000e+00> : vector<16x16xf32>
    %971 = tpu.matmul %964, %970, %cst_163 {dimension_numbers = #tpu.dot_dimension_numbers<[1], [0], [0], [1], [0, 0, 1, 1], [], []>} : vector<16x64xf32>, vector<64x16xf32>, vector<16x16xf32> -> vector<16x16xf32>
    %c0_164 = arith.constant 0 : index
    %c0_165 = arith.constant 0 : index
    %972 = vector.load %arg10[%c0_164, %c0_165] : memref<1x16xf32, #tpu.memory_space<vmem>>, vector<1x16xf32>
    %973 = vector.broadcast %972 : vector<1x16xf32> to vector<16x16xf32>
    %974 = arith.addf %971, %973 : vector<16x16xf32>
    %975 = tpu.transpose %969, [1, 0] : vector<16x16xf32> -> vector<16x16xf32>
    %976 = arith.truncf %969 : vector<16x16xf32> to vector<16x16xbf16>
    %c0_166 = arith.constant 0 : index
    %977 = memref.load %arg11[%c0_166] : memref<16xf32, #tpu.memory_space<smem>>
    %978 = vector.extract_strided_slice %974 {offsets = [0, 0], sizes = [16, 1], strides = [1, 1]} : vector<16x16xf32> to vector<16x1xf32>
    %979 = vector.extract_strided_slice %975 {offsets = [0, 0], sizes = [1, 16], strides = [1, 1]} : vector<16x16xf32> to vector<1x16xf32>
    %980 = vector.broadcast %978 : vector<16x1xf32> to vector<16x16xf32>
    %981 = vector.broadcast %979 : vector<1x16xf32> to vector<16x16xf32>
    %982 = arith.addf %980, %981 : vector<16x16xf32>
    %cst_167 = arith.constant 0.000000e+00 : f32
    %983 = vector.broadcast %cst_167 : f32 to vector<16x16xf32>
    %984 = arith.cmpf ogt, %982, %983 : vector<16x16xf32>
    %cst_168 = arith.constant 2.000000e-01 : f32
    %985 = vector.broadcast %cst_168 : f32 to vector<16x16xf32>
    %986 = arith.mulf %985, %982 : vector<16x16xf32>
    %987 = arith.select %984, %982, %986 : vector<16x16xi1>, vector<16x16xf32>
    %988 = vector.broadcast %977 : f32 to vector<16x16xf32>
    %989 = arith.mulf %988, %987 : vector<16x16xf32>
    %990 = arith.addf %6, %989 : vector<16x16xf32>
    %c1_169 = arith.constant 1 : index
    %991 = memref.load %arg11[%c1_169] : memref<16xf32, #tpu.memory_space<smem>>
    %992 = vector.extract_strided_slice %974 {offsets = [0, 1], sizes = [16, 1], strides = [1, 1]} : vector<16x16xf32> to vector<16x1xf32>
    %993 = vector.extract_strided_slice %975 {offsets = [1, 0], sizes = [1, 16], strides = [1, 1]} : vector<16x16xf32> to vector<1x16xf32>
    %994 = vector.broadcast %992 : vector<16x1xf32> to vector<16x16xf32>
    %995 = vector.broadcast %993 : vector<1x16xf32> to vector<16x16xf32>
    %996 = arith.addf %994, %995 : vector<16x16xf32>
    %cst_170 = arith.constant 0.000000e+00 : f32
    %997 = vector.broadcast %cst_170 : f32 to vector<16x16xf32>
    %998 = arith.cmpf ogt, %996, %997 : vector<16x16xf32>
    %cst_171 = arith.constant 2.000000e-01 : f32
    %999 = vector.broadcast %cst_171 : f32 to vector<16x16xf32>
    %1000 = arith.mulf %999, %996 : vector<16x16xf32>
    %1001 = arith.select %998, %996, %1000 : vector<16x16xi1>, vector<16x16xf32>
    %1002 = vector.broadcast %991 : f32 to vector<16x16xf32>
    %1003 = arith.mulf %1002, %1001 : vector<16x16xf32>
    %1004 = arith.addf %990, %1003 : vector<16x16xf32>
    %c2_172 = arith.constant 2 : index
    %1005 = memref.load %arg11[%c2_172] : memref<16xf32, #tpu.memory_space<smem>>
    %1006 = vector.extract_strided_slice %974 {offsets = [0, 2], sizes = [16, 1], strides = [1, 1]} : vector<16x16xf32> to vector<16x1xf32>
    %1007 = vector.extract_strided_slice %975 {offsets = [2, 0], sizes = [1, 16], strides = [1, 1]} : vector<16x16xf32> to vector<1x16xf32>
    %1008 = vector.broadcast %1006 : vector<16x1xf32> to vector<16x16xf32>
    %1009 = vector.broadcast %1007 : vector<1x16xf32> to vector<16x16xf32>
    %1010 = arith.addf %1008, %1009 : vector<16x16xf32>
    %cst_173 = arith.constant 0.000000e+00 : f32
    %1011 = vector.broadcast %cst_173 : f32 to vector<16x16xf32>
    %1012 = arith.cmpf ogt, %1010, %1011 : vector<16x16xf32>
    %cst_174 = arith.constant 2.000000e-01 : f32
    %1013 = vector.broadcast %cst_174 : f32 to vector<16x16xf32>
    %1014 = arith.mulf %1013, %1010 : vector<16x16xf32>
    %1015 = arith.select %1012, %1010, %1014 : vector<16x16xi1>, vector<16x16xf32>
    %1016 = vector.broadcast %1005 : f32 to vector<16x16xf32>
    %1017 = arith.mulf %1016, %1015 : vector<16x16xf32>
    %1018 = arith.addf %1004, %1017 : vector<16x16xf32>
    %c3_175 = arith.constant 3 : index
    %1019 = memref.load %arg11[%c3_175] : memref<16xf32, #tpu.memory_space<smem>>
    %1020 = vector.extract_strided_slice %974 {offsets = [0, 3], sizes = [16, 1], strides = [1, 1]} : vector<16x16xf32> to vector<16x1xf32>
    %1021 = vector.extract_strided_slice %975 {offsets = [3, 0], sizes = [1, 16], strides = [1, 1]} : vector<16x16xf32> to vector<1x16xf32>
    %1022 = vector.broadcast %1020 : vector<16x1xf32> to vector<16x16xf32>
    %1023 = vector.broadcast %1021 : vector<1x16xf32> to vector<16x16xf32>
    %1024 = arith.addf %1022, %1023 : vector<16x16xf32>
    %cst_176 = arith.constant 0.000000e+00 : f32
    %1025 = vector.broadcast %cst_176 : f32 to vector<16x16xf32>
    %1026 = arith.cmpf ogt, %1024, %1025 : vector<16x16xf32>
    %cst_177 = arith.constant 2.000000e-01 : f32
    %1027 = vector.broadcast %cst_177 : f32 to vector<16x16xf32>
    %1028 = arith.mulf %1027, %1024 : vector<16x16xf32>
    %1029 = arith.select %1026, %1024, %1028 : vector<16x16xi1>, vector<16x16xf32>
    %1030 = vector.broadcast %1019 : f32 to vector<16x16xf32>
    %1031 = arith.mulf %1030, %1029 : vector<16x16xf32>
    %1032 = arith.addf %1018, %1031 : vector<16x16xf32>
    %c4_178 = arith.constant 4 : index
    %1033 = memref.load %arg11[%c4_178] : memref<16xf32, #tpu.memory_space<smem>>
    %1034 = vector.extract_strided_slice %974 {offsets = [0, 4], sizes = [16, 1], strides = [1, 1]} : vector<16x16xf32> to vector<16x1xf32>
    %1035 = vector.extract_strided_slice %975 {offsets = [4, 0], sizes = [1, 16], strides = [1, 1]} : vector<16x16xf32> to vector<1x16xf32>
    %1036 = vector.broadcast %1034 : vector<16x1xf32> to vector<16x16xf32>
    %1037 = vector.broadcast %1035 : vector<1x16xf32> to vector<16x16xf32>
    %1038 = arith.addf %1036, %1037 : vector<16x16xf32>
    %cst_179 = arith.constant 0.000000e+00 : f32
    %1039 = vector.broadcast %cst_179 : f32 to vector<16x16xf32>
    %1040 = arith.cmpf ogt, %1038, %1039 : vector<16x16xf32>
    %cst_180 = arith.constant 2.000000e-01 : f32
    %1041 = vector.broadcast %cst_180 : f32 to vector<16x16xf32>
    %1042 = arith.mulf %1041, %1038 : vector<16x16xf32>
    %1043 = arith.select %1040, %1038, %1042 : vector<16x16xi1>, vector<16x16xf32>
    %1044 = vector.broadcast %1033 : f32 to vector<16x16xf32>
    %1045 = arith.mulf %1044, %1043 : vector<16x16xf32>
    %1046 = arith.addf %1032, %1045 : vector<16x16xf32>
    %c5_181 = arith.constant 5 : index
    %1047 = memref.load %arg11[%c5_181] : memref<16xf32, #tpu.memory_space<smem>>
    %1048 = vector.extract_strided_slice %974 {offsets = [0, 5], sizes = [16, 1], strides = [1, 1]} : vector<16x16xf32> to vector<16x1xf32>
    %1049 = vector.extract_strided_slice %975 {offsets = [5, 0], sizes = [1, 16], strides = [1, 1]} : vector<16x16xf32> to vector<1x16xf32>
    %1050 = vector.broadcast %1048 : vector<16x1xf32> to vector<16x16xf32>
    %1051 = vector.broadcast %1049 : vector<1x16xf32> to vector<16x16xf32>
    %1052 = arith.addf %1050, %1051 : vector<16x16xf32>
    %cst_182 = arith.constant 0.000000e+00 : f32
    %1053 = vector.broadcast %cst_182 : f32 to vector<16x16xf32>
    %1054 = arith.cmpf ogt, %1052, %1053 : vector<16x16xf32>
    %cst_183 = arith.constant 2.000000e-01 : f32
    %1055 = vector.broadcast %cst_183 : f32 to vector<16x16xf32>
    %1056 = arith.mulf %1055, %1052 : vector<16x16xf32>
    %1057 = arith.select %1054, %1052, %1056 : vector<16x16xi1>, vector<16x16xf32>
    %1058 = vector.broadcast %1047 : f32 to vector<16x16xf32>
    %1059 = arith.mulf %1058, %1057 : vector<16x16xf32>
    %1060 = arith.addf %1046, %1059 : vector<16x16xf32>
    %c6_184 = arith.constant 6 : index
    %1061 = memref.load %arg11[%c6_184] : memref<16xf32, #tpu.memory_space<smem>>
    %1062 = vector.extract_strided_slice %974 {offsets = [0, 6], sizes = [16, 1], strides = [1, 1]} : vector<16x16xf32> to vector<16x1xf32>
    %1063 = vector.extract_strided_slice %975 {offsets = [6, 0], sizes = [1, 16], strides = [1, 1]} : vector<16x16xf32> to vector<1x16xf32>
    %1064 = vector.broadcast %1062 : vector<16x1xf32> to vector<16x16xf32>
    %1065 = vector.broadcast %1063 : vector<1x16xf32> to vector<16x16xf32>
    %1066 = arith.addf %1064, %1065 : vector<16x16xf32>
    %cst_185 = arith.constant 0.000000e+00 : f32
    %1067 = vector.broadcast %cst_185 : f32 to vector<16x16xf32>
    %1068 = arith.cmpf ogt, %1066, %1067 : vector<16x16xf32>
    %cst_186 = arith.constant 2.000000e-01 : f32
    %1069 = vector.broadcast %cst_186 : f32 to vector<16x16xf32>
    %1070 = arith.mulf %1069, %1066 : vector<16x16xf32>
    %1071 = arith.select %1068, %1066, %1070 : vector<16x16xi1>, vector<16x16xf32>
    %1072 = vector.broadcast %1061 : f32 to vector<16x16xf32>
    %1073 = arith.mulf %1072, %1071 : vector<16x16xf32>
    %1074 = arith.addf %1060, %1073 : vector<16x16xf32>
    %c7_187 = arith.constant 7 : index
    %1075 = memref.load %arg11[%c7_187] : memref<16xf32, #tpu.memory_space<smem>>
    %1076 = vector.extract_strided_slice %974 {offsets = [0, 7], sizes = [16, 1], strides = [1, 1]} : vector<16x16xf32> to vector<16x1xf32>
    %1077 = vector.extract_strided_slice %975 {offsets = [7, 0], sizes = [1, 16], strides = [1, 1]} : vector<16x16xf32> to vector<1x16xf32>
    %1078 = vector.broadcast %1076 : vector<16x1xf32> to vector<16x16xf32>
    %1079 = vector.broadcast %1077 : vector<1x16xf32> to vector<16x16xf32>
    %1080 = arith.addf %1078, %1079 : vector<16x16xf32>
    %cst_188 = arith.constant 0.000000e+00 : f32
    %1081 = vector.broadcast %cst_188 : f32 to vector<16x16xf32>
    %1082 = arith.cmpf ogt, %1080, %1081 : vector<16x16xf32>
    %cst_189 = arith.constant 2.000000e-01 : f32
    %1083 = vector.broadcast %cst_189 : f32 to vector<16x16xf32>
    %1084 = arith.mulf %1083, %1080 : vector<16x16xf32>
    %1085 = arith.select %1082, %1080, %1084 : vector<16x16xi1>, vector<16x16xf32>
    %1086 = vector.broadcast %1075 : f32 to vector<16x16xf32>
    %1087 = arith.mulf %1086, %1085 : vector<16x16xf32>
    %1088 = arith.addf %1074, %1087 : vector<16x16xf32>
    %c8_190 = arith.constant 8 : index
    %1089 = memref.load %arg11[%c8_190] : memref<16xf32, #tpu.memory_space<smem>>
    %1090 = vector.extract_strided_slice %974 {offsets = [0, 8], sizes = [16, 1], strides = [1, 1]} : vector<16x16xf32> to vector<16x1xf32>
    %1091 = vector.extract_strided_slice %975 {offsets = [8, 0], sizes = [1, 16], strides = [1, 1]} : vector<16x16xf32> to vector<1x16xf32>
    %1092 = vector.broadcast %1090 : vector<16x1xf32> to vector<16x16xf32>
    %1093 = vector.broadcast %1091 : vector<1x16xf32> to vector<16x16xf32>
    %1094 = arith.addf %1092, %1093 : vector<16x16xf32>
    %cst_191 = arith.constant 0.000000e+00 : f32
    %1095 = vector.broadcast %cst_191 : f32 to vector<16x16xf32>
    %1096 = arith.cmpf ogt, %1094, %1095 : vector<16x16xf32>
    %cst_192 = arith.constant 2.000000e-01 : f32
    %1097 = vector.broadcast %cst_192 : f32 to vector<16x16xf32>
    %1098 = arith.mulf %1097, %1094 : vector<16x16xf32>
    %1099 = arith.select %1096, %1094, %1098 : vector<16x16xi1>, vector<16x16xf32>
    %1100 = vector.broadcast %1089 : f32 to vector<16x16xf32>
    %1101 = arith.mulf %1100, %1099 : vector<16x16xf32>
    %1102 = arith.addf %1088, %1101 : vector<16x16xf32>
    %c9_193 = arith.constant 9 : index
    %1103 = memref.load %arg11[%c9_193] : memref<16xf32, #tpu.memory_space<smem>>
    %1104 = vector.extract_strided_slice %974 {offsets = [0, 9], sizes = [16, 1], strides = [1, 1]} : vector<16x16xf32> to vector<16x1xf32>
    %1105 = vector.extract_strided_slice %975 {offsets = [9, 0], sizes = [1, 16], strides = [1, 1]} : vector<16x16xf32> to vector<1x16xf32>
    %1106 = vector.broadcast %1104 : vector<16x1xf32> to vector<16x16xf32>
    %1107 = vector.broadcast %1105 : vector<1x16xf32> to vector<16x16xf32>
    %1108 = arith.addf %1106, %1107 : vector<16x16xf32>
    %cst_194 = arith.constant 0.000000e+00 : f32
    %1109 = vector.broadcast %cst_194 : f32 to vector<16x16xf32>
    %1110 = arith.cmpf ogt, %1108, %1109 : vector<16x16xf32>
    %cst_195 = arith.constant 2.000000e-01 : f32
    %1111 = vector.broadcast %cst_195 : f32 to vector<16x16xf32>
    %1112 = arith.mulf %1111, %1108 : vector<16x16xf32>
    %1113 = arith.select %1110, %1108, %1112 : vector<16x16xi1>, vector<16x16xf32>
    %1114 = vector.broadcast %1103 : f32 to vector<16x16xf32>
    %1115 = arith.mulf %1114, %1113 : vector<16x16xf32>
    %1116 = arith.addf %1102, %1115 : vector<16x16xf32>
    %c10_196 = arith.constant 10 : index
    %1117 = memref.load %arg11[%c10_196] : memref<16xf32, #tpu.memory_space<smem>>
    %1118 = vector.extract_strided_slice %974 {offsets = [0, 10], sizes = [16, 1], strides = [1, 1]} : vector<16x16xf32> to vector<16x1xf32>
    %1119 = vector.extract_strided_slice %975 {offsets = [10, 0], sizes = [1, 16], strides = [1, 1]} : vector<16x16xf32> to vector<1x16xf32>
    %1120 = vector.broadcast %1118 : vector<16x1xf32> to vector<16x16xf32>
    %1121 = vector.broadcast %1119 : vector<1x16xf32> to vector<16x16xf32>
    %1122 = arith.addf %1120, %1121 : vector<16x16xf32>
    %cst_197 = arith.constant 0.000000e+00 : f32
    %1123 = vector.broadcast %cst_197 : f32 to vector<16x16xf32>
    %1124 = arith.cmpf ogt, %1122, %1123 : vector<16x16xf32>
    %cst_198 = arith.constant 2.000000e-01 : f32
    %1125 = vector.broadcast %cst_198 : f32 to vector<16x16xf32>
    %1126 = arith.mulf %1125, %1122 : vector<16x16xf32>
    %1127 = arith.select %1124, %1122, %1126 : vector<16x16xi1>, vector<16x16xf32>
    %1128 = vector.broadcast %1117 : f32 to vector<16x16xf32>
    %1129 = arith.mulf %1128, %1127 : vector<16x16xf32>
    %1130 = arith.addf %1116, %1129 : vector<16x16xf32>
    %c11_199 = arith.constant 11 : index
    %1131 = memref.load %arg11[%c11_199] : memref<16xf32, #tpu.memory_space<smem>>
    %1132 = vector.extract_strided_slice %974 {offsets = [0, 11], sizes = [16, 1], strides = [1, 1]} : vector<16x16xf32> to vector<16x1xf32>
    %1133 = vector.extract_strided_slice %975 {offsets = [11, 0], sizes = [1, 16], strides = [1, 1]} : vector<16x16xf32> to vector<1x16xf32>
    %1134 = vector.broadcast %1132 : vector<16x1xf32> to vector<16x16xf32>
    %1135 = vector.broadcast %1133 : vector<1x16xf32> to vector<16x16xf32>
    %1136 = arith.addf %1134, %1135 : vector<16x16xf32>
    %cst_200 = arith.constant 0.000000e+00 : f32
    %1137 = vector.broadcast %cst_200 : f32 to vector<16x16xf32>
    %1138 = arith.cmpf ogt, %1136, %1137 : vector<16x16xf32>
    %cst_201 = arith.constant 2.000000e-01 : f32
    %1139 = vector.broadcast %cst_201 : f32 to vector<16x16xf32>
    %1140 = arith.mulf %1139, %1136 : vector<16x16xf32>
    %1141 = arith.select %1138, %1136, %1140 : vector<16x16xi1>, vector<16x16xf32>
    %1142 = vector.broadcast %1131 : f32 to vector<16x16xf32>
    %1143 = arith.mulf %1142, %1141 : vector<16x16xf32>
    %1144 = arith.addf %1130, %1143 : vector<16x16xf32>
    %c12_202 = arith.constant 12 : index
    %1145 = memref.load %arg11[%c12_202] : memref<16xf32, #tpu.memory_space<smem>>
    %1146 = vector.extract_strided_slice %974 {offsets = [0, 12], sizes = [16, 1], strides = [1, 1]} : vector<16x16xf32> to vector<16x1xf32>
    %1147 = vector.extract_strided_slice %975 {offsets = [12, 0], sizes = [1, 16], strides = [1, 1]} : vector<16x16xf32> to vector<1x16xf32>
    %1148 = vector.broadcast %1146 : vector<16x1xf32> to vector<16x16xf32>
    %1149 = vector.broadcast %1147 : vector<1x16xf32> to vector<16x16xf32>
    %1150 = arith.addf %1148, %1149 : vector<16x16xf32>
    %cst_203 = arith.constant 0.000000e+00 : f32
    %1151 = vector.broadcast %cst_203 : f32 to vector<16x16xf32>
    %1152 = arith.cmpf ogt, %1150, %1151 : vector<16x16xf32>
    %cst_204 = arith.constant 2.000000e-01 : f32
    %1153 = vector.broadcast %cst_204 : f32 to vector<16x16xf32>
    %1154 = arith.mulf %1153, %1150 : vector<16x16xf32>
    %1155 = arith.select %1152, %1150, %1154 : vector<16x16xi1>, vector<16x16xf32>
    %1156 = vector.broadcast %1145 : f32 to vector<16x16xf32>
    %1157 = arith.mulf %1156, %1155 : vector<16x16xf32>
    %1158 = arith.addf %1144, %1157 : vector<16x16xf32>
    %c13_205 = arith.constant 13 : index
    %1159 = memref.load %arg11[%c13_205] : memref<16xf32, #tpu.memory_space<smem>>
    %1160 = vector.extract_strided_slice %974 {offsets = [0, 13], sizes = [16, 1], strides = [1, 1]} : vector<16x16xf32> to vector<16x1xf32>
    %1161 = vector.extract_strided_slice %975 {offsets = [13, 0], sizes = [1, 16], strides = [1, 1]} : vector<16x16xf32> to vector<1x16xf32>
    %1162 = vector.broadcast %1160 : vector<16x1xf32> to vector<16x16xf32>
    %1163 = vector.broadcast %1161 : vector<1x16xf32> to vector<16x16xf32>
    %1164 = arith.addf %1162, %1163 : vector<16x16xf32>
    %cst_206 = arith.constant 0.000000e+00 : f32
    %1165 = vector.broadcast %cst_206 : f32 to vector<16x16xf32>
    %1166 = arith.cmpf ogt, %1164, %1165 : vector<16x16xf32>
    %cst_207 = arith.constant 2.000000e-01 : f32
    %1167 = vector.broadcast %cst_207 : f32 to vector<16x16xf32>
    %1168 = arith.mulf %1167, %1164 : vector<16x16xf32>
    %1169 = arith.select %1166, %1164, %1168 : vector<16x16xi1>, vector<16x16xf32>
    %1170 = vector.broadcast %1159 : f32 to vector<16x16xf32>
    %1171 = arith.mulf %1170, %1169 : vector<16x16xf32>
    %1172 = arith.addf %1158, %1171 : vector<16x16xf32>
    %c14_208 = arith.constant 14 : index
    %1173 = memref.load %arg11[%c14_208] : memref<16xf32, #tpu.memory_space<smem>>
    %1174 = vector.extract_strided_slice %974 {offsets = [0, 14], sizes = [16, 1], strides = [1, 1]} : vector<16x16xf32> to vector<16x1xf32>
    %1175 = vector.extract_strided_slice %975 {offsets = [14, 0], sizes = [1, 16], strides = [1, 1]} : vector<16x16xf32> to vector<1x16xf32>
    %1176 = vector.broadcast %1174 : vector<16x1xf32> to vector<16x16xf32>
    %1177 = vector.broadcast %1175 : vector<1x16xf32> to vector<16x16xf32>
    %1178 = arith.addf %1176, %1177 : vector<16x16xf32>
    %cst_209 = arith.constant 0.000000e+00 : f32
    %1179 = vector.broadcast %cst_209 : f32 to vector<16x16xf32>
    %1180 = arith.cmpf ogt, %1178, %1179 : vector<16x16xf32>
    %cst_210 = arith.constant 2.000000e-01 : f32
    %1181 = vector.broadcast %cst_210 : f32 to vector<16x16xf32>
    %1182 = arith.mulf %1181, %1178 : vector<16x16xf32>
    %1183 = arith.select %1180, %1178, %1182 : vector<16x16xi1>, vector<16x16xf32>
    %1184 = vector.broadcast %1173 : f32 to vector<16x16xf32>
    %1185 = arith.mulf %1184, %1183 : vector<16x16xf32>
    %1186 = arith.addf %1172, %1185 : vector<16x16xf32>
    %c15_211 = arith.constant 15 : index
    %1187 = memref.load %arg11[%c15_211] : memref<16xf32, #tpu.memory_space<smem>>
    %1188 = vector.extract_strided_slice %974 {offsets = [0, 15], sizes = [16, 1], strides = [1, 1]} : vector<16x16xf32> to vector<16x1xf32>
    %1189 = vector.extract_strided_slice %975 {offsets = [15, 0], sizes = [1, 16], strides = [1, 1]} : vector<16x16xf32> to vector<1x16xf32>
    %1190 = vector.broadcast %1188 : vector<16x1xf32> to vector<16x16xf32>
    %1191 = vector.broadcast %1189 : vector<1x16xf32> to vector<16x16xf32>
    %1192 = arith.addf %1190, %1191 : vector<16x16xf32>
    %cst_212 = arith.constant 0.000000e+00 : f32
    %1193 = vector.broadcast %cst_212 : f32 to vector<16x16xf32>
    %1194 = arith.cmpf ogt, %1192, %1193 : vector<16x16xf32>
    %cst_213 = arith.constant 2.000000e-01 : f32
    %1195 = vector.broadcast %cst_213 : f32 to vector<16x16xf32>
    %1196 = arith.mulf %1195, %1192 : vector<16x16xf32>
    %1197 = arith.select %1194, %1192, %1196 : vector<16x16xi1>, vector<16x16xf32>
    %1198 = vector.broadcast %1187 : f32 to vector<16x16xf32>
    %1199 = arith.mulf %1198, %1197 : vector<16x16xf32>
    %1200 = arith.addf %1186, %1199 : vector<16x16xf32>
    %cst_214 = arith.constant dense<0xFF800000> : vector<16xf32>
    %1201 = vector.multi_reduction <maximumf>, %1200, %cst_214 [1] : vector<16x16xf32> to vector<16xf32>
    %1202 = vector.shape_cast %1201 : vector<16xf32> to vector<16x1xf32>
    %1203 = vector.broadcast %1202 : vector<16x1xf32> to vector<16x16xf32>
    %1204 = arith.subf %1200, %1203 : vector<16x16xf32>
    %1205 = math.exp %1204 : vector<16x16xf32>
    %cst_215 = arith.constant dense<0.000000e+00> : vector<16xf32>
    %1206 = vector.multi_reduction <add>, %1205, %cst_215 [1] : vector<16x16xf32> to vector<16xf32>
    %1207 = vector.shape_cast %1206 : vector<16xf32> to vector<16x1xf32>
    %1208 = arith.truncf %1205 : vector<16x16xf32> to vector<16x16xbf16>
    %cst_216 = arith.constant dense<0.000000e+00> : vector<16x16xf32>
    %1209 = tpu.matmul %1208, %976, %cst_216 {dimension_numbers = #tpu.dot_dimension_numbers<[1], [0], [0], [1], [0, 0, 1, 1], [], []>} : vector<16x16xbf16>, vector<16x16xbf16>, vector<16x16xf32> -> vector<16x16xf32>
    %1210 = vector.broadcast %1207 : vector<16x1xf32> to vector<16x16xf32>
    %1211 = arith.divf %1209, %1210 : vector<16x16xf32>
    %c0_217 = arith.constant 0 : index
    %c0_218 = arith.constant 0 : index
    %1212 = vector.load %arg12[%c0_217, %c0_218] : memref<16x16xf32, #tpu.memory_space<vmem>>, vector<16x16xf32>
    tpu.vector_store %arg12[%c0_217, %c0_218], %1211 {strides = array<i32>} : memref<16x16xf32, #tpu.memory_space<vmem>>, vector<16x16xf32>,
    return
  }
}

</mosaic_0001>

<llo_original>
// kernel: tpu_custom_call.1
$region0: #{tpu_custom_call.1}
  #allocation0 [shape = 'u32[]', space=smem, size = 0x4, offset = 0x4, fixed_abs, tag = 'smem constant byte address 0x4 - core index']
  #allocation1 [shape = 'u32[144,128]{1,0:T(1,128)}', space=vmem, size = 0x12000, scoped, tag = 'internal scratch']
  %s0 = inlined_call_operand.vmem [shape: s8[16,16], index: 0, kind: input, shape index: {}]
  %s1 = inlined_call_operand.vmem [shape: f32[16,8], index: 1, kind: input, shape index: {}]
  %s2 = inlined_call_operand.vmem [shape: f32[8,64], index: 2, kind: input, shape index: {}]
  %s3 = inlined_call_operand.vmem [shape: f32[1,64], index: 3, kind: input, shape index: {}]
  %s4 = inlined_call_operand.vmem [shape: f32[8,64], index: 4, kind: input, shape index: {}]
  %s5 = inlined_call_operand.vmem [shape: f32[1,64], index: 5, kind: input, shape index: {}]
  %s6 = inlined_call_operand.vmem [shape: f32[64], index: 6, kind: input, shape index: {}]
  %s7 = inlined_call_operand.vmem [shape: f32[64,16], index: 7, kind: input, shape index: {}]
  %s8 = inlined_call_operand.vmem [shape: f32[1,16], index: 8, kind: input, shape index: {}]
  %s9 = inlined_call_operand.vmem [shape: f32[64,16], index: 9, kind: input, shape index: {}]
  %s10 = inlined_call_operand.vmem [shape: f32[1,16], index: 10, kind: input, shape index: {}]
  %s11 = inlined_call_operand.vmem [shape: f32[16], index: 11, kind: input, shape index: {}]
  %s12 = inlined_call_operand.hbm [shape: f32[16,16], index: 12, kind: output, shape index: {}]
  %s13 = sld [smem:[#allocation0]]
  $region66: #{tpu_custom_call.1} parent=0
    _
  %s15 = ssub.s32 1, %s13
  %s16 = scalar_select 0, %s15, %s13
  $region1: #{tpu_custom_call.1} parent=0
    #allocation2 [shape = 'u8[512]{0}', space=smem, size = 0x200, scoped, tag = 'input window, operand 6, single buffered']
    #allocation3 [shape = 's32[1]{0}', space=sflag, size = 0x4, scoped, tag = 'scoped memory for tpu_custom_call.1']
    #allocation4 [shape = 's32[1]{0}', space=sflag, size = 0x4, scoped, tag = 'scoped memory for tpu_custom_call.1']
    #allocation5 [shape = 'u8[512]{0}', space=smem, size = 0x200, scoped, tag = 'input window, operand 11, single buffered']
    #allocation6 [shape = 's32[1]{0}', space=sflag, size = 0x4, scoped, tag = 'scoped memory for tpu_custom_call.1']
    #allocation7 [shape = 'u8[8192]{0}', space=vmem, size = 0x2000, scoped, tag = 'output window, operand 0, single buffered']
    %17 = vsyncpa [#allocation4], 0
    %18 = vsyncpa [#allocation6], 0
    %19 = vsyncpa [#allocation3], 0
    // Predicated region
    $region2: #{tpu_custom_call.1} parent=1 // pred_check
      _
    $region3: #{tpu_custom_call.1} parent=1 // pred_check_branch
      %21 = sbr.rel (0) target = $region5
    $region4: #{tpu_custom_call.1} parent=1 // pred_region
      _
    $region5: #{tpu_custom_call.1} parent=1 // pred_fallthru
      _
    // Predicated region
    $region6: #{tpu_custom_call.1} parent=1 // pred_check
      _
    $region7: #{tpu_custom_call.1} parent=1 // pred_check_branch
      %23 = sbr.rel (0) target = $region9
    $region8: #{tpu_custom_call.1} parent=1 // pred_region
      _
    $region9: #{tpu_custom_call.1} parent=1 // pred_fallthru
      _
    // Predicated region
    $region10: #{tpu_custom_call.1} parent=1 // pred_check
      _
    $region11: #{tpu_custom_call.1} parent=1 // pred_check_branch
      %25 = sbr.rel (0) target = $region13
    $region12: #{tpu_custom_call.1} parent=1 // pred_region
      _
    $region13: #{tpu_custom_call.1} parent=1 // pred_fallthru
      _
    // Predicated region
    $region14: #{tpu_custom_call.1} parent=1 // pred_check
      _
    $region15: #{tpu_custom_call.1} parent=1 // pred_check_branch
      %27 = sbr.rel (0) target = $region17
    $region16: #{tpu_custom_call.1} parent=1 // pred_region
      _
    $region17: #{tpu_custom_call.1} parent=1 // pred_fallthru
      _
    // Predicated region
    $region18: #{tpu_custom_call.1} parent=1 // pred_check
      _
    $region19: #{tpu_custom_call.1} parent=1 // pred_check_branch
      %29 = sbr.rel (0) target = $region21
    $region20: #{tpu_custom_call.1} parent=1 // pred_region
      _
    $region21: #{tpu_custom_call.1} parent=1 // pred_fallthru
      _
    // Predicated region
    $region22: #{tpu_custom_call.1} parent=1 // pred_check
      _
    $region23: #{tpu_custom_call.1} parent=1 // pred_check_branch
      %31 = sbr.rel (0) target = $region25
    $region24: #{tpu_custom_call.1} parent=1 // pred_region
      _
    $region25: #{tpu_custom_call.1} parent=1 // pred_fallthru
      _
    // Predicated region
    $region26: #{tpu_custom_call.1} parent=1 // pred_check
      _
    $region27: #{tpu_custom_call.1} parent=1 // pred_check_branch
      %33 = sbr.rel (0) target = $region29
    $region28: #{tpu_custom_call.1} parent=1 // pred_region
      %s35 = ssub.s32 16, 16
      %36 = vsyncadd [#allocation4], %s35
      %s38 = sshll.u32 %s6, 4
      %s39 = int_to_ptr.vmem [resolvable:$true] %s38
      %41 = dma.vmem_to_smem %s39, 16, [#allocation2], [#allocation4]
    $region29: #{tpu_custom_call.1} parent=1 // pred_fallthru
      _
    // Predicated region
    $region30: #{tpu_custom_call.1} parent=1 // pred_check
      _
    $region31: #{tpu_custom_call.1} parent=1 // pred_check_branch
      %43 = sbr.rel (0) target = $region33
    $region32: #{tpu_custom_call.1} parent=1 // pred_region
      _
    $region33: #{tpu_custom_call.1} parent=1 // pred_fallthru
      _
    // Predicated region
    $region34: #{tpu_custom_call.1} parent=1 // pred_check
      _
    $region35: #{tpu_custom_call.1} parent=1 // pred_check_branch
      %45 = sbr.rel (0) target = $region37
    $region36: #{tpu_custom_call.1} parent=1 // pred_region
      _
    $region37: #{tpu_custom_call.1} parent=1 // pred_fallthru
      _
    // Predicated region
    $region38: #{tpu_custom_call.1} parent=1 // pred_check
      _
    $region39: #{tpu_custom_call.1} parent=1 // pred_check_branch
      %47 = sbr.rel (0) target = $region41
    $region40: #{tpu_custom_call.1} parent=1 // pred_region
      _
    $region41: #{tpu_custom_call.1} parent=1 // pred_fallthru
      _
    // Predicated region
    $region42: #{tpu_custom_call.1} parent=1 // pred_check
      _
    $region43: #{tpu_custom_call.1} parent=1 // pred_check_branch
      %49 = sbr.rel (0) target = $region45
    $region44: #{tpu_custom_call.1} parent=1 // pred_region
      _
    $region45: #{tpu_custom_call.1} parent=1 // pred_fallthru
      _
    // Predicated region
    $region46: #{tpu_custom_call.1} parent=1 // pred_check
      _
    $region47: #{tpu_custom_call.1} parent=1 // pred_check_branch
      %51 = sbr.rel (0) target = $region49
    $region48: #{tpu_custom_call.1} parent=1 // pred_region
      %s53 = ssub.s32 16, 16
      %54 = vsyncadd [#allocation6], %s53
      %s56 = sshll.u32 %s11, 4
      %s57 = int_to_ptr.vmem [resolvable:$true] %s56
      %59 = dma.vmem_to_smem %s57, 16, [#allocation5], [#allocation6]
    $region49: #{tpu_custom_call.1} parent=1 // pred_fallthru
      _
    // Predicated region
    $region50: #{tpu_custom_call.1} parent=1 // pred_check
      _
    $region51: #{tpu_custom_call.1} parent=1 // pred_check_branch
      %61 = sbr.rel (0) target = $region53
    $region52: #{tpu_custom_call.1} parent=1 // pred_region
      %62 = dma.done [#allocation4], 16
    $region53: #{tpu_custom_call.1} parent=1 // pred_fallthru
      _
    // Predicated region
    $region54: #{tpu_custom_call.1} parent=1 // pred_check
      _
    $region55: #{tpu_custom_call.1} parent=1 // pred_check_branch
      %64 = sbr.rel (0) target = $region57
    $region56: #{tpu_custom_call.1} parent=1 // pred_region
      %65 = dma.done [#allocation6], 16
    $region57: #{tpu_custom_call.1} parent=1 // pred_fallthru
      _
    %66 = sfence
    %v68 = vld [vmem:[%s0] sm:$0x3]
    %v69 = vld [vmem:[%s0 + $0x2] sm:$0x3]
    %v70 = vunpack.c.0.s8 %v68
    %v71 = vunpack.c.0.s8 %v69
    %v72 = vcvt.s32.f32 %v70
    %v73 = vcvt.s32.f32 %v71
    %vm74 = vcmp.gt.f32.partialorder %v72, 0.5
    %vm75 = vcmp.gt.f32.partialorder %v73, 0.5
    %v76 = vsel %vm74, 0.0, -1e+30
    %v77 = vsel %vm75, 0.0, -1e+30
    %v78 = vld [vmem:[%s1] sm:$0xff]
    %v79 = vld [vmem:[%s1 + $0x8] sm:$0xff]
    %v80 = vld [vmem:[%s2] sm:$0xff]
    %v81 = vld [vmem:[%s3] sm:$0x1]
    %v83 = vlaneseq
    %v84 = vshrl.u32 %v83, 7
    %v85 = vsub.s32 0, %v84
    %v86 = vrot.slane %v81, %v85
    %vm88 = vcmask 64512
    %v90 = vsel %vm88, %v78, 0
    %v93 = vsel %vm88, %v79, 0
    %95 = vmatprep.subr.mxu0 0.0
    %96 = vmatpush1.msra.mxu0 0.0
    %97 = vmatprep.subr.mxu0 0.0
    %98 = vmatpush1.msra.mxu0 0.0
    %99 = vmatprep.subr.mxu0 0.0
    %100 = vmatpush1.msra.mxu0 0.0
    %101 = vmatprep.subr.mxu0 0.0
    %102 = vmatpush1.msra.mxu0 0.0
    %103 = vmatprep.subr.mxu0 0.0
    %104 = vmatpush1.msra.mxu0 0.0
    %105 = vmatprep.subr.mxu0 0.0
    %106 = vmatpush1.msra.mxu0 0.0
    %107 = vmatprep.subr.mxu0 0.0
    %108 = vmatpush1.msra.mxu0 0.0
    %109 = vmatprep.subr.mxu0 0.0
    %110 = vmatpush1.msra.mxu0 0.0
    %111 = vmatprep.subr.mxu0 0.0
    %112 = vmatpush1.msra.mxu0 0.0
    %113 = vmatprep.subr.mxu0 0.0
    %114 = vmatpush1.msra.mxu0 0.0
    %115 = vmatprep.subr.mxu0 0.0
    %116 = vmatpush1.msra.mxu0 0.0
    %117 = vmatprep.subr.mxu0 0.0
    %118 = vmatpush1.msra.mxu0 0.0
    %119 = vmatprep.subr.mxu0 0.0
    %120 = vmatpush1.msra.mxu0 0.0
    %121 = vmatprep.subr.mxu0 0.0
    %122 = vmatpush1.msra.mxu0 0.0
    %123 = vmatprep.subr.mxu0 0.0
    %124 = vmatpush1.msra.mxu0 0.0
    %125 = vmatprep.subr.mxu0 0.0
    %126 = vmatpush1.msra.mxu0 %v80
    %127 = vmatprep.subr.mxu0 0.0
    %128 = vmatpush2.msra.mxu0 0.0
    %129 = vmatprep.subr.mxu0 0.0
    %130 = vmatpush2.msra.mxu0 0.0
    %131 = vmatprep.subr.mxu0 0.0
    %132 = vmatpush2.msra.mxu0 0.0
    %133 = vmatprep.subr.mxu0 0.0
    %134 = vmatpush2.msra.mxu0 0.0
    %135 = vmatprep.subr.mxu0 0.0
    %136 = vmatpush2.msra.mxu0 0.0
    %137 = vmatprep.subr.mxu0 0.0
    %138 = vmatpush2.msra.mxu0 0.0
    %139 = vmatprep.subr.mxu0 0.0
    %140 = vmatpush2.msra.mxu0 0.0
    %141 = vmatprep.subr.mxu0 0.0
    %142 = vmatpush2.msra.mxu0 0.0
    %143 = vmatprep.subr.mxu0 0.0
    %144 = vmatpush2.msra.mxu0 0.0
    %145 = vmatprep.subr.mxu0 0.0
    %146 = vmatpush2.msra.mxu0 0.0
    %147 = vmatprep.subr.mxu0 0.0
    %148 = vmatpush2.msra.mxu0 0.0
    %149 = vmatprep.subr.mxu0 0.0
    %150 = vmatpush2.msra.mxu0 0.0
    %151 = vmatprep.subr.mxu0 0.0
    %152 = vmatpush2.msra.mxu0 0.0
    %153 = vmatprep.subr.mxu0 0.0
    %154 = vmatpush2.msra.mxu0 0.0
    %155 = vmatprep.subr.mxu0 0.0
    %156 = vmatpush2.msra.mxu0 0.0
    %157 = vmatprep.subr.mxu0 0.0
    %158 = vmatpush2.msra.mxu0 0.0
    %159 = vmatprep.mubr.f32.mxu0 0.0
    %160 = vmatmul.mubr.f32.gmra.mxu0 %v90
    %v161 = vpop.f32.mrf.mxu0
    %v162 = vadd.f32 %v86, %v161
    %v163 = vpop.f32.mrf.mxu0
    %164 = vmatprep.mubr.f32.mxu0 0.0
    %165 = vmatmul.mubr.f32.gmra.mxu0 %v93
    %v166 = vpop.f32.mrf.mxu0
    %v167 = vadd.f32 %v86, %v166
    %v168 = vpop.f32.mrf.mxu0
    %169 = vdwg.mxu0
    %v170 = vld [vmem:[%s4] sm:$0xff]
    %v171 = vld [vmem:[%s5] sm:$0x1]
    %v173 = vlaneseq
    %v174 = vshrl.u32 %v173, 7
    %v175 = vsub.s32 0, %v174
    %v176 = vrot.slane %v171, %v175
    %178 = vmatprep.subr.mxu0 0.0
    %179 = vmatpush1.msra.mxu0 0.0
    %180 = vmatprep.subr.mxu0 0.0
    %181 = vmatpush1.msra.mxu0 0.0
    %182 = vmatprep.subr.mxu0 0.0
    %183 = vmatpush1.msra.mxu0 0.0
    %184 = vmatprep.subr.mxu0 0.0
    %185 = vmatpush1.msra.mxu0 0.0
    %186 = vmatprep.subr.mxu0 0.0
    %187 = vmatpush1.msra.mxu0 0.0
    %188 = vmatprep.subr.mxu0 0.0
    %189 = vmatpush1.msra.mxu0 0.0
    %190 = vmatprep.subr.mxu0 0.0
    %191 = vmatpush1.msra.mxu0 0.0
    %192 = vmatprep.subr.mxu0 0.0
    %193 = vmatpush1.msra.mxu0 0.0
    %194 = vmatprep.subr.mxu0 0.0
    %195 = vmatpush1.msra.mxu0 0.0
    %196 = vmatprep.subr.mxu0 0.0
    %197 = vmatpush1.msra.mxu0 0.0
    %198 = vmatprep.subr.mxu0 0.0
    %199 = vmatpush1.msra.mxu0 0.0
    %200 = vmatprep.subr.mxu0 0.0
    %201 = vmatpush1.msra.mxu0 0.0
    %202 = vmatprep.subr.mxu0 0.0
    %203 = vmatpush1.msra.mxu0 0.0
    %204 = vmatprep.subr.mxu0 0.0
    %205 = vmatpush1.msra.mxu0 0.0
    %206 = vmatprep.subr.mxu0 0.0
    %207 = vmatpush1.msra.mxu0 0.0
    %208 = vmatprep.subr.mxu0 0.0
    %209 = vmatpush1.msra.mxu0 %v170
    %210 = vmatprep.subr.mxu0 0.0
    %211 = vmatpush2.msra.mxu0 0.0
    %212 = vmatprep.subr.mxu0 0.0
    %213 = vmatpush2.msra.mxu0 0.0
    %214 = vmatprep.subr.mxu0 0.0
    %215 = vmatpush2.msra.mxu0 0.0
    %216 = vmatprep.subr.mxu0 0.0
    %217 = vmatpush2.msra.mxu0 0.0
    %218 = vmatprep.subr.mxu0 0.0
    %219 = vmatpush2.msra.mxu0 0.0
    %220 = vmatprep.subr.mxu0 0.0
    %221 = vmatpush2.msra.mxu0 0.0
    %222 = vmatprep.subr.mxu0 0.0
    %223 = vmatpush2.msra.mxu0 0.0
    %224 = vmatprep.subr.mxu0 0.0
    %225 = vmatpush2.msra.mxu0 0.0
    %226 = vmatprep.subr.mxu0 0.0
    %227 = vmatpush2.msra.mxu0 0.0
    %228 = vmatprep.subr.mxu0 0.0
    %229 = vmatpush2.msra.mxu0 0.0
    %230 = vmatprep.subr.mxu0 0.0
    %231 = vmatpush2.msra.mxu0 0.0
    %232 = vmatprep.subr.mxu0 0.0
    %233 = vmatpush2.msra.mxu0 0.0
    %234 = vmatprep.subr.mxu0 0.0
    %235 = vmatpush2.msra.mxu0 0.0
    %236 = vmatprep.subr.mxu0 0.0
    %237 = vmatpush2.msra.mxu0 0.0
    %238 = vmatprep.subr.mxu0 0.0
    %239 = vmatpush2.msra.mxu0 0.0
    %240 = vmatprep.subr.mxu0 0.0
    %241 = vmatpush2.msra.mxu0 0.0
    %242 = vmatprep.mubr.f32.mxu0 0.0
    %243 = vmatmul.mubr.f32.gmra.mxu0 %v90
    %v244 = vpop.f32.mrf.mxu0
    %v245 = vadd.f32 %v176, %v244
    %v246 = vpop.f32.mrf.mxu0
    %247 = vmatprep.mubr.f32.mxu0 0.0
    %248 = vmatmul.mubr.f32.gmra.mxu0 %v93
    %v249 = vpop.f32.mrf.mxu0
    %v250 = vadd.f32 %v176, %v249
    %v251 = vpop.f32.mrf.mxu0
    %252 = vdwg.mxu0
    %253 = vxpose.xlu0.b32.start [1/16] %v162, 128
    %254 = vxpose.xlu0.b32.cont [2/16] %v167, 128
    %255 = vxpose.xlu0.b32.cont [3/16] 0.0, 128
    %256 = vxpose.xlu0.b32.cont [4/16] 0.0, 128
    %257 = vxpose.xlu0.b32.cont [5/16] 0.0, 128
    %258 = vxpose.xlu0.b32.cont [6/16] 0.0, 128
    %259 = vxpose.xlu0.b32.cont [7/16] 0.0, 128
    %260 = vxpose.xlu0.b32.cont [8/16] 0.0, 128
    %261 = vxpose.xlu0.b32.cont [9/16] 0.0, 128
    %262 = vxpose.xlu0.b32.cont [10/16] 0.0, 128
    %263 = vxpose.xlu0.b32.cont [11/16] 0.0, 128
    %264 = vxpose.xlu0.b32.cont [12/16] 0.0, 128
    %265 = vxpose.xlu0.b32.cont [13/16] 0.0, 128
    %266 = vxpose.xlu0.b32.cont [14/16] 0.0, 128
    %267 = vxpose.xlu0.b32.cont [15/16] 0.0, 128
    %268 = vxpose.xlu0.b32.end [16/16] 0.0, 128
    %v269 = vpop.trf.xlu0
    %v270 = vpop.trf.xlu0
    %v271 = vpop.trf.xlu0
    %v272 = vpop.trf.xlu0
    %v273 = vpop.trf.xlu0
    %v274 = vpop.trf.xlu0
    %v275 = vpop.trf.xlu0
    %v276 = vpop.trf.xlu0
    %v277 = vpop.trf.xlu0
    %v278 = vpop.trf.xlu0
    %v279 = vpop.trf.xlu0
    %v280 = vpop.trf.xlu0
    %v281 = vpop.trf.xlu0
    %v282 = vpop.trf.xlu0
    %v283 = vpop.trf.xlu0
    %v284 = vpop.trf.xlu0
    %v285 = vpack.c.bf16 %v167, %v162
    %s286 = sld [smem:[#allocation2]]
    %288 = vset.pattern.permute.xlu0 0
    %289 = vperm.xlu0 %288, %v245
    %v290 = vpop.permute.xlu0 %289
    %293 = vset.pattern.permute.xlu0 0
    %294 = vperm.xlu0 %293, %v250
    %v295 = vpop.permute.xlu0 %294
    %v297 = vlaneseq
    %v298 = vshrl.u32 %v297, 7
    %v299 = vsub.s32 0, %v298
    %v300 = vrot.slane %v269, %v299
    %v301 = vadd.f32 %v290, %v300
    %v302 = vadd.f32 %v295, %v300
    %vm303 = vcmp.gt.f32.partialorder %v301, 0.0
    %vm304 = vcmp.gt.f32.partialorder %v302, 0.0
    %v305 = vmul.f32 %v301, 0.2
    %v306 = vmul.f32 %v302, 0.2
    %v307 = vsel %vm303, %v301, %v305
    %v308 = vsel %vm304, %v302, %v306
    %v309 = vstv %s286
    %v310 = vmul.f32 %v309, %v307
    %v311 = vmul.f32 %v309, %v308
    %v312 = vadd.f32 %v76, %v310
    %v313 = vadd.f32 %v77, %v311
    %s314 = sld [smem:[#allocation2 + $0x1]]
    %315 = vset.pattern.permute.xlu0 1
    %316 = vperm.xlu0 %315, %v245
    %v317 = vpop.permute.xlu0 %316
    %319 = vset.pattern.permute.xlu0 1
    %320 = vperm.xlu0 %319, %v250
    %v321 = vpop.permute.xlu0 %320
    %v323 = vlaneseq
    %v324 = vshrl.u32 %v323, 7
    %v325 = vsub.s32 1, %v324
    %v326 = vrot.slane %v269, %v325
    %v327 = vadd.f32 %v317, %v326
    %v328 = vadd.f32 %v321, %v326
    %vm329 = vcmp.gt.f32.partialorder %v327, 0.0
    %vm330 = vcmp.gt.f32.partialorder %v328, 0.0
    %v331 = vmul.f32 %v327, 0.2
    %v332 = vmul.f32 %v328, 0.2
    %v333 = vsel %vm329, %v327, %v331
    %v334 = vsel %vm330, %v328, %v332
    %v335 = vstv %s314
    %v336 = vmul.f32 %v335, %v333
    %v337 = vmul.f32 %v335, %v334
    %v338 = vadd.f32 %v312, %v336
    %v339 = vadd.f32 %v313, %v337
    %s340 = sld [smem:[#allocation2 + $0x2]]
    %341 = vset.pattern.permute.xlu0 2
    %342 = vperm.xlu0 %341, %v245
    %v343 = vpop.permute.xlu0 %342
    %345 = vset.pattern.permute.xlu0 2
    %346 = vperm.xlu0 %345, %v250
    %v347 = vpop.permute.xlu0 %346
    %v349 = vlaneseq
    %v350 = vshrl.u32 %v349, 7
    %v351 = vsub.s32 2, %v350
    %v352 = vrot.slane %v269, %v351
    %v353 = vadd.f32 %v343, %v352
    %v354 = vadd.f32 %v347, %v352
    %vm355 = vcmp.gt.f32.partialorder %v353, 0.0
    %vm356 = vcmp.gt.f32.partialorder %v354, 0.0
    %v357 = vmul.f32 %v353, 0.2
    %v358 = vmul.f32 %v354, 0.2
    %v359 = vsel %vm355, %v353, %v357
    %v360 = vsel %vm356, %v354, %v358
    %v361 = vstv %s340
    %v362 = vmul.f32 %v361, %v359
    %v363 = vmul.f32 %v361, %v360
    %v364 = vadd.f32 %v338, %v362
    %v365 = vadd.f32 %v339, %v363
    %s366 = sld [smem:[#allocation2 + $0x3]]
    %367 = vset.pattern.permute.xlu0 3
    %368 = vperm.xlu0 %367, %v245
    %v369 = vpop.permute.xlu0 %368
    %371 = vset.pattern.permute.xlu0 3
    %372 = vperm.xlu0 %371, %v250
    %v373 = vpop.permute.xlu0 %372
    %v375 = vlaneseq
    %v376 = vshrl.u32 %v375, 7
    %v377 = vsub.s32 3, %v376
    %v378 = vrot.slane %v269, %v377
    %v379 = vadd.f32 %v369, %v378
    %v380 = vadd.f32 %v373, %v378
    %vm381 = vcmp.gt.f32.partialorder %v379, 0.0
    %vm382 = vcmp.gt.f32.partialorder %v380, 0.0
    %v383 = vmul.f32 %v379, 0.2
    %v384 = vmul.f32 %v380, 0.2
    %v385 = vsel %vm381, %v379, %v383
    %v386 = vsel %vm382, %v380, %v384
    %v387 = vstv %s366
    %v388 = vmul.f32 %v387, %v385
    %v389 = vmul.f32 %v387, %v386
    %v390 = vadd.f32 %v364, %v388
    %v391 = vadd.f32 %v365, %v389
    %s392 = sld [smem:[#allocation2 + $0x4]]
    %393 = vset.pattern.permute.xlu0 4
    %394 = vperm.xlu0 %393, %v245
    %v395 = vpop.permute.xlu0 %394
    %397 = vset.pattern.permute.xlu0 4
    %398 = vperm.xlu0 %397, %v250
    %v399 = vpop.permute.xlu0 %398
    %v401 = vlaneseq
    %v402 = vshrl.u32 %v401, 7
    %v403 = vsub.s32 4, %v402
    %v404 = vrot.slane %v269, %v403
    %v405 = vadd.f32 %v395, %v404
    %v406 = vadd.f32 %v399, %v404
    %vm407 = vcmp.gt.f32.partialorder %v405, 0.0
    %vm408 = vcmp.gt.f32.partialorder %v406, 0.0
    %v409 = vmul.f32 %v405, 0.2
    %v410 = vmul.f32 %v406, 0.2
    %v411 = vsel %vm407, %v405, %v409
    %v412 = vsel %vm408, %v406, %v410
    %v413 = vstv %s392
    %v414 = vmul.f32 %v413, %v411
    %v415 = vmul.f32 %v413, %v412
    %v416 = vadd.f32 %v390, %v414
    %v417 = vadd.f32 %v391, %v415
    %s418 = sld [smem:[#allocation2 + $0x5]]
    %419 = vset.pattern.permute.xlu0 5
    %420 = vperm.xlu0 %419, %v245
    %v421 = vpop.permute.xlu0 %420
    %423 = vset.pattern.permute.xlu0 5
    %424 = vperm.xlu0 %423, %v250
    %v425 = vpop.permute.xlu0 %424
    %v427 = vlaneseq
    %v428 = vshrl.u32 %v427, 7
    %v429 = vsub.s32 5, %v428
    %v430 = vrot.slane %v269, %v429
    %v431 = vadd.f32 %v421, %v430
    %v432 = vadd.f32 %v425, %v430
    %vm433 = vcmp.gt.f32.partialorder %v431, 0.0
    %vm434 = vcmp.gt.f32.partialorder %v432, 0.0
    %v435 = vmul.f32 %v431, 0.2
    %v436 = vmul.f32 %v432, 0.2
    %v437 = vsel %vm433, %v431, %v435
    %v438 = vsel %vm434, %v432, %v436
    %v439 = vstv %s418
    %v440 = vmul.f32 %v439, %v437
    %v441 = vmul.f32 %v439, %v438
    %v442 = vadd.f32 %v416, %v440
    %v443 = vadd.f32 %v417, %v441
    %s444 = sld [smem:[#allocation2 + $0x6]]
    %445 = vset.pattern.permute.xlu0 6
    %446 = vperm.xlu0 %445, %v245
    %v447 = vpop.permute.xlu0 %446
    %449 = vset.pattern.permute.xlu0 6
    %450 = vperm.xlu0 %449, %v250
    %v451 = vpop.permute.xlu0 %450
    %v453 = vlaneseq
    %v454 = vshrl.u32 %v453, 7
    %v455 = vsub.s32 6, %v454
    %v456 = vrot.slane %v269, %v455
    %v457 = vadd.f32 %v447, %v456
    %v458 = vadd.f32 %v451, %v456
    %vm459 = vcmp.gt.f32.partialorder %v457, 0.0
    %vm460 = vcmp.gt.f32.partialorder %v458, 0.0
    %v461 = vmul.f32 %v457, 0.2
    %v462 = vmul.f32 %v458, 0.2
    %v463 = vsel %vm459, %v457, %v461
    %v464 = vsel %vm460, %v458, %v462
    %v465 = vstv %s444
    %v466 = vmul.f32 %v465, %v463
    %v467 = vmul.f32 %v465, %v464
    %v468 = vadd.f32 %v442, %v466
    %v469 = vadd.f32 %v443, %v467
    %s470 = sld [smem:[#allocation2 + $0x7]]
    %471 = vset.pattern.permute.xlu0 7
    %472 = vperm.xlu0 %471, %v245
    %v473 = vpop.permute.xlu0 %472
    %475 = vset.pattern.permute.xlu0 7
    %476 = vperm.xlu0 %475, %v250
    %v477 = vpop.permute.xlu0 %476
    %v479 = vlaneseq
    %v480 = vshrl.u32 %v479, 7
    %v481 = vsub.s32 7, %v480
    %v482 = vrot.slane %v269, %v481
    %v483 = vadd.f32 %v473, %v482
    %v484 = vadd.f32 %v477, %v482
    %vm485 = vcmp.gt.f32.partialorder %v483, 0.0
    %vm486 = vcmp.gt.f32.partialorder %v484, 0.0
    %v487 = vmul.f32 %v483, 0.2
    %v488 = vmul.f32 %v484, 0.2
    %v489 = vsel %vm485, %v483, %v487
    %v490 = vsel %vm486, %v484, %v488
    %v491 = vstv %s470
    %v492 = vmul.f32 %v491, %v489
    %v493 = vmul.f32 %v491, %v490
    %v494 = vadd.f32 %v468, %v492
    %v495 = vadd.f32 %v469, %v493
    %s496 = sld [smem:[#allocation2 + $0x8]]
    %497 = vset.pattern.permute.xlu0 8
    %498 = vperm.xlu0 %497, %v245
    %v499 = vpop.permute.xlu0 %498
    %501 = vset.pattern.permute.xlu0 8
    %502 = vperm.xlu0 %501, %v250
    %v503 = vpop.permute.xlu0 %502
    %v505 = vlaneseq
    %v506 = vshrl.u32 %v505, 7
    %v507 = vsub.s32 0, %v506
    %v508 = vrot.slane %v270, %v507
    %v509 = vadd.f32 %v499, %v508
    %v510 = vadd.f32 %v503, %v508
    %vm511 = vcmp.gt.f32.partialorder %v509, 0.0
    %vm512 = vcmp.gt.f32.partialorder %v510, 0.0
    %v513 = vmul.f32 %v509, 0.2
    %v514 = vmul.f32 %v510, 0.2
    %v515 = vsel %vm511, %v509, %v513
    %v516 = vsel %vm512, %v510, %v514
    %v517 = vstv %s496
    %v518 = vmul.f32 %v517, %v515
    %v519 = vmul.f32 %v517, %v516
    %v520 = vadd.f32 %v494, %v518
    %v521 = vadd.f32 %v495, %v519
    %s522 = sld [smem:[#allocation2 + $0x9]]
    %523 = vset.pattern.permute.xlu0 9
    %524 = vperm.xlu0 %523, %v245
    %v525 = vpop.permute.xlu0 %524
    %527 = vset.pattern.permute.xlu0 9
    %528 = vperm.xlu0 %527, %v250
    %v529 = vpop.permute.xlu0 %528
    %v531 = vlaneseq
    %v532 = vshrl.u32 %v531, 7
    %v533 = vsub.s32 1, %v532
    %v534 = vrot.slane %v270, %v533
    %v535 = vadd.f32 %v525, %v534
    %v536 = vadd.f32 %v529, %v534
    %vm537 = vcmp.gt.f32.partialorder %v535, 0.0
    %vm538 = vcmp.gt.f32.partialorder %v536, 0.0
    %v539 = vmul.f32 %v535, 0.2
    %v540 = vmul.f32 %v536, 0.2
    %v541 = vsel %vm537, %v535, %v539
    %v542 = vsel %vm538, %v536, %v540
    %v543 = vstv %s522
    %v544 = vmul.f32 %v543, %v541
    %v545 = vmul.f32 %v543, %v542
    %v546 = vadd.f32 %v520, %v544
    %v547 = vadd.f32 %v521, %v545
    %s548 = sld [smem:[#allocation2 + $0xa]]
    %549 = vset.pattern.permute.xlu0 10
    %550 = vperm.xlu0 %549, %v245
    %v551 = vpop.permute.xlu0 %550
    %553 = vset.pattern.permute.xlu0 10
    %554 = vperm.xlu0 %553, %v250
    %v555 = vpop.permute.xlu0 %554
    %v557 = vlaneseq
    %v558 = vshrl.u32 %v557, 7
    %v559 = vsub.s32 2, %v558
    %v560 = vrot.slane %v270, %v559
    %v561 = vadd.f32 %v551, %v560
    %v562 = vadd.f32 %v555, %v560
    %vm563 = vcmp.gt.f32.partialorder %v561, 0.0
    %vm564 = vcmp.gt.f32.partialorder %v562, 0.0
    %v565 = vmul.f32 %v561, 0.2
    %v566 = vmul.f32 %v562, 0.2
    %v567 = vsel %vm563, %v561, %v565
    %v568 = vsel %vm564, %v562, %v566
    %v569 = vstv %s548
    %v570 = vmul.f32 %v569, %v567
    %v571 = vmul.f32 %v569, %v568
    %v572 = vadd.f32 %v546, %v570
    %v573 = vadd.f32 %v547, %v571
    %s574 = sld [smem:[#allocation2 + $0xb]]
    %575 = vset.pattern.permute.xlu0 11
    %576 = vperm.xlu0 %575, %v245
    %v577 = vpop.permute.xlu0 %576
    %579 = vset.pattern.permute.xlu0 11
    %580 = vperm.xlu0 %579, %v250
    %v581 = vpop.permute.xlu0 %580
    %v583 = vlaneseq
    %v584 = vshrl.u32 %v583, 7
    %v585 = vsub.s32 3, %v584
    %v586 = vrot.slane %v270, %v585
    %v587 = vadd.f32 %v577, %v586
    %v588 = vadd.f32 %v581, %v586
    %vm589 = vcmp.gt.f32.partialorder %v587, 0.0
    %vm590 = vcmp.gt.f32.partialorder %v588, 0.0
    %v591 = vmul.f32 %v587, 0.2
    %v592 = vmul.f32 %v588, 0.2
    %v593 = vsel %vm589, %v587, %v591
    %v594 = vsel %vm590, %v588, %v592
    %v595 = vstv %s574
    %v596 = vmul.f32 %v595, %v593
    %v597 = vmul.f32 %v595, %v594
    %v598 = vadd.f32 %v572, %v596
    %v599 = vadd.f32 %v573, %v597
    %s600 = sld [smem:[#allocation2 + $0xc]]
    %601 = vset.pattern.permute.xlu0 12
    %602 = vperm.xlu0 %601, %v245
    %v603 = vpop.permute.xlu0 %602
    %605 = vset.pattern.permute.xlu0 12
    %606 = vperm.xlu0 %605, %v250
    %v607 = vpop.permute.xlu0 %606
    %v609 = vlaneseq
    %v610 = vshrl.u32 %v609, 7
    %v611 = vsub.s32 4, %v610
    %v612 = vrot.slane %v270, %v611
    %v613 = vadd.f32 %v603, %v612
    %v614 = vadd.f32 %v607, %v612
    %vm615 = vcmp.gt.f32.partialorder %v613, 0.0
    %vm616 = vcmp.gt.f32.partialorder %v614, 0.0
    %v617 = vmul.f32 %v613, 0.2
    %v618 = vmul.f32 %v614, 0.2
    %v619 = vsel %vm615, %v613, %v617
    %v620 = vsel %vm616, %v614, %v618
    %v621 = vstv %s600
    %v622 = vmul.f32 %v621, %v619
    %v623 = vmul.f32 %v621, %v620
    %v624 = vadd.f32 %v598, %v622
    %v625 = vadd.f32 %v599, %v623
    %s626 = sld [smem:[#allocation2 + $0xd]]
    %627 = vset.pattern.permute.xlu0 13
    %628 = vperm.xlu0 %627, %v245
    %v629 = vpop.permute.xlu0 %628
    %631 = vset.pattern.permute.xlu0 13
    %632 = vperm.xlu0 %631, %v250
    %v633 = vpop.permute.xlu0 %632
    %v635 = vlaneseq
    %v636 = vshrl.u32 %v635, 7
    %v637 = vsub.s32 5, %v636
    %v638 = vrot.slane %v270, %v637
    %v639 = vadd.f32 %v629, %v638
    %v640 = vadd.f32 %v633, %v638
    %vm641 = vcmp.gt.f32.partialorder %v639, 0.0
    %vm642 = vcmp.gt.f32.partialorder %v640, 0.0
    %v643 = vmul.f32 %v639, 0.2
    %v644 = vmul.f32 %v640, 0.2
    %v645 = vsel %vm641, %v639, %v643
    %v646 = vsel %vm642, %v640, %v644
    %v647 = vstv %s626
    %v648 = vmul.f32 %v647, %v645
    %v649 = vmul.f32 %v647, %v646
    %v650 = vadd.f32 %v624, %v648
    %v651 = vadd.f32 %v625, %v649
    %s652 = sld [smem:[#allocation2 + $0xe]]
    %653 = vset.pattern.permute.xlu0 14
    %654 = vperm.xlu0 %653, %v245
    %v655 = vpop.permute.xlu0 %654
    %657 = vset.pattern.permute.xlu0 14
    %658 = vperm.xlu0 %657, %v250
    %v659 = vpop.permute.xlu0 %658
    %v661 = vlaneseq
    %v662 = vshrl.u32 %v661, 7
    %v663 = vsub.s32 6, %v662
    %v664 = vrot.slane %v270, %v663
    %v665 = vadd.f32 %v655, %v664
    %v666 = vadd.f32 %v659, %v664
    %vm667 = vcmp.gt.f32.partialorder %v665, 0.0
    %vm668 = vcmp.gt.f32.partialorder %v666, 0.0
    %v669 = vmul.f32 %v665, 0.2
    %v670 = vmul.f32 %v666, 0.2
    %v671 = vsel %vm667, %v665, %v669
    %v672 = vsel %vm668, %v666, %v670
    %v673 = vstv %s652
    %v674 = vmul.f32 %v673, %v671
    %v675 = vmul.f32 %v673, %v672
    %v676 = vadd.f32 %v650, %v674
    %v677 = vadd.f32 %v651, %v675
    %s678 = sld [smem:[#allocation2 + $0xf]]
    %679 = vset.pattern.permute.xlu0 15
    %680 = vperm.xlu0 %679, %v245
    %v681 = vpop.permute.xlu0 %680
    %683 = vset.pattern.permute.xlu0 15
    %684 = vperm.xlu0 %683, %v250
    %v685 = vpop.permute.xlu0 %684
    %v687 = vlaneseq
    %v688 = vshrl.u32 %v687, 7
    %v689 = vsub.s32 7, %v688
    %v690 = vrot.slane %v270, %v689
    %v691 = vadd.f32 %v681, %v690
    %v692 = vadd.f32 %v685, %v690
    %vm693 = vcmp.gt.f32.partialorder %v691, 0.0
    %vm694 = vcmp.gt.f32.partialorder %v692, 0.0
    %v695 = vmul.f32 %v691, 0.2
    %v696 = vmul.f32 %v692, 0.2
    %v697 = vsel %vm693, %v691, %v695
    %v698 = vsel %vm694, %v692, %v696
    %v699 = vstv %s678
    %v700 = vmul.f32 %v699, %v697
    %v701 = vmul.f32 %v699, %v698
    %v702 = vadd.f32 %v676, %v700
    %v703 = vadd.f32 %v677, %v701
    %vm704 = vcmask 130048
    %v705 = vsel %vm704, %v702, -inf
    %706 = vmax.xlane.f32.xlu0 %v705
    %v707 = vpop.xlane.xlu0 %706
    %v708 = vsel %vm704, %v703, -inf
    %709 = vmax.xlane.f32.xlu0 %v708
    %v710 = vpop.xlane.xlu0 %709
    %v711 = vsub.f32 %v702, %v707
    %v712 = vsub.f32 %v703, %v710
    %v713 = vmul.f32 %v711, 1.442695
    %v714 = vpow.pop %v713
    %v715 = vmul.f32 %v712, 1.442695
    %v716 = vpow.pop %v715
    %v717 = vsel %vm704, %v714, 0.0
    %718 = vadd.xlane.f32.xlu0 %v717
    %v719 = vpop.xlane.xlu0 %718
    %v720 = vsel %vm704, %v716, 0.0
    %721 = vadd.xlane.f32.xlu0 %v720
    %v722 = vpop.xlane.xlu0 %721
    %v723 = vpack.c.bf16 %v716, %v714
    %v725 = vsel %vm704, %v723, 0
    %727 = vmatprep.subr.bf16.mxu0 0
    %728 = vmatpush1.bf16.msra.mxu0 0
    %729 = vmatprep.subr.bf16.mxu0 0
    %730 = vmatpush1.bf16.msra.mxu0 0
    %731 = vmatprep.subr.bf16.mxu0 0
    %732 = vmatpush1.bf16.msra.mxu0 0
    %733 = vmatprep.subr.bf16.mxu0 0
    %734 = vmatpush1.bf16.msra.mxu0 0
    %735 = vmatprep.subr.bf16.mxu0 0
    %736 = vmatpush1.bf16.msra.mxu0 0
    %737 = vmatprep.subr.bf16.mxu0 0
    %738 = vmatpush1.bf16.msra.mxu0 0
    %739 = vmatprep.subr.bf16.mxu0 0
    %740 = vmatpush1.bf16.msra.mxu0 0
    %741 = vmatprep.subr.bf16.mxu0 0
    %742 = vmatpush1.bf16.msra.mxu0 %v285
    %743 = vmatprep.subr.bf16.mxu0 0
    %744 = vmatpush2.bf16.msra.mxu0 0
    %745 = vmatprep.subr.bf16.mxu0 0
    %746 = vmatpush2.bf16.msra.mxu0 0
    %747 = vmatprep.subr.bf16.mxu0 0
    %748 = vmatpush2.bf16.msra.mxu0 0
    %749 = vmatprep.subr.bf16.mxu0 0
    %750 = vmatpush2.bf16.msra.mxu0 0
    %751 = vmatprep.subr.bf16.mxu0 0
    %752 = vmatpush2.bf16.msra.mxu0 0
    %753 = vmatprep.subr.bf16.mxu0 0
    %754 = vmatpush2.bf16.msra.mxu0 0
    %755 = vmatprep.subr.bf16.mxu0 0
    %756 = vmatpush2.bf16.msra.mxu0 0
    %757 = vmatprep.subr.bf16.mxu0 0
    %758 = vmatpush2.bf16.msra.mxu0 0
    %759 = vmatprep.mubr.bf16.mxu0 0
    %760 = vmatmul.mubr.bf16.gmra.mxu0 %v725
    %v761 = vpop.f32.mrf.mxu0
    %v762 = vadd.f32 0.0, %v761
    %v763 = vpop.f32.mrf.mxu0
    %v764 = vpop.f32.mrf.mxu0
    %v765 = vadd.f32 0.0, %v764
    %v766 = vpop.f32.mrf.mxu0
    %767 = vdwg.mxu0
    %v768 = vrcp.pop %v719
    %v769 = vmul.f32 %v762, %v768
    %v770 = vrcp.pop %v722
    %v771 = vmul.f32 %v765, %v770
    %s772 = sld [smem:[#allocation2 + $0x10]]
    %773 = vset.pattern.permute.xlu0 16
    %774 = vperm.xlu0 %773, %v245
    %v775 = vpop.permute.xlu0 %774
    %777 = vset.pattern.permute.xlu0 16
    %778 = vperm.xlu0 %777, %v250
    %v779 = vpop.permute.xlu0 %778
    %v781 = vlaneseq
    %v782 = vshrl.u32 %v781, 7
    %v783 = vsub.s32 0, %v782
    %v784 = vrot.slane %v271, %v783
    %v785 = vadd.f32 %v775, %v784
    %v786 = vadd.f32 %v779, %v784
    %vm787 = vcmp.gt.f32.partialorder %v785, 0.0
    %vm788 = vcmp.gt.f32.partialorder %v786, 0.0
    %v789 = vmul.f32 %v785, 0.2
    %v790 = vmul.f32 %v786, 0.2
    %v791 = vsel %vm787, %v785, %v789
    %v792 = vsel %vm788, %v786, %v790
    %v793 = vstv %s772
    %v794 = vmul.f32 %v793, %v791
    %v795 = vmul.f32 %v793, %v792
    %v796 = vadd.f32 %v76, %v794
    %v797 = vadd.f32 %v77, %v795
    %s798 = sld [smem:[#allocation2 + $0x11]]
    %799 = vset.pattern.permute.xlu0 17
    %800 = vperm.xlu0 %799, %v245
    %v801 = vpop.permute.xlu0 %800
    %803 = vset.pattern.permute.xlu0 17
    %804 = vperm.xlu0 %803, %v250
    %v805 = vpop.permute.xlu0 %804
    %v807 = vlaneseq
    %v808 = vshrl.u32 %v807, 7
    %v809 = vsub.s32 1, %v808
    %v810 = vrot.slane %v271, %v809
    %v811 = vadd.f32 %v801, %v810
    %v812 = vadd.f32 %v805, %v810
    %vm813 = vcmp.gt.f32.partialorder %v811, 0.0
    %vm814 = vcmp.gt.f32.partialorder %v812, 0.0
    %v815 = vmul.f32 %v811, 0.2
    %v816 = vmul.f32 %v812, 0.2
    %v817 = vsel %vm813, %v811, %v815
    %v818 = vsel %vm814, %v812, %v816
    %v819 = vstv %s798
    %v820 = vmul.f32 %v819, %v817
    %v821 = vmul.f32 %v819, %v818
    %v822 = vadd.f32 %v796, %v820
    %v823 = vadd.f32 %v797, %v821
    %s824 = sld [smem:[#allocation2 + $0x12]]
    %825 = vset.pattern.permute.xlu0 18
    %826 = vperm.xlu0 %825, %v245
    %v827 = vpop.permute.xlu0 %826
    %829 = vset.pattern.permute.xlu0 18
    %830 = vperm.xlu0 %829, %v250
    %v831 = vpop.permute.xlu0 %830
    %v833 = vlaneseq
    %v834 = vshrl.u32 %v833, 7
    %v835 = vsub.s32 2, %v834
    %v836 = vrot.slane %v271, %v835
    %v837 = vadd.f32 %v827, %v836
    %v838 = vadd.f32 %v831, %v836
    %vm839 = vcmp.gt.f32.partialorder %v837, 0.0
    %vm840 = vcmp.gt.f32.partialorder %v838, 0.0
    %v841 = vmul.f32 %v837, 0.2
    %v842 = vmul.f32 %v838, 0.2
    %v843 = vsel %vm839, %v837, %v841
    %v844 = vsel %vm840, %v838, %v842
    %v845 = vstv %s824
    %v846 = vmul.f32 %v845, %v843
    %v847 = vmul.f32 %v845, %v844
    %v848 = vadd.f32 %v822, %v846
    %v849 = vadd.f32 %v823, %v847
    %s850 = sld [smem:[#allocation2 + $0x13]]
    %851 = vset.pattern.permute.xlu0 19
    %852 = vperm.xlu0 %851, %v245
    %v853 = vpop.permute.xlu0 %852
    %855 = vset.pattern.permute.xlu0 19
    %856 = vperm.xlu0 %855, %v250
    %v857 = vpop.permute.xlu0 %856
    %v859 = vlaneseq
    %v860 = vshrl.u32 %v859, 7
    %v861 = vsub.s32 3, %v860
    %v862 = vrot.slane %v271, %v861
    %v863 = vadd.f32 %v853, %v862
    %v864 = vadd.f32 %v857, %v862
    %vm865 = vcmp.gt.f32.partialorder %v863, 0.0
    %vm866 = vcmp.gt.f32.partialorder %v864, 0.0
    %v867 = vmul.f32 %v863, 0.2
    %v868 = vmul.f32 %v864, 0.2
    %v869 = vsel %vm865, %v863, %v867
    %v870 = vsel %vm866, %v864, %v868
    %v871 = vstv %s850
    %v872 = vmul.f32 %v871, %v869
    %v873 = vmul.f32 %v871, %v870
    %v874 = vadd.f32 %v848, %v872
    %v875 = vadd.f32 %v849, %v873
    %s876 = sld [smem:[#allocation2 + $0x14]]
    %877 = vset.pattern.permute.xlu0 20
    %878 = vperm.xlu0 %877, %v245
    %v879 = vpop.permute.xlu0 %878
    %881 = vset.pattern.permute.xlu0 20
    %882 = vperm.xlu0 %881, %v250
    %v883 = vpop.permute.xlu0 %882
    %v885 = vlaneseq
    %v886 = vshrl.u32 %v885, 7
    %v887 = vsub.s32 4, %v886
    %v888 = vrot.slane %v271, %v887
    %v889 = vadd.f32 %v879, %v888
    %v890 = vadd.f32 %v883, %v888
    %vm891 = vcmp.gt.f32.partialorder %v889, 0.0
    %vm892 = vcmp.gt.f32.partialorder %v890, 0.0
    %v893 = vmul.f32 %v889, 0.2
    %v894 = vmul.f32 %v890, 0.2
    %v895 = vsel %vm891, %v889, %v893
    %v896 = vsel %vm892, %v890, %v894
    %v897 = vstv %s876
    %v898 = vmul.f32 %v897, %v895
    %v899 = vmul.f32 %v897, %v896
    %v900 = vadd.f32 %v874, %v898
    %v901 = vadd.f32 %v875, %v899
    %s902 = sld [smem:[#allocation2 + $0x15]]
    %903 = vset.pattern.permute.xlu0 21
    %904 = vperm.xlu0 %903, %v245
    %v905 = vpop.permute.xlu0 %904
    %907 = vset.pattern.permute.xlu0 21
    %908 = vperm.xlu0 %907, %v250
    %v909 = vpop.permute.xlu0 %908
    %v911 = vlaneseq
    %v912 = vshrl.u32 %v911, 7
    %v913 = vsub.s32 5, %v912
    %v914 = vrot.slane %v271, %v913
    %v915 = vadd.f32 %v905, %v914
    %v916 = vadd.f32 %v909, %v914
    %vm917 = vcmp.gt.f32.partialorder %v915, 0.0
    %vm918 = vcmp.gt.f32.partialorder %v916, 0.0
    %v919 = vmul.f32 %v915, 0.2
    %v920 = vmul.f32 %v916, 0.2
    %v921 = vsel %vm917, %v915, %v919
    %v922 = vsel %vm918, %v916, %v920
    %v923 = vstv %s902
    %v924 = vmul.f32 %v923, %v921
    %v925 = vmul.f32 %v923, %v922
    %v926 = vadd.f32 %v900, %v924
    %v927 = vadd.f32 %v901, %v925
    %s928 = sld [smem:[#allocation2 + $0x16]]
    %929 = vset.pattern.permute.xlu0 22
    %930 = vperm.xlu0 %929, %v245
    %v931 = vpop.permute.xlu0 %930
    %933 = vset.pattern.permute.xlu0 22
    %934 = vperm.xlu0 %933, %v250
    %v935 = vpop.permute.xlu0 %934
    %v937 = vlaneseq
    %v938 = vshrl.u32 %v937, 7
    %v939 = vsub.s32 6, %v938
    %v940 = vrot.slane %v271, %v939
    %v941 = vadd.f32 %v931, %v940
    %v942 = vadd.f32 %v935, %v940
    %vm943 = vcmp.gt.f32.partialorder %v941, 0.0
    %vm944 = vcmp.gt.f32.partialorder %v942, 0.0
    %v945 = vmul.f32 %v941, 0.2
    %v946 = vmul.f32 %v942, 0.2
    %v947 = vsel %vm943, %v941, %v945
    %v948 = vsel %vm944, %v942, %v946
    %v949 = vstv %s928
    %v950 = vmul.f32 %v949, %v947
    %v951 = vmul.f32 %v949, %v948
    %v952 = vadd.f32 %v926, %v950
    %v953 = vadd.f32 %v927, %v951
    %s954 = sld [smem:[#allocation2 + $0x17]]
    %955 = vset.pattern.permute.xlu0 23
    %956 = vperm.xlu0 %955, %v245
    %v957 = vpop.permute.xlu0 %956
    %959 = vset.pattern.permute.xlu0 23
    %960 = vperm.xlu0 %959, %v250
    %v961 = vpop.permute.xlu0 %960
    %v963 = vlaneseq
    %v964 = vshrl.u32 %v963, 7
    %v965 = vsub.s32 7, %v964
    %v966 = vrot.slane %v271, %v965
    %v967 = vadd.f32 %v957, %v966
    %v968 = vadd.f32 %v961, %v966
    %vm969 = vcmp.gt.f32.partialorder %v967, 0.0
    %vm970 = vcmp.gt.f32.partialorder %v968, 0.0
    %v971 = vmul.f32 %v967, 0.2
    %v972 = vmul.f32 %v968, 0.2
    %v973 = vsel %vm969, %v967, %v971
    %v974 = vsel %vm970, %v968, %v972
    %v975 = vstv %s954
    %v976 = vmul.f32 %v975, %v973
    %v977 = vmul.f32 %v975, %v974
    %v978 = vadd.f32 %v952, %v976
    %v979 = vadd.f32 %v953, %v977
    %s980 = sld [smem:[#allocation2 + $0x18]]
    %981 = vset.pattern.permute.xlu0 24
    %982 = vperm.xlu0 %981, %v245
    %v983 = vpop.permute.xlu0 %982
    %985 = vset.pattern.permute.xlu0 24
    %986 = vperm.xlu0 %985, %v250
    %v987 = vpop.permute.xlu0 %986
    %v989 = vlaneseq
    %v990 = vshrl.u32 %v989, 7
    %v991 = vsub.s32 0, %v990
    %v992 = vrot.slane %v272, %v991
    %v993 = vadd.f32 %v983, %v992
    %v994 = vadd.f32 %v987, %v992
    %vm995 = vcmp.gt.f32.partialorder %v993, 0.0
    %vm996 = vcmp.gt.f32.partialorder %v994, 0.0
    %v997 = vmul.f32 %v993, 0.2
    %v998 = vmul.f32 %v994, 0.2
    %v999 = vsel %vm995, %v993, %v997
    %v1000 = vsel %vm996, %v994, %v998
    %v1001 = vstv %s980
    %v1002 = vmul.f32 %v1001, %v999
    %v1003 = vmul.f32 %v1001, %v1000
    %v1004 = vadd.f32 %v978, %v1002
    %v1005 = vadd.f32 %v979, %v1003
    %s1006 = sld [smem:[#allocation2 + $0x19]]
    %1007 = vset.pattern.permute.xlu0 25
    %1008 = vperm.xlu0 %1007, %v245
    %v1009 = vpop.permute.xlu0 %1008
    %1011 = vset.pattern.permute.xlu0 25
    %1012 = vperm.xlu0 %1011, %v250
    %v1013 = vpop.permute.xlu0 %1012
    %v1015 = vlaneseq
    %v1016 = vshrl.u32 %v1015, 7
    %v1017 = vsub.s32 1, %v1016
    %v1018 = vrot.slane %v272, %v1017
    %v1019 = vadd.f32 %v1009, %v1018
    %v1020 = vadd.f32 %v1013, %v1018
    %vm1021 = vcmp.gt.f32.partialorder %v1019, 0.0
    %vm1022 = vcmp.gt.f32.partialorder %v1020, 0.0
    %v1023 = vmul.f32 %v1019, 0.2
    %v1024 = vmul.f32 %v1020, 0.2
    %v1025 = vsel %vm1021, %v1019, %v1023
    %v1026 = vsel %vm1022, %v1020, %v1024
    %v1027 = vstv %s1006
    %v1028 = vmul.f32 %v1027, %v1025
    %v1029 = vmul.f32 %v1027, %v1026
    %v1030 = vadd.f32 %v1004, %v1028
    %v1031 = vadd.f32 %v1005, %v1029
    %s1032 = sld [smem:[#allocation2 + $0x1a]]
    %1033 = vset.pattern.permute.xlu0 26
    %1034 = vperm.xlu0 %1033, %v245
    %v1035 = vpop.permute.xlu0 %1034
    %1037 = vset.pattern.permute.xlu0 26
    %1038 = vperm.xlu0 %1037, %v250
    %v1039 = vpop.permute.xlu0 %1038
    %v1041 = vlaneseq
    %v1042 = vshrl.u32 %v1041, 7
    %v1043 = vsub.s32 2, %v1042
    %v1044 = vrot.slane %v272, %v1043
    %v1045 = vadd.f32 %v1035, %v1044
    %v1046 = vadd.f32 %v1039, %v1044
    %vm1047 = vcmp.gt.f32.partialorder %v1045, 0.0
    %vm1048 = vcmp.gt.f32.partialorder %v1046, 0.0
    %v1049 = vmul.f32 %v1045, 0.2
    %v1050 = vmul.f32 %v1046, 0.2
    %v1051 = vsel %vm1047, %v1045, %v1049
    %v1052 = vsel %vm1048, %v1046, %v1050
    %v1053 = vstv %s1032
    %v1054 = vmul.f32 %v1053, %v1051
    %v1055 = vmul.f32 %v1053, %v1052
    %v1056 = vadd.f32 %v1030, %v1054
    %v1057 = vadd.f32 %v1031, %v1055
    %s1058 = sld [smem:[#allocation2 + $0x1b]]
    %1059 = vset.pattern.permute.xlu0 27
    %1060 = vperm.xlu0 %1059, %v245
    %v1061 = vpop.permute.xlu0 %1060
    %1063 = vset.pattern.permute.xlu0 27
    %1064 = vperm.xlu0 %1063, %v250
    %v1065 = vpop.permute.xlu0 %1064
    %v1067 = vlaneseq
    %v1068 = vshrl.u32 %v1067, 7
    %v1069 = vsub.s32 3, %v1068
    %v1070 = vrot.slane %v272, %v1069
    %v1071 = vadd.f32 %v1061, %v1070
    %v1072 = vadd.f32 %v1065, %v1070
    %vm1073 = vcmp.gt.f32.partialorder %v1071, 0.0
    %vm1074 = vcmp.gt.f32.partialorder %v1072, 0.0
    %v1075 = vmul.f32 %v1071, 0.2
    %v1076 = vmul.f32 %v1072, 0.2
    %v1077 = vsel %vm1073, %v1071, %v1075
    %v1078 = vsel %vm1074, %v1072, %v1076
    %v1079 = vstv %s1058
    %v1080 = vmul.f32 %v1079, %v1077
    %v1081 = vmul.f32 %v1079, %v1078
    %v1082 = vadd.f32 %v1056, %v1080
    %v1083 = vadd.f32 %v1057, %v1081
    %s1084 = sld [smem:[#allocation2 + $0x1c]]
    %1085 = vset.pattern.permute.xlu0 28
    %1086 = vperm.xlu0 %1085, %v245
    %v1087 = vpop.permute.xlu0 %1086
    %1089 = vset.pattern.permute.xlu0 28
    %1090 = vperm.xlu0 %1089, %v250
    %v1091 = vpop.permute.xlu0 %1090
    %v1093 = vlaneseq
    %v1094 = vshrl.u32 %v1093, 7
    %v1095 = vsub.s32 4, %v1094
    %v1096 = vrot.slane %v272, %v1095
    %v1097 = vadd.f32 %v1087, %v1096
    %v1098 = vadd.f32 %v1091, %v1096
    %vm1099 = vcmp.gt.f32.partialorder %v1097, 0.0
    %vm1100 = vcmp.gt.f32.partialorder %v1098, 0.0
    %v1101 = vmul.f32 %v1097, 0.2
    %v1102 = vmul.f32 %v1098, 0.2
    %v1103 = vsel %vm1099, %v1097, %v1101
    %v1104 = vsel %vm1100, %v1098, %v1102
    %v1105 = vstv %s1084
    %v1106 = vmul.f32 %v1105, %v1103
    %v1107 = vmul.f32 %v1105, %v1104
    %v1108 = vadd.f32 %v1082, %v1106
    %v1109 = vadd.f32 %v1083, %v1107
    %s1110 = sld [smem:[#allocation2 + $0x1d]]
    %1111 = vset.pattern.permute.xlu0 29
    %1112 = vperm.xlu0 %1111, %v245
    %v1113 = vpop.permute.xlu0 %1112
    %1115 = vset.pattern.permute.xlu0 29
    %1116 = vperm.xlu0 %1115, %v250
    %v1117 = vpop.permute.xlu0 %1116
    %v1119 = vlaneseq
    %v1120 = vshrl.u32 %v1119, 7
    %v1121 = vsub.s32 5, %v1120
    %v1122 = vrot.slane %v272, %v1121
    %v1123 = vadd.f32 %v1113, %v1122
    %v1124 = vadd.f32 %v1117, %v1122
    %vm1125 = vcmp.gt.f32.partialorder %v1123, 0.0
    %vm1126 = vcmp.gt.f32.partialorder %v1124, 0.0
    %v1127 = vmul.f32 %v1123, 0.2
    %v1128 = vmul.f32 %v1124, 0.2
    %v1129 = vsel %vm1125, %v1123, %v1127
    %v1130 = vsel %vm1126, %v1124, %v1128
    %v1131 = vstv %s1110
    %v1132 = vmul.f32 %v1131, %v1129
    %v1133 = vmul.f32 %v1131, %v1130
    %v1134 = vadd.f32 %v1108, %v1132
    %v1135 = vadd.f32 %v1109, %v1133
    %s1136 = sld [smem:[#allocation2 + $0x1e]]
    %1137 = vset.pattern.permute.xlu0 30
    %1138 = vperm.xlu0 %1137, %v245
    %v1139 = vpop.permute.xlu0 %1138
    %1141 = vset.pattern.permute.xlu0 30
    %1142 = vperm.xlu0 %1141, %v250
    %v1143 = vpop.permute.xlu0 %1142
    %v1145 = vlaneseq
    %v1146 = vshrl.u32 %v1145, 7
    %v1147 = vsub.s32 6, %v1146
    %v1148 = vrot.slane %v272, %v1147
    %v1149 = vadd.f32 %v1139, %v1148
    %v1150 = vadd.f32 %v1143, %v1148
    %vm1151 = vcmp.gt.f32.partialorder %v1149, 0.0
    %vm1152 = vcmp.gt.f32.partialorder %v1150, 0.0
    %v1153 = vmul.f32 %v1149, 0.2
    %v1154 = vmul.f32 %v1150, 0.2
    %v1155 = vsel %vm1151, %v1149, %v1153
    %v1156 = vsel %vm1152, %v1150, %v1154
    %v1157 = vstv %s1136
    %v1158 = vmul.f32 %v1157, %v1155
    %v1159 = vmul.f32 %v1157, %v1156
    %v1160 = vadd.f32 %v1134, %v1158
    %v1161 = vadd.f32 %v1135, %v1159
    %s1162 = sld [smem:[#allocation2 + $0x1f]]
    %1163 = vset.pattern.permute.xlu0 31
    %1164 = vperm.xlu0 %1163, %v245
    %v1165 = vpop.permute.xlu0 %1164
    %1167 = vset.pattern.permute.xlu0 31
    %1168 = vperm.xlu0 %1167, %v250
    %v1169 = vpop.permute.xlu0 %1168
    %v1171 = vlaneseq
    %v1172 = vshrl.u32 %v1171, 7
    %v1173 = vsub.s32 7, %v1172
    %v1174 = vrot.slane %v272, %v1173
    %v1175 = vadd.f32 %v1165, %v1174
    %v1176 = vadd.f32 %v1169, %v1174
    %vm1177 = vcmp.gt.f32.partialorder %v1175, 0.0
    %vm1178 = vcmp.gt.f32.partialorder %v1176, 0.0
    %v1179 = vmul.f32 %v1175, 0.2
    %v1180 = vmul.f32 %v1176, 0.2
    %v1181 = vsel %vm1177, %v1175, %v1179
    %v1182 = vsel %vm1178, %v1176, %v1180
    %v1183 = vstv %s1162
    %v1184 = vmul.f32 %v1183, %v1181
    %v1185 = vmul.f32 %v1183, %v1182
    %v1186 = vadd.f32 %v1160, %v1184
    %v1187 = vadd.f32 %v1161, %v1185
    %v1188 = vsel %vm704, %v1186, -inf
    %1189 = vmax.xlane.f32.xlu0 %v1188
    %v1190 = vpop.xlane.xlu0 %1189
    %v1191 = vsel %vm704, %v1187, -inf
    %1192 = vmax.xlane.f32.xlu0 %v1191
    %v1193 = vpop.xlane.xlu0 %1192
    %v1194 = vsub.f32 %v1186, %v1190
    %v1195 = vsub.f32 %v1187, %v1193
    %v1196 = vmul.f32 %v1194, 1.442695
    %v1197 = vpow.pop %v1196
    %v1198 = vmul.f32 %v1195, 1.442695
    %v1199 = vpow.pop %v1198
    %v1200 = vsel %vm704, %v1197, 0.0
    %1201 = vadd.xlane.f32.xlu0 %v1200
    %v1202 = vpop.xlane.xlu0 %1201
    %v1203 = vsel %vm704, %v1199, 0.0
    %1204 = vadd.xlane.f32.xlu0 %v1203
    %v1205 = vpop.xlane.xlu0 %1204
    %v1206 = vpack.c.bf16 %v1199, %v1197
    %1208 = vrot.lane.b32.xlu0 %v285, 112
    %v1209 = vpop.permute.xlu0 %1208
    %v1212 = vsel %vm704, %v1206, 0
    %1214 = vmatprep.subr.bf16.mxu0 0
    %1215 = vmatpush1.bf16.msra.mxu0 0
    %1216 = vmatprep.subr.bf16.mxu0 0
    %1217 = vmatpush1.bf16.msra.mxu0 0
    %1218 = vmatprep.subr.bf16.mxu0 0
    %1219 = vmatpush1.bf16.msra.mxu0 0
    %1220 = vmatprep.subr.bf16.mxu0 0
    %1221 = vmatpush1.bf16.msra.mxu0 0
    %1222 = vmatprep.subr.bf16.mxu0 0
    %1223 = vmatpush1.bf16.msra.mxu0 0
    %1224 = vmatprep.subr.bf16.mxu0 0
    %1225 = vmatpush1.bf16.msra.mxu0 0
    %1226 = vmatprep.subr.bf16.mxu0 0
    %1227 = vmatpush1.bf16.msra.mxu0 0
    %1228 = vmatprep.subr.bf16.mxu0 0
    %1229 = vmatpush1.bf16.msra.mxu0 %v1209
    %1230 = vmatprep.subr.bf16.mxu0 0
    %1231 = vmatpush2.bf16.msra.mxu0 0
    %1232 = vmatprep.subr.bf16.mxu0 0
    %1233 = vmatpush2.bf16.msra.mxu0 0
    %1234 = vmatprep.subr.bf16.mxu0 0
    %1235 = vmatpush2.bf16.msra.mxu0 0
    %1236 = vmatprep.subr.bf16.mxu0 0
    %1237 = vmatpush2.bf16.msra.mxu0 0
    %1238 = vmatprep.subr.bf16.mxu0 0
    %1239 = vmatpush2.bf16.msra.mxu0 0
    %1240 = vmatprep.subr.bf16.mxu0 0
    %1241 = vmatpush2.bf16.msra.mxu0 0
    %1242 = vmatprep.subr.bf16.mxu0 0
    %1243 = vmatpush2.bf16.msra.mxu0 0
    %1244 = vmatprep.subr.bf16.mxu0 0
    %1245 = vmatpush2.bf16.msra.mxu0 0
    %1246 = vmatprep.mubr.bf16.mxu0 0
    %1247 = vmatmul.mubr.bf16.gmra.mxu0 %v1212
    %v1248 = vpop.f32.mrf.mxu0
    %v1249 = vadd.f32 0.0, %v1248
    %v1250 = vpop.f32.mrf.mxu0
    %v1251 = vpop.f32.mrf.mxu0
    %v1252 = vadd.f32 0.0, %v1251
    %v1253 = vpop.f32.mrf.mxu0
    %1254 = vdwg.mxu0
    %v1255 = vrcp.pop %v1202
    %v1256 = vmul.f32 %v1249, %v1255
    %v1257 = vrcp.pop %v1205
    %v1258 = vmul.f32 %v1252, %v1257
    %s1259 = sld [smem:[#allocation2 + $0x20]]
    %1260 = vset.pattern.permute.xlu0 32
    %1261 = vperm.xlu0 %1260, %v245
    %v1262 = vpop.permute.xlu0 %1261
    %1264 = vset.pattern.permute.xlu0 32
    %1265 = vperm.xlu0 %1264, %v250
    %v1266 = vpop.permute.xlu0 %1265
    %v1268 = vlaneseq
    %v1269 = vshrl.u32 %v1268, 7
    %v1270 = vsub.s32 0, %v1269
    %v1271 = vrot.slane %v273, %v1270
    %v1272 = vadd.f32 %v1262, %v1271
    %v1273 = vadd.f32 %v1266, %v1271
    %vm1274 = vcmp.gt.f32.partialorder %v1272, 0.0
    %vm1275 = vcmp.gt.f32.partialorder %v1273, 0.0
    %v1276 = vmul.f32 %v1272, 0.2
    %v1277 = vmul.f32 %v1273, 0.2
    %v1278 = vsel %vm1274, %v1272, %v1276
    %v1279 = vsel %vm1275, %v1273, %v1277
    %v1280 = vstv %s1259
    %v1281 = vmul.f32 %v1280, %v1278
    %v1282 = vmul.f32 %v1280, %v1279
    %v1283 = vadd.f32 %v76, %v1281
    %v1284 = vadd.f32 %v77, %v1282
    %s1285 = sld [smem:[#allocation2 + $0x21]]
    %1286 = vset.pattern.permute.xlu0 33
    %1287 = vperm.xlu0 %1286, %v245
    %v1288 = vpop.permute.xlu0 %1287
    %1290 = vset.pattern.permute.xlu0 33
    %1291 = vperm.xlu0 %1290, %v250
    %v1292 = vpop.permute.xlu0 %1291
    %v1294 = vlaneseq
    %v1295 = vshrl.u32 %v1294, 7
    %v1296 = vsub.s32 1, %v1295
    %v1297 = vrot.slane %v273, %v1296
    %v1298 = vadd.f32 %v1288, %v1297
    %v1299 = vadd.f32 %v1292, %v1297
    %vm1300 = vcmp.gt.f32.partialorder %v1298, 0.0
    %vm1301 = vcmp.gt.f32.partialorder %v1299, 0.0
    %v1302 = vmul.f32 %v1298, 0.2
    %v1303 = vmul.f32 %v1299, 0.2
    %v1304 = vsel %vm1300, %v1298, %v1302
    %v1305 = vsel %vm1301, %v1299, %v1303
    %v1306 = vstv %s1285
    %v1307 = vmul.f32 %v1306, %v1304
    %v1308 = vmul.f32 %v1306, %v1305
    %v1309 = vadd.f32 %v1283, %v1307
    %v1310 = vadd.f32 %v1284, %v1308
    %s1311 = sld [smem:[#allocation2 + $0x22]]
    %1312 = vset.pattern.permute.xlu0 34
    %1313 = vperm.xlu0 %1312, %v245
    %v1314 = vpop.permute.xlu0 %1313
    %1316 = vset.pattern.permute.xlu0 34
    %1317 = vperm.xlu0 %1316, %v250
    %v1318 = vpop.permute.xlu0 %1317
    %v1320 = vlaneseq
    %v1321 = vshrl.u32 %v1320, 7
    %v1322 = vsub.s32 2, %v1321
    %v1323 = vrot.slane %v273, %v1322
    %v1324 = vadd.f32 %v1314, %v1323
    %v1325 = vadd.f32 %v1318, %v1323
    %vm1326 = vcmp.gt.f32.partialorder %v1324, 0.0
    %vm1327 = vcmp.gt.f32.partialorder %v1325, 0.0
    %v1328 = vmul.f32 %v1324, 0.2
    %v1329 = vmul.f32 %v1325, 0.2
    %v1330 = vsel %vm1326, %v1324, %v1328
    %v1331 = vsel %vm1327, %v1325, %v1329
    %v1332 = vstv %s1311
    %v1333 = vmul.f32 %v1332, %v1330
    %v1334 = vmul.f32 %v1332, %v1331
    %v1335 = vadd.f32 %v1309, %v1333
    %v1336 = vadd.f32 %v1310, %v1334
    %s1337 = sld [smem:[#allocation2 + $0x23]]
    %1338 = vset.pattern.permute.xlu0 35
    %1339 = vperm.xlu0 %1338, %v245
    %v1340 = vpop.permute.xlu0 %1339
    %1342 = vset.pattern.permute.xlu0 35
    %1343 = vperm.xlu0 %1342, %v250
    %v1344 = vpop.permute.xlu0 %1343
    %v1346 = vlaneseq
    %v1347 = vshrl.u32 %v1346, 7
    %v1348 = vsub.s32 3, %v1347
    %v1349 = vrot.slane %v273, %v1348
    %v1350 = vadd.f32 %v1340, %v1349
    %v1351 = vadd.f32 %v1344, %v1349
    %vm1352 = vcmp.gt.f32.partialorder %v1350, 0.0
    %vm1353 = vcmp.gt.f32.partialorder %v1351, 0.0
    %v1354 = vmul.f32 %v1350, 0.2
    %v1355 = vmul.f32 %v1351, 0.2
    %v1356 = vsel %vm1352, %v1350, %v1354
    %v1357 = vsel %vm1353, %v1351, %v1355
    %v1358 = vstv %s1337
    %v1359 = vmul.f32 %v1358, %v1356
    %v1360 = vmul.f32 %v1358, %v1357
    %v1361 = vadd.f32 %v1335, %v1359
    %v1362 = vadd.f32 %v1336, %v1360
    %s1363 = sld [smem:[#allocation2 + $0x24]]
    %1364 = vset.pattern.permute.xlu0 36
    %1365 = vperm.xlu0 %1364, %v245
    %v1366 = vpop.permute.xlu0 %1365
    %1368 = vset.pattern.permute.xlu0 36
    %1369 = vperm.xlu0 %1368, %v250
    %v1370 = vpop.permute.xlu0 %1369
    %v1372 = vlaneseq
    %v1373 = vshrl.u32 %v1372, 7
    %v1374 = vsub.s32 4, %v1373
    %v1375 = vrot.slane %v273, %v1374
    %v1376 = vadd.f32 %v1366, %v1375
    %v1377 = vadd.f32 %v1370, %v1375
    %vm1378 = vcmp.gt.f32.partialorder %v1376, 0.0
    %vm1379 = vcmp.gt.f32.partialorder %v1377, 0.0
    %v1380 = vmul.f32 %v1376, 0.2
    %v1381 = vmul.f32 %v1377, 0.2
    %v1382 = vsel %vm1378, %v1376, %v1380
    %v1383 = vsel %vm1379, %v1377, %v1381
    %v1384 = vstv %s1363
    %v1385 = vmul.f32 %v1384, %v1382
    %v1386 = vmul.f32 %v1384, %v1383
    %v1387 = vadd.f32 %v1361, %v1385
    %v1388 = vadd.f32 %v1362, %v1386
    %s1389 = sld [smem:[#allocation2 + $0x25]]
    %1390 = vset.pattern.permute.xlu0 37
    %1391 = vperm.xlu0 %1390, %v245
    %v1392 = vpop.permute.xlu0 %1391
    %1394 = vset.pattern.permute.xlu0 37
    %1395 = vperm.xlu0 %1394, %v250
    %v1396 = vpop.permute.xlu0 %1395
    %v1398 = vlaneseq
    %v1399 = vshrl.u32 %v1398, 7
    %v1400 = vsub.s32 5, %v1399
    %v1401 = vrot.slane %v273, %v1400
    %v1402 = vadd.f32 %v1392, %v1401
    %v1403 = vadd.f32 %v1396, %v1401
    %vm1404 = vcmp.gt.f32.partialorder %v1402, 0.0
    %vm1405 = vcmp.gt.f32.partialorder %v1403, 0.0
    %v1406 = vmul.f32 %v1402, 0.2
    %v1407 = vmul.f32 %v1403, 0.2
    %v1408 = vsel %vm1404, %v1402, %v1406
    %v1409 = vsel %vm1405, %v1403, %v1407
    %v1410 = vstv %s1389
    %v1411 = vmul.f32 %v1410, %v1408
    %v1412 = vmul.f32 %v1410, %v1409
    %v1413 = vadd.f32 %v1387, %v1411
    %v1414 = vadd.f32 %v1388, %v1412
    %s1415 = sld [smem:[#allocation2 + $0x26]]
    %1416 = vset.pattern.permute.xlu0 38
    %1417 = vperm.xlu0 %1416, %v245
    %v1418 = vpop.permute.xlu0 %1417
    %1420 = vset.pattern.permute.xlu0 38
    %1421 = vperm.xlu0 %1420, %v250
    %v1422 = vpop.permute.xlu0 %1421
    %v1424 = vlaneseq
    %v1425 = vshrl.u32 %v1424, 7
    %v1426 = vsub.s32 6, %v1425
    %v1427 = vrot.slane %v273, %v1426
    %v1428 = vadd.f32 %v1418, %v1427
    %v1429 = vadd.f32 %v1422, %v1427
    %vm1430 = vcmp.gt.f32.partialorder %v1428, 0.0
    %vm1431 = vcmp.gt.f32.partialorder %v1429, 0.0
    %v1432 = vmul.f32 %v1428, 0.2
    %v1433 = vmul.f32 %v1429, 0.2
    %v1434 = vsel %vm1430, %v1428, %v1432
    %v1435 = vsel %vm1431, %v1429, %v1433
    %v1436 = vstv %s1415
    %v1437 = vmul.f32 %v1436, %v1434
    %v1438 = vmul.f32 %v1436, %v1435
    %v1439 = vadd.f32 %v1413, %v1437
    %v1440 = vadd.f32 %v1414, %v1438
    %s1441 = sld [smem:[#allocation2 + $0x27]]
    %1442 = vset.pattern.permute.xlu0 39
    %1443 = vperm.xlu0 %1442, %v245
    %v1444 = vpop.permute.xlu0 %1443
    %1446 = vset.pattern.permute.xlu0 39
    %1447 = vperm.xlu0 %1446, %v250
    %v1448 = vpop.permute.xlu0 %1447
    %v1450 = vlaneseq
    %v1451 = vshrl.u32 %v1450, 7
    %v1452 = vsub.s32 7, %v1451
    %v1453 = vrot.slane %v273, %v1452
    %v1454 = vadd.f32 %v1444, %v1453
    %v1455 = vadd.f32 %v1448, %v1453
    %vm1456 = vcmp.gt.f32.partialorder %v1454, 0.0
    %vm1457 = vcmp.gt.f32.partialorder %v1455, 0.0
    %v1458 = vmul.f32 %v1454, 0.2
    %v1459 = vmul.f32 %v1455, 0.2
    %v1460 = vsel %vm1456, %v1454, %v1458
    %v1461 = vsel %vm1457, %v1455, %v1459
    %v1462 = vstv %s1441
    %v1463 = vmul.f32 %v1462, %v1460
    %v1464 = vmul.f32 %v1462, %v1461
    %v1465 = vadd.f32 %v1439, %v1463
    %v1466 = vadd.f32 %v1440, %v1464
    %s1467 = sld [smem:[#allocation2 + $0x28]]
    %1468 = vset.pattern.permute.xlu0 40
    %1469 = vperm.xlu0 %1468, %v245
    %v1470 = vpop.permute.xlu0 %1469
    %1472 = vset.pattern.permute.xlu0 40
    %1473 = vperm.xlu0 %1472, %v250
    %v1474 = vpop.permute.xlu0 %1473
    %v1476 = vlaneseq
    %v1477 = vshrl.u32 %v1476, 7
    %v1478 = vsub.s32 0, %v1477
    %v1479 = vrot.slane %v274, %v1478
    %v1480 = vadd.f32 %v1470, %v1479
    %v1481 = vadd.f32 %v1474, %v1479
    %vm1482 = vcmp.gt.f32.partialorder %v1480, 0.0
    %vm1483 = vcmp.gt.f32.partialorder %v1481, 0.0
    %v1484 = vmul.f32 %v1480, 0.2
    %v1485 = vmul.f32 %v1481, 0.2
    %v1486 = vsel %vm1482, %v1480, %v1484
    %v1487 = vsel %vm1483, %v1481, %v1485
    %v1488 = vstv %s1467
    %v1489 = vmul.f32 %v1488, %v1486
    %v1490 = vmul.f32 %v1488, %v1487
    %v1491 = vadd.f32 %v1465, %v1489
    %v1492 = vadd.f32 %v1466, %v1490
    %s1493 = sld [smem:[#allocation2 + $0x29]]
    %1494 = vset.pattern.permute.xlu0 41
    %1495 = vperm.xlu0 %1494, %v245
    %v1496 = vpop.permute.xlu0 %1495
    %1498 = vset.pattern.permute.xlu0 41
    %1499 = vperm.xlu0 %1498, %v250
    %v1500 = vpop.permute.xlu0 %1499
    %v1502 = vlaneseq
    %v1503 = vshrl.u32 %v1502, 7
    %v1504 = vsub.s32 1, %v1503
    %v1505 = vrot.slane %v274, %v1504
    %v1506 = vadd.f32 %v1496, %v1505
    %v1507 = vadd.f32 %v1500, %v1505
    %vm1508 = vcmp.gt.f32.partialorder %v1506, 0.0
    %vm1509 = vcmp.gt.f32.partialorder %v1507, 0.0
    %v1510 = vmul.f32 %v1506, 0.2
    %v1511 = vmul.f32 %v1507, 0.2
    %v1512 = vsel %vm1508, %v1506, %v1510
    %v1513 = vsel %vm1509, %v1507, %v1511
    %v1514 = vstv %s1493
    %v1515 = vmul.f32 %v1514, %v1512
    %v1516 = vmul.f32 %v1514, %v1513
    %v1517 = vadd.f32 %v1491, %v1515
    %v1518 = vadd.f32 %v1492, %v1516
    %s1519 = sld [smem:[#allocation2 + $0x2a]]
    %1520 = vset.pattern.permute.xlu0 42
    %1521 = vperm.xlu0 %1520, %v245
    %v1522 = vpop.permute.xlu0 %1521
    %1524 = vset.pattern.permute.xlu0 42
    %1525 = vperm.xlu0 %1524, %v250
    %v1526 = vpop.permute.xlu0 %1525
    %v1528 = vlaneseq
    %v1529 = vshrl.u32 %v1528, 7
    %v1530 = vsub.s32 2, %v1529
    %v1531 = vrot.slane %v274, %v1530
    %v1532 = vadd.f32 %v1522, %v1531
    %v1533 = vadd.f32 %v1526, %v1531
    %vm1534 = vcmp.gt.f32.partialorder %v1532, 0.0
    %vm1535 = vcmp.gt.f32.partialorder %v1533, 0.0
    %v1536 = vmul.f32 %v1532, 0.2
    %v1537 = vmul.f32 %v1533, 0.2
    %v1538 = vsel %vm1534, %v1532, %v1536
    %v1539 = vsel %vm1535, %v1533, %v1537
    %v1540 = vstv %s1519
    %v1541 = vmul.f32 %v1540, %v1538
    %v1542 = vmul.f32 %v1540, %v1539
    %v1543 = vadd.f32 %v1517, %v1541
    %v1544 = vadd.f32 %v1518, %v1542
    %s1545 = sld [smem:[#allocation2 + $0x2b]]
    %1546 = vset.pattern.permute.xlu0 43
    %1547 = vperm.xlu0 %1546, %v245
    %v1548 = vpop.permute.xlu0 %1547
    %1550 = vset.pattern.permute.xlu0 43
    %1551 = vperm.xlu0 %1550, %v250
    %v1552 = vpop.permute.xlu0 %1551
    %v1554 = vlaneseq
    %v1555 = vshrl.u32 %v1554, 7
    %v1556 = vsub.s32 3, %v1555
    %v1557 = vrot.slane %v274, %v1556
    %v1558 = vadd.f32 %v1548, %v1557
    %v1559 = vadd.f32 %v1552, %v1557
    %vm1560 = vcmp.gt.f32.partialorder %v1558, 0.0
    %vm1561 = vcmp.gt.f32.partialorder %v1559, 0.0
    %v1562 = vmul.f32 %v1558, 0.2
    %v1563 = vmul.f32 %v1559, 0.2
    %v1564 = vsel %vm1560, %v1558, %v1562
    %v1565 = vsel %vm1561, %v1559, %v1563
    %v1566 = vstv %s1545
    %v1567 = vmul.f32 %v1566, %v1564
    %v1568 = vmul.f32 %v1566, %v1565
    %v1569 = vadd.f32 %v1543, %v1567
    %v1570 = vadd.f32 %v1544, %v1568
    %s1571 = sld [smem:[#allocation2 + $0x2c]]
    %1572 = vset.pattern.permute.xlu0 44
    %1573 = vperm.xlu0 %1572, %v245
    %v1574 = vpop.permute.xlu0 %1573
    %1576 = vset.pattern.permute.xlu0 44
    %1577 = vperm.xlu0 %1576, %v250
    %v1578 = vpop.permute.xlu0 %1577
    %v1580 = vlaneseq
    %v1581 = vshrl.u32 %v1580, 7
    %v1582 = vsub.s32 4, %v1581
    %v1583 = vrot.slane %v274, %v1582
    %v1584 = vadd.f32 %v1574, %v1583
    %v1585 = vadd.f32 %v1578, %v1583
    %vm1586 = vcmp.gt.f32.partialorder %v1584, 0.0
    %vm1587 = vcmp.gt.f32.partialorder %v1585, 0.0
    %v1588 = vmul.f32 %v1584, 0.2
    %v1589 = vmul.f32 %v1585, 0.2
    %v1590 = vsel %vm1586, %v1584, %v1588
    %v1591 = vsel %vm1587, %v1585, %v1589
    %v1592 = vstv %s1571
    %v1593 = vmul.f32 %v1592, %v1590
    %v1594 = vmul.f32 %v1592, %v1591
    %v1595 = vadd.f32 %v1569, %v1593
    %v1596 = vadd.f32 %v1570, %v1594
    %s1597 = sld [smem:[#allocation2 + $0x2d]]
    %1598 = vset.pattern.permute.xlu0 45
    %1599 = vperm.xlu0 %1598, %v245
    %v1600 = vpop.permute.xlu0 %1599
    %1602 = vset.pattern.permute.xlu0 45
    %1603 = vperm.xlu0 %1602, %v250
    %v1604 = vpop.permute.xlu0 %1603
    %v1606 = vlaneseq
    %v1607 = vshrl.u32 %v1606, 7
    %v1608 = vsub.s32 5, %v1607
    %v1609 = vrot.slane %v274, %v1608
    %v1610 = vadd.f32 %v1600, %v1609
    %v1611 = vadd.f32 %v1604, %v1609
    %vm1612 = vcmp.gt.f32.partialorder %v1610, 0.0
    %vm1613 = vcmp.gt.f32.partialorder %v1611, 0.0
    %v1614 = vmul.f32 %v1610, 0.2
    %v1615 = vmul.f32 %v1611, 0.2
    %v1616 = vsel %vm1612, %v1610, %v1614
    %v1617 = vsel %vm1613, %v1611, %v1615
    %v1618 = vstv %s1597
    %v1619 = vmul.f32 %v1618, %v1616
    %v1620 = vmul.f32 %v1618, %v1617
    %v1621 = vadd.f32 %v1595, %v1619
    %v1622 = vadd.f32 %v1596, %v1620
    %s1623 = sld [smem:[#allocation2 + $0x2e]]
    %1624 = vset.pattern.permute.xlu0 46
    %1625 = vperm.xlu0 %1624, %v245
    %v1626 = vpop.permute.xlu0 %1625
    %1628 = vset.pattern.permute.xlu0 46
    %1629 = vperm.xlu0 %1628, %v250
    %v1630 = vpop.permute.xlu0 %1629
    %v1632 = vlaneseq
    %v1633 = vshrl.u32 %v1632, 7
    %v1634 = vsub.s32 6, %v1633
    %v1635 = vrot.slane %v274, %v1634
    %v1636 = vadd.f32 %v1626, %v1635
    %v1637 = vadd.f32 %v1630, %v1635
    %vm1638 = vcmp.gt.f32.partialorder %v1636, 0.0
    %vm1639 = vcmp.gt.f32.partialorder %v1637, 0.0
    %v1640 = vmul.f32 %v1636, 0.2
    %v1641 = vmul.f32 %v1637, 0.2
    %v1642 = vsel %vm1638, %v1636, %v1640
    %v1643 = vsel %vm1639, %v1637, %v1641
    %v1644 = vstv %s1623
    %v1645 = vmul.f32 %v1644, %v1642
    %v1646 = vmul.f32 %v1644, %v1643
    %v1647 = vadd.f32 %v1621, %v1645
    %v1648 = vadd.f32 %v1622, %v1646
    %s1649 = sld [smem:[#allocation2 + $0x2f]]
    %1650 = vset.pattern.permute.xlu0 47
    %1651 = vperm.xlu0 %1650, %v245
    %v1652 = vpop.permute.xlu0 %1651
    %1654 = vset.pattern.permute.xlu0 47
    %1655 = vperm.xlu0 %1654, %v250
    %v1656 = vpop.permute.xlu0 %1655
    %v1658 = vlaneseq
    %v1659 = vshrl.u32 %v1658, 7
    %v1660 = vsub.s32 7, %v1659
    %v1661 = vrot.slane %v274, %v1660
    %v1662 = vadd.f32 %v1652, %v1661
    %v1663 = vadd.f32 %v1656, %v1661
    %vm1664 = vcmp.gt.f32.partialorder %v1662, 0.0
    %vm1665 = vcmp.gt.f32.partialorder %v1663, 0.0
    %v1666 = vmul.f32 %v1662, 0.2
    %v1667 = vmul.f32 %v1663, 0.2
    %v1668 = vsel %vm1664, %v1662, %v1666
    %v1669 = vsel %vm1665, %v1663, %v1667
    %v1670 = vstv %s1649
    %v1671 = vmul.f32 %v1670, %v1668
    %v1672 = vmul.f32 %v1670, %v1669
    %v1673 = vadd.f32 %v1647, %v1671
    %v1674 = vadd.f32 %v1648, %v1672
    %v1675 = vsel %vm704, %v1673, -inf
    %1676 = vmax.xlane.f32.xlu0 %v1675
    %v1677 = vpop.xlane.xlu0 %1676
    %v1678 = vsel %vm704, %v1674, -inf
    %1679 = vmax.xlane.f32.xlu0 %v1678
    %v1680 = vpop.xlane.xlu0 %1679
    %v1681 = vsub.f32 %v1673, %v1677
    %v1682 = vsub.f32 %v1674, %v1680
    %v1683 = vmul.f32 %v1681, 1.442695
    %v1684 = vpow.pop %v1683
    %v1685 = vmul.f32 %v1682, 1.442695
    %v1686 = vpow.pop %v1685
    %v1687 = vsel %vm704, %v1684, 0.0
    %1688 = vadd.xlane.f32.xlu0 %v1687
    %v1689 = vpop.xlane.xlu0 %1688
    %v1690 = vsel %vm704, %v1686, 0.0
    %1691 = vadd.xlane.f32.xlu0 %v1690
    %v1692 = vpop.xlane.xlu0 %1691
    %v1693 = vpack.c.bf16 %v1686, %v1684
    %1694 = vrot.lane.b32.xlu0 %v285, 96
    %v1695 = vpop.permute.xlu0 %1694
    %v1698 = vsel %vm704, %v1693, 0
    %1700 = vmatprep.subr.bf16.mxu0 0
    %1701 = vmatpush1.bf16.msra.mxu0 0
    %1702 = vmatprep.subr.bf16.mxu0 0
    %1703 = vmatpush1.bf16.msra.mxu0 0
    %1704 = vmatprep.subr.bf16.mxu0 0
    %1705 = vmatpush1.bf16.msra.mxu0 0
    %1706 = vmatprep.subr.bf16.mxu0 0
    %1707 = vmatpush1.bf16.msra.mxu0 0
    %1708 = vmatprep.subr.bf16.mxu0 0
    %1709 = vmatpush1.bf16.msra.mxu0 0
    %1710 = vmatprep.subr.bf16.mxu0 0
    %1711 = vmatpush1.bf16.msra.mxu0 0
    %1712 = vmatprep.subr.bf16.mxu0 0
    %1713 = vmatpush1.bf16.msra.mxu0 0
    %1714 = vmatprep.subr.bf16.mxu0 0
    %1715 = vmatpush1.bf16.msra.mxu0 %v1695
    %1716 = vmatprep.subr.bf16.mxu0 0
    %1717 = vmatpush2.bf16.msra.mxu0 0
    %1718 = vmatprep.subr.bf16.mxu0 0
    %1719 = vmatpush2.bf16.msra.mxu0 0
    %1720 = vmatprep.subr.bf16.mxu0 0
    %1721 = vmatpush2.bf16.msra.mxu0 0
    %1722 = vmatprep.subr.bf16.mxu0 0
    %1723 = vmatpush2.bf16.msra.mxu0 0
    %1724 = vmatprep.subr.bf16.mxu0 0
    %1725 = vmatpush2.bf16.msra.mxu0 0
    %1726 = vmatprep.subr.bf16.mxu0 0
    %1727 = vmatpush2.bf16.msra.mxu0 0
    %1728 = vmatprep.subr.bf16.mxu0 0
    %1729 = vmatpush2.bf16.msra.mxu0 0
    %1730 = vmatprep.subr.bf16.mxu0 0
    %1731 = vmatpush2.bf16.msra.mxu0 0
    %1732 = vmatprep.mubr.bf16.mxu0 0
    %1733 = vmatmul.mubr.bf16.gmra.mxu0 %v1698
    %v1734 = vpop.f32.mrf.mxu0
    %v1735 = vadd.f32 0.0, %v1734
    %v1736 = vpop.f32.mrf.mxu0
    %v1737 = vpop.f32.mrf.mxu0
    %v1738 = vadd.f32 0.0, %v1737
    %v1739 = vpop.f32.mrf.mxu0
    %1740 = vdwg.mxu0
    %v1741 = vrcp.pop %v1689
    %v1742 = vmul.f32 %v1735, %v1741
    %v1743 = vrcp.pop %v1692
    %v1744 = vmul.f32 %v1738, %v1743
    %s1745 = sld [smem:[#allocation2 + $0x30]]
    %1746 = vset.pattern.permute.xlu0 48
    %1747 = vperm.xlu0 %1746, %v245
    %v1748 = vpop.permute.xlu0 %1747
    %1750 = vset.pattern.permute.xlu0 48
    %1751 = vperm.xlu0 %1750, %v250
    %v1752 = vpop.permute.xlu0 %1751
    %v1754 = vlaneseq
    %v1755 = vshrl.u32 %v1754, 7
    %v1756 = vsub.s32 0, %v1755
    %v1757 = vrot.slane %v275, %v1756
    %v1758 = vadd.f32 %v1748, %v1757
    %v1759 = vadd.f32 %v1752, %v1757
    %vm1760 = vcmp.gt.f32.partialorder %v1758, 0.0
    %vm1761 = vcmp.gt.f32.partialorder %v1759, 0.0
    %v1762 = vmul.f32 %v1758, 0.2
    %v1763 = vmul.f32 %v1759, 0.2
    %v1764 = vsel %vm1760, %v1758, %v1762
    %v1765 = vsel %vm1761, %v1759, %v1763
    %v1766 = vstv %s1745
    %v1767 = vmul.f32 %v1766, %v1764
    %v1768 = vmul.f32 %v1766, %v1765
    %v1769 = vadd.f32 %v76, %v1767
    %v1770 = vadd.f32 %v77, %v1768
    %s1771 = sld [smem:[#allocation2 + $0x31]]
    %1772 = vset.pattern.permute.xlu0 49
    %1773 = vperm.xlu0 %1772, %v245
    %v1774 = vpop.permute.xlu0 %1773
    %1776 = vset.pattern.permute.xlu0 49
    %1777 = vperm.xlu0 %1776, %v250
    %v1778 = vpop.permute.xlu0 %1777
    %v1780 = vlaneseq
    %v1781 = vshrl.u32 %v1780, 7
    %v1782 = vsub.s32 1, %v1781
    %v1783 = vrot.slane %v275, %v1782
    %v1784 = vadd.f32 %v1774, %v1783
    %v1785 = vadd.f32 %v1778, %v1783
    %vm1786 = vcmp.gt.f32.partialorder %v1784, 0.0
    %vm1787 = vcmp.gt.f32.partialorder %v1785, 0.0
    %v1788 = vmul.f32 %v1784, 0.2
    %v1789 = vmul.f32 %v1785, 0.2
    %v1790 = vsel %vm1786, %v1784, %v1788
    %v1791 = vsel %vm1787, %v1785, %v1789
    %v1792 = vstv %s1771
    %v1793 = vmul.f32 %v1792, %v1790
    %v1794 = vmul.f32 %v1792, %v1791
    %v1795 = vadd.f32 %v1769, %v1793
    %v1796 = vadd.f32 %v1770, %v1794
    %s1797 = sld [smem:[#allocation2 + $0x32]]
    %1798 = vset.pattern.permute.xlu0 50
    %1799 = vperm.xlu0 %1798, %v245
    %v1800 = vpop.permute.xlu0 %1799
    %1802 = vset.pattern.permute.xlu0 50
    %1803 = vperm.xlu0 %1802, %v250
    %v1804 = vpop.permute.xlu0 %1803
    %v1806 = vlaneseq
    %v1807 = vshrl.u32 %v1806, 7
    %v1808 = vsub.s32 2, %v1807
    %v1809 = vrot.slane %v275, %v1808
    %v1810 = vadd.f32 %v1800, %v1809
    %v1811 = vadd.f32 %v1804, %v1809
    %vm1812 = vcmp.gt.f32.partialorder %v1810, 0.0
    %vm1813 = vcmp.gt.f32.partialorder %v1811, 0.0
    %v1814 = vmul.f32 %v1810, 0.2
    %v1815 = vmul.f32 %v1811, 0.2
    %v1816 = vsel %vm1812, %v1810, %v1814
    %v1817 = vsel %vm1813, %v1811, %v1815
    %v1818 = vstv %s1797
    %v1819 = vmul.f32 %v1818, %v1816
    %v1820 = vmul.f32 %v1818, %v1817
    %v1821 = vadd.f32 %v1795, %v1819
    %v1822 = vadd.f32 %v1796, %v1820
    %s1823 = sld [smem:[#allocation2 + $0x33]]
    %1824 = vset.pattern.permute.xlu0 51
    %1825 = vperm.xlu0 %1824, %v245
    %v1826 = vpop.permute.xlu0 %1825
    %1828 = vset.pattern.permute.xlu0 51
    %1829 = vperm.xlu0 %1828, %v250
    %v1830 = vpop.permute.xlu0 %1829
    %v1832 = vlaneseq
    %v1833 = vshrl.u32 %v1832, 7
    %v1834 = vsub.s32 3, %v1833
    %v1835 = vrot.slane %v275, %v1834
    %v1836 = vadd.f32 %v1826, %v1835
    %v1837 = vadd.f32 %v1830, %v1835
    %vm1838 = vcmp.gt.f32.partialorder %v1836, 0.0
    %vm1839 = vcmp.gt.f32.partialorder %v1837, 0.0
    %v1840 = vmul.f32 %v1836, 0.2
    %v1841 = vmul.f32 %v1837, 0.2
    %v1842 = vsel %vm1838, %v1836, %v1840
    %v1843 = vsel %vm1839, %v1837, %v1841
    %v1844 = vstv %s1823
    %v1845 = vmul.f32 %v1844, %v1842
    %v1846 = vmul.f32 %v1844, %v1843
    %v1847 = vadd.f32 %v1821, %v1845
    %v1848 = vadd.f32 %v1822, %v1846
    %s1849 = sld [smem:[#allocation2 + $0x34]]
    %1850 = vset.pattern.permute.xlu0 52
    %1851 = vperm.xlu0 %1850, %v245
    %v1852 = vpop.permute.xlu0 %1851
    %1854 = vset.pattern.permute.xlu0 52
    %1855 = vperm.xlu0 %1854, %v250
    %v1856 = vpop.permute.xlu0 %1855
    %v1858 = vlaneseq
    %v1859 = vshrl.u32 %v1858, 7
    %v1860 = vsub.s32 4, %v1859
    %v1861 = vrot.slane %v275, %v1860
    %v1862 = vadd.f32 %v1852, %v1861
    %v1863 = vadd.f32 %v1856, %v1861
    %vm1864 = vcmp.gt.f32.partialorder %v1862, 0.0
    %vm1865 = vcmp.gt.f32.partialorder %v1863, 0.0
    %v1866 = vmul.f32 %v1862, 0.2
    %v1867 = vmul.f32 %v1863, 0.2
    %v1868 = vsel %vm1864, %v1862, %v1866
    %v1869 = vsel %vm1865, %v1863, %v1867
    %v1870 = vstv %s1849
    %v1871 = vmul.f32 %v1870, %v1868
    %v1872 = vmul.f32 %v1870, %v1869
    %v1873 = vadd.f32 %v1847, %v1871
    %v1874 = vadd.f32 %v1848, %v1872
    %s1875 = sld [smem:[#allocation2 + $0x35]]
    %1876 = vset.pattern.permute.xlu0 53
    %1877 = vperm.xlu0 %1876, %v245
    %v1878 = vpop.permute.xlu0 %1877
    %1880 = vset.pattern.permute.xlu0 53
    %1881 = vperm.xlu0 %1880, %v250
    %v1882 = vpop.permute.xlu0 %1881
    %v1884 = vlaneseq
    %v1885 = vshrl.u32 %v1884, 7
    %v1886 = vsub.s32 5, %v1885
    %v1887 = vrot.slane %v275, %v1886
    %v1888 = vadd.f32 %v1878, %v1887
    %v1889 = vadd.f32 %v1882, %v1887
    %vm1890 = vcmp.gt.f32.partialorder %v1888, 0.0
    %vm1891 = vcmp.gt.f32.partialorder %v1889, 0.0
    %v1892 = vmul.f32 %v1888, 0.2
    %v1893 = vmul.f32 %v1889, 0.2
    %v1894 = vsel %vm1890, %v1888, %v1892
    %v1895 = vsel %vm1891, %v1889, %v1893
    %v1896 = vstv %s1875
    %v1897 = vmul.f32 %v1896, %v1894
    %v1898 = vmul.f32 %v1896, %v1895
    %v1899 = vadd.f32 %v1873, %v1897
    %v1900 = vadd.f32 %v1874, %v1898
    %s1901 = sld [smem:[#allocation2 + $0x36]]
    %1902 = vset.pattern.permute.xlu0 54
    %1903 = vperm.xlu0 %1902, %v245
    %v1904 = vpop.permute.xlu0 %1903
    %1906 = vset.pattern.permute.xlu0 54
    %1907 = vperm.xlu0 %1906, %v250
    %v1908 = vpop.permute.xlu0 %1907
    %v1910 = vlaneseq
    %v1911 = vshrl.u32 %v1910, 7
    %v1912 = vsub.s32 6, %v1911
    %v1913 = vrot.slane %v275, %v1912
    %v1914 = vadd.f32 %v1904, %v1913
    %v1915 = vadd.f32 %v1908, %v1913
    %vm1916 = vcmp.gt.f32.partialorder %v1914, 0.0
    %vm1917 = vcmp.gt.f32.partialorder %v1915, 0.0
    %v1918 = vmul.f32 %v1914, 0.2
    %v1919 = vmul.f32 %v1915, 0.2
    %v1920 = vsel %vm1916, %v1914, %v1918
    %v1921 = vsel %vm1917, %v1915, %v1919
    %v1922 = vstv %s1901
    %v1923 = vmul.f32 %v1922, %v1920
    %v1924 = vmul.f32 %v1922, %v1921
    %v1925 = vadd.f32 %v1899, %v1923
    %v1926 = vadd.f32 %v1900, %v1924
    %s1927 = sld [smem:[#allocation2 + $0x37]]
    %1928 = vset.pattern.permute.xlu0 55
    %1929 = vperm.xlu0 %1928, %v245
    %v1930 = vpop.permute.xlu0 %1929
    %1932 = vset.pattern.permute.xlu0 55
    %1933 = vperm.xlu0 %1932, %v250
    %v1934 = vpop.permute.xlu0 %1933
    %v1936 = vlaneseq
    %v1937 = vshrl.u32 %v1936, 7
    %v1938 = vsub.s32 7, %v1937
    %v1939 = vrot.slane %v275, %v1938
    %v1940 = vadd.f32 %v1930, %v1939
    %v1941 = vadd.f32 %v1934, %v1939
    %vm1942 = vcmp.gt.f32.partialorder %v1940, 0.0
    %vm1943 = vcmp.gt.f32.partialorder %v1941, 0.0
    %v1944 = vmul.f32 %v1940, 0.2
    %v1945 = vmul.f32 %v1941, 0.2
    %v1946 = vsel %vm1942, %v1940, %v1944
    %v1947 = vsel %vm1943, %v1941, %v1945
    %v1948 = vstv %s1927
    %v1949 = vmul.f32 %v1948, %v1946
    %v1950 = vmul.f32 %v1948, %v1947
    %v1951 = vadd.f32 %v1925, %v1949
    %v1952 = vadd.f32 %v1926, %v1950
    %s1953 = sld [smem:[#allocation2 + $0x38]]
    %1954 = vset.pattern.permute.xlu0 56
    %1955 = vperm.xlu0 %1954, %v245
    %v1956 = vpop.permute.xlu0 %1955
    %1958 = vset.pattern.permute.xlu0 56
    %1959 = vperm.xlu0 %1958, %v250
    %v1960 = vpop.permute.xlu0 %1959
    %v1962 = vlaneseq
    %v1963 = vshrl.u32 %v1962, 7
    %v1964 = vsub.s32 0, %v1963
    %v1965 = vrot.slane %v276, %v1964
    %v1966 = vadd.f32 %v1956, %v1965
    %v1967 = vadd.f32 %v1960, %v1965
    %vm1968 = vcmp.gt.f32.partialorder %v1966, 0.0
    %vm1969 = vcmp.gt.f32.partialorder %v1967, 0.0
    %v1970 = vmul.f32 %v1966, 0.2
    %v1971 = vmul.f32 %v1967, 0.2
    %v1972 = vsel %vm1968, %v1966, %v1970
    %v1973 = vsel %vm1969, %v1967, %v1971
    %v1974 = vstv %s1953
    %v1975 = vmul.f32 %v1974, %v1972
    %v1976 = vmul.f32 %v1974, %v1973
    %v1977 = vadd.f32 %v1951, %v1975
    %v1978 = vadd.f32 %v1952, %v1976
    %s1979 = sld [smem:[#allocation2 + $0x39]]
    %1980 = vset.pattern.permute.xlu0 57
    %1981 = vperm.xlu0 %1980, %v245
    %v1982 = vpop.permute.xlu0 %1981
    %1984 = vset.pattern.permute.xlu0 57
    %1985 = vperm.xlu0 %1984, %v250
    %v1986 = vpop.permute.xlu0 %1985
    %v1988 = vlaneseq
    %v1989 = vshrl.u32 %v1988, 7
    %v1990 = vsub.s32 1, %v1989
    %v1991 = vrot.slane %v276, %v1990
    %v1992 = vadd.f32 %v1982, %v1991
    %v1993 = vadd.f32 %v1986, %v1991
    %vm1994 = vcmp.gt.f32.partialorder %v1992, 0.0
    %vm1995 = vcmp.gt.f32.partialorder %v1993, 0.0
    %v1996 = vmul.f32 %v1992, 0.2
    %v1997 = vmul.f32 %v1993, 0.2
    %v1998 = vsel %vm1994, %v1992, %v1996
    %v1999 = vsel %vm1995, %v1993, %v1997
    %v2000 = vstv %s1979
    %v2001 = vmul.f32 %v2000, %v1998
    %v2002 = vmul.f32 %v2000, %v1999
    %v2003 = vadd.f32 %v1977, %v2001
    %v2004 = vadd.f32 %v1978, %v2002
    %s2005 = sld [smem:[#allocation2 + $0x3a]]
    %2006 = vset.pattern.permute.xlu0 58
    %2007 = vperm.xlu0 %2006, %v245
    %v2008 = vpop.permute.xlu0 %2007
    %2010 = vset.pattern.permute.xlu0 58
    %2011 = vperm.xlu0 %2010, %v250
    %v2012 = vpop.permute.xlu0 %2011
    %v2014 = vlaneseq
    %v2015 = vshrl.u32 %v2014, 7
    %v2016 = vsub.s32 2, %v2015
    %v2017 = vrot.slane %v276, %v2016
    %v2018 = vadd.f32 %v2008, %v2017
    %v2019 = vadd.f32 %v2012, %v2017
    %vm2020 = vcmp.gt.f32.partialorder %v2018, 0.0
    %vm2021 = vcmp.gt.f32.partialorder %v2019, 0.0
    %v2022 = vmul.f32 %v2018, 0.2
    %v2023 = vmul.f32 %v2019, 0.2
    %v2024 = vsel %vm2020, %v2018, %v2022
    %v2025 = vsel %vm2021, %v2019, %v2023
    %v2026 = vstv %s2005
    %v2027 = vmul.f32 %v2026, %v2024
    %v2028 = vmul.f32 %v2026, %v2025
    %v2029 = vadd.f32 %v2003, %v2027
    %v2030 = vadd.f32 %v2004, %v2028
    %s2031 = sld [smem:[#allocation2 + $0x3b]]
    %2032 = vset.pattern.permute.xlu0 59
    %2033 = vperm.xlu0 %2032, %v245
    %v2034 = vpop.permute.xlu0 %2033
    %2036 = vset.pattern.permute.xlu0 59
    %2037 = vperm.xlu0 %2036, %v250
    %v2038 = vpop.permute.xlu0 %2037
    %v2040 = vlaneseq
    %v2041 = vshrl.u32 %v2040, 7
    %v2042 = vsub.s32 3, %v2041
    %v2043 = vrot.slane %v276, %v2042
    %v2044 = vadd.f32 %v2034, %v2043
    %v2045 = vadd.f32 %v2038, %v2043
    %vm2046 = vcmp.gt.f32.partialorder %v2044, 0.0
    %vm2047 = vcmp.gt.f32.partialorder %v2045, 0.0
    %v2048 = vmul.f32 %v2044, 0.2
    %v2049 = vmul.f32 %v2045, 0.2
    %v2050 = vsel %vm2046, %v2044, %v2048
    %v2051 = vsel %vm2047, %v2045, %v2049
    %v2052 = vstv %s2031
    %v2053 = vmul.f32 %v2052, %v2050
    %v2054 = vmul.f32 %v2052, %v2051
    %v2055 = vadd.f32 %v2029, %v2053
    %v2056 = vadd.f32 %v2030, %v2054
    %s2057 = sld [smem:[#allocation2 + $0x3c]]
    %2058 = vset.pattern.permute.xlu0 60
    %2059 = vperm.xlu0 %2058, %v245
    %v2060 = vpop.permute.xlu0 %2059
    %2062 = vset.pattern.permute.xlu0 60
    %2063 = vperm.xlu0 %2062, %v250
    %v2064 = vpop.permute.xlu0 %2063
    %v2066 = vlaneseq
    %v2067 = vshrl.u32 %v2066, 7
    %v2068 = vsub.s32 4, %v2067
    %v2069 = vrot.slane %v276, %v2068
    %v2070 = vadd.f32 %v2060, %v2069
    %v2071 = vadd.f32 %v2064, %v2069
    %vm2072 = vcmp.gt.f32.partialorder %v2070, 0.0
    %vm2073 = vcmp.gt.f32.partialorder %v2071, 0.0
    %v2074 = vmul.f32 %v2070, 0.2
    %v2075 = vmul.f32 %v2071, 0.2
    %v2076 = vsel %vm2072, %v2070, %v2074
    %v2077 = vsel %vm2073, %v2071, %v2075
    %v2078 = vstv %s2057
    %v2079 = vmul.f32 %v2078, %v2076
    %v2080 = vmul.f32 %v2078, %v2077
    %v2081 = vadd.f32 %v2055, %v2079
    %v2082 = vadd.f32 %v2056, %v2080
    %s2083 = sld [smem:[#allocation2 + $0x3d]]
    %2084 = vset.pattern.permute.xlu0 61
    %2085 = vperm.xlu0 %2084, %v245
    %v2086 = vpop.permute.xlu0 %2085
    %2088 = vset.pattern.permute.xlu0 61
    %2089 = vperm.xlu0 %2088, %v250
    %v2090 = vpop.permute.xlu0 %2089
    %v2092 = vlaneseq
    %v2093 = vshrl.u32 %v2092, 7
    %v2094 = vsub.s32 5, %v2093
    %v2095 = vrot.slane %v276, %v2094
    %v2096 = vadd.f32 %v2086, %v2095
    %v2097 = vadd.f32 %v2090, %v2095
    %vm2098 = vcmp.gt.f32.partialorder %v2096, 0.0
    %vm2099 = vcmp.gt.f32.partialorder %v2097, 0.0
    %v2100 = vmul.f32 %v2096, 0.2
    %v2101 = vmul.f32 %v2097, 0.2
    %v2102 = vsel %vm2098, %v2096, %v2100
    %v2103 = vsel %vm2099, %v2097, %v2101
    %v2104 = vstv %s2083
    %v2105 = vmul.f32 %v2104, %v2102
    %v2106 = vmul.f32 %v2104, %v2103
    %v2107 = vadd.f32 %v2081, %v2105
    %v2108 = vadd.f32 %v2082, %v2106
    %s2109 = sld [smem:[#allocation2 + $0x3e]]
    %2110 = vset.pattern.permute.xlu0 62
    %2111 = vperm.xlu0 %2110, %v245
    %v2112 = vpop.permute.xlu0 %2111
    %2114 = vset.pattern.permute.xlu0 62
    %2115 = vperm.xlu0 %2114, %v250
    %v2116 = vpop.permute.xlu0 %2115
    %v2118 = vlaneseq
    %v2119 = vshrl.u32 %v2118, 7
    %v2120 = vsub.s32 6, %v2119
    %v2121 = vrot.slane %v276, %v2120
    %v2122 = vadd.f32 %v2112, %v2121
    %v2123 = vadd.f32 %v2116, %v2121
    %vm2124 = vcmp.gt.f32.partialorder %v2122, 0.0
    %vm2125 = vcmp.gt.f32.partialorder %v2123, 0.0
    %v2126 = vmul.f32 %v2122, 0.2
    %v2127 = vmul.f32 %v2123, 0.2
    %v2128 = vsel %vm2124, %v2122, %v2126
    %v2129 = vsel %vm2125, %v2123, %v2127
    %v2130 = vstv %s2109
    %v2131 = vmul.f32 %v2130, %v2128
    %v2132 = vmul.f32 %v2130, %v2129
    %v2133 = vadd.f32 %v2107, %v2131
    %v2134 = vadd.f32 %v2108, %v2132
    %s2135 = sld [smem:[#allocation2 + $0x3f]]
    %2136 = vset.pattern.permute.xlu0 63
    %2137 = vperm.xlu0 %2136, %v245
    %v2138 = vpop.permute.xlu0 %2137
    %2140 = vset.pattern.permute.xlu0 63
    %2141 = vperm.xlu0 %2140, %v250
    %v2142 = vpop.permute.xlu0 %2141
    %v2144 = vlaneseq
    %v2145 = vshrl.u32 %v2144, 7
    %v2146 = vsub.s32 7, %v2145
    %v2147 = vrot.slane %v276, %v2146
    %v2148 = vadd.f32 %v2138, %v2147
    %v2149 = vadd.f32 %v2142, %v2147
    %vm2150 = vcmp.gt.f32.partialorder %v2148, 0.0
    %vm2151 = vcmp.gt.f32.partialorder %v2149, 0.0
    %v2152 = vmul.f32 %v2148, 0.2
    %v2153 = vmul.f32 %v2149, 0.2
    %v2154 = vsel %vm2150, %v2148, %v2152
    %v2155 = vsel %vm2151, %v2149, %v2153
    %v2156 = vstv %s2135
    %v2157 = vmul.f32 %v2156, %v2154
    %v2158 = vmul.f32 %v2156, %v2155
    %v2159 = vadd.f32 %v2133, %v2157
    %v2160 = vadd.f32 %v2134, %v2158
    %v2161 = vsel %vm704, %v2159, -inf
    %2162 = vmax.xlane.f32.xlu0 %v2161
    %v2163 = vpop.xlane.xlu0 %2162
    %v2164 = vsel %vm704, %v2160, -inf
    %2165 = vmax.xlane.f32.xlu0 %v2164
    %v2166 = vpop.xlane.xlu0 %2165
    %v2167 = vsub.f32 %v2159, %v2163
    %v2168 = vsub.f32 %v2160, %v2166
    %v2169 = vmul.f32 %v2167, 1.442695
    %v2170 = vpow.pop %v2169
    %v2171 = vmul.f32 %v2168, 1.442695
    %v2172 = vpow.pop %v2171
    %v2173 = vsel %vm704, %v2170, 0.0
    %2174 = vadd.xlane.f32.xlu0 %v2173
    %v2175 = vpop.xlane.xlu0 %2174
    %v2176 = vsel %vm704, %v2172, 0.0
    %2177 = vadd.xlane.f32.xlu0 %v2176
    %v2178 = vpop.xlane.xlu0 %2177
    %v2179 = vpack.c.bf16 %v2172, %v2170
    %2180 = vrot.lane.b32.xlu0 %v285, 80
    %v2181 = vpop.permute.xlu0 %2180
    %v2184 = vsel %vm704, %v2179, 0
    %2186 = vmatprep.subr.bf16.mxu0 0
    %2187 = vmatpush1.bf16.msra.mxu0 0
    %2188 = vmatprep.subr.bf16.mxu0 0
    %2189 = vmatpush1.bf16.msra.mxu0 0
    %2190 = vmatprep.subr.bf16.mxu0 0
    %2191 = vmatpush1.bf16.msra.mxu0 0
    %2192 = vmatprep.subr.bf16.mxu0 0
    %2193 = vmatpush1.bf16.msra.mxu0 0
    %2194 = vmatprep.subr.bf16.mxu0 0
    %2195 = vmatpush1.bf16.msra.mxu0 0
    %2196 = vmatprep.subr.bf16.mxu0 0
    %2197 = vmatpush1.bf16.msra.mxu0 0
    %2198 = vmatprep.subr.bf16.mxu0 0
    %2199 = vmatpush1.bf16.msra.mxu0 0
    %2200 = vmatprep.subr.bf16.mxu0 0
    %2201 = vmatpush1.bf16.msra.mxu0 %v2181
    %2202 = vmatprep.subr.bf16.mxu0 0
    %2203 = vmatpush2.bf16.msra.mxu0 0
    %2204 = vmatprep.subr.bf16.mxu0 0
    %2205 = vmatpush2.bf16.msra.mxu0 0
    %2206 = vmatprep.subr.bf16.mxu0 0
    %2207 = vmatpush2.bf16.msra.mxu0 0
    %2208 = vmatprep.subr.bf16.mxu0 0
    %2209 = vmatpush2.bf16.msra.mxu0 0
    %2210 = vmatprep.subr.bf16.mxu0 0
    %2211 = vmatpush2.bf16.msra.mxu0 0
    %2212 = vmatprep.subr.bf16.mxu0 0
    %2213 = vmatpush2.bf16.msra.mxu0 0
    %2214 = vmatprep.subr.bf16.mxu0 0
    %2215 = vmatpush2.bf16.msra.mxu0 0
    %2216 = vmatprep.subr.bf16.mxu0 0
    %2217 = vmatpush2.bf16.msra.mxu0 0
    %2218 = vmatprep.mubr.bf16.mxu0 0
    %2219 = vmatmul.mubr.bf16.gmra.mxu0 %v2184
    %v2220 = vpop.f32.mrf.mxu0
    %v2221 = vadd.f32 0.0, %v2220
    %v2222 = vpop.f32.mrf.mxu0
    %v2223 = vpop.f32.mrf.mxu0
    %v2224 = vadd.f32 0.0, %v2223
    %v2225 = vpop.f32.mrf.mxu0
    %2226 = vdwg.mxu0
    %v2227 = vrcp.pop %v2175
    %v2228 = vmul.f32 %v2221, %v2227
    %v2229 = vrcp.pop %v2178
    %v2230 = vmul.f32 %v2224, %v2229
    %2233 = vrot.lane.b32.xlu0 %v1256, 16
    %v2234 = vpop.permute.xlu0 %2233
    %2235 = vrot.lane.b32.xlu0 %v1258, 16
    %v2236 = vpop.permute.xlu0 %2235
    %2241 = vrot.lane.b32.xlu0 %v1742, 32
    %v2242 = vpop.permute.xlu0 %2241
    %2243 = vrot.lane.b32.xlu0 %v1744, 32
    %v2244 = vpop.permute.xlu0 %2243
    %2249 = vrot.lane.b32.xlu0 %v2228, 48
    %v2250 = vpop.permute.xlu0 %2249
    %2251 = vrot.lane.b32.xlu0 %v2230, 48
    %v2252 = vpop.permute.xlu0 %2251
    %v2255 = vsel %vm704, %v769, %v2234
    %v2256 = vsel %vm704, %v771, %v2236
    %vm2257 = vcmask 261120
    %v2258 = vsel %vm2257, %v2255, %v2242
    %v2259 = vsel %vm2257, %v2256, %v2244
    %vm2260 = vcmask 392192
    %v2261 = vsel %vm2260, %v2258, %v2250
    %v2262 = vsel %vm2260, %v2259, %v2252
    %v2263 = vld [vmem:[%s7] sm:$0xff]
    %v2264 = vld [vmem:[%s7 + $0x8] sm:$0xff]
    %v2265 = vld [vmem:[%s7 + $0x10] sm:$0xff]
    %v2266 = vld [vmem:[%s7 + $0x18] sm:$0xff]
    %v2267 = vld [vmem:[%s7 + $0x20] sm:$0xff]
    %v2268 = vld [vmem:[%s7 + $0x28] sm:$0xff]
    %v2269 = vld [vmem:[%s7 + $0x30] sm:$0xff]
    %v2270 = vld [vmem:[%s7 + $0x38] sm:$0xff]
    %v2271 = vld [vmem:[%s8] sm:$0x1]
    %v2273 = vlaneseq
    %v2274 = vshrl.u32 %v2273, 7
    %v2275 = vsub.s32 0, %v2274
    %v2276 = vrot.slane %v2271, %v2275
    %vm2278 = vcmask 523264
    %v2280 = vsel %vm2278, %v2261, 0
    %v2283 = vsel %vm2278, %v2262, 0
    %2285 = vmatprep.subr.mxu0 0.0
    %2286 = vmatpush1.msra.mxu0 0.0
    %2287 = vmatprep.subr.mxu0 0.0
    %2288 = vmatpush1.msra.mxu0 0.0
    %2289 = vmatprep.subr.mxu0 0.0
    %2290 = vmatpush1.msra.mxu0 0.0
    %2291 = vmatprep.subr.mxu0 0.0
    %2292 = vmatpush1.msra.mxu0 0.0
    %2293 = vmatprep.subr.mxu0 0.0
    %2294 = vmatpush1.msra.mxu0 0.0
    %2295 = vmatprep.subr.mxu0 0.0
    %2296 = vmatpush1.msra.mxu0 0.0
    %2297 = vmatprep.subr.mxu0 0.0
    %2298 = vmatpush1.msra.mxu0 0.0
    %2299 = vmatprep.subr.mxu0 0.0
    %2300 = vmatpush1.msra.mxu0 0.0
    %2301 = vmatprep.subr.mxu0 0.0
    %2302 = vmatpush1.msra.mxu0 %v2270
    %2303 = vmatprep.subr.mxu0 0.0
    %2304 = vmatpush1.msra.mxu0 %v2269
    %2305 = vmatprep.subr.mxu0 0.0
    %2306 = vmatpush1.msra.mxu0 %v2268
    %2307 = vmatprep.subr.mxu0 0.0
    %2308 = vmatpush1.msra.mxu0 %v2267
    %2309 = vmatprep.subr.mxu0 0.0
    %2310 = vmatpush1.msra.mxu0 %v2266
    %2311 = vmatprep.subr.mxu0 0.0
    %2312 = vmatpush1.msra.mxu0 %v2265
    %2313 = vmatprep.subr.mxu0 0.0
    %2314 = vmatpush1.msra.mxu0 %v2264
    %2315 = vmatprep.subr.mxu0 0.0
    %2316 = vmatpush1.msra.mxu0 %v2263
    %2317 = vmatprep.subr.mxu0 0.0
    %2318 = vmatpush2.msra.mxu0 0.0
    %2319 = vmatprep.subr.mxu0 0.0
    %2320 = vmatpush2.msra.mxu0 0.0
    %2321 = vmatprep.subr.mxu0 0.0
    %2322 = vmatpush2.msra.mxu0 0.0
    %2323 = vmatprep.subr.mxu0 0.0
    %2324 = vmatpush2.msra.mxu0 0.0
    %2325 = vmatprep.subr.mxu0 0.0
    %2326 = vmatpush2.msra.mxu0 0.0
    %2327 = vmatprep.subr.mxu0 0.0
    %2328 = vmatpush2.msra.mxu0 0.0
    %2329 = vmatprep.subr.mxu0 0.0
    %2330 = vmatpush2.msra.mxu0 0.0
    %2331 = vmatprep.subr.mxu0 0.0
    %2332 = vmatpush2.msra.mxu0 0.0
    %2333 = vmatprep.subr.mxu0 0.0
    %2334 = vmatpush2.msra.mxu0 0.0
    %2335 = vmatprep.subr.mxu0 0.0
    %2336 = vmatpush2.msra.mxu0 0.0
    %2337 = vmatprep.subr.mxu0 0.0
    %2338 = vmatpush2.msra.mxu0 0.0
    %2339 = vmatprep.subr.mxu0 0.0
    %2340 = vmatpush2.msra.mxu0 0.0
    %2341 = vmatprep.subr.mxu0 0.0
    %2342 = vmatpush2.msra.mxu0 0.0
    %2343 = vmatprep.subr.mxu0 0.0
    %2344 = vmatpush2.msra.mxu0 0.0
    %2345 = vmatprep.subr.mxu0 0.0
    %2346 = vmatpush2.msra.mxu0 0.0
    %2347 = vmatprep.subr.mxu0 0.0
    %2348 = vmatpush2.msra.mxu0 0.0
    %2349 = vmatprep.mubr.f32.mxu0 0.0
    %2350 = vmatmul.mubr.f32.gmra.mxu0 %v2280
    %v2351 = vpop.f32.mrf.mxu0
    %v2352 = vadd.f32 %v2276, %v2351
    %v2353 = vpop.f32.mrf.mxu0
    %2354 = vmatprep.mubr.f32.mxu0 0.0
    %2355 = vmatmul.mubr.f32.gmra.mxu0 %v2283
    %v2356 = vpop.f32.mrf.mxu0
    %v2357 = vadd.f32 %v2276, %v2356
    %v2358 = vpop.f32.mrf.mxu0
    %2359 = vdwg.mxu0
    %v2360 = vld [vmem:[%s9] sm:$0xff]
    %v2361 = vld [vmem:[%s9 + $0x8] sm:$0xff]
    %v2362 = vld [vmem:[%s9 + $0x10] sm:$0xff]
    %v2363 = vld [vmem:[%s9 + $0x18] sm:$0xff]
    %v2364 = vld [vmem:[%s9 + $0x20] sm:$0xff]
    %v2365 = vld [vmem:[%s9 + $0x28] sm:$0xff]
    %v2366 = vld [vmem:[%s9 + $0x30] sm:$0xff]
    %v2367 = vld [vmem:[%s9 + $0x38] sm:$0xff]
    %v2368 = vld [vmem:[%s10] sm:$0x1]
    %v2370 = vlaneseq
    %v2371 = vshrl.u32 %v2370, 7
    %v2372 = vsub.s32 0, %v2371
    %v2373 = vrot.slane %v2368, %v2372
    %2375 = vmatprep.subr.mxu0 0.0
    %2376 = vmatpush1.msra.mxu0 0.0
    %2377 = vmatprep.subr.mxu0 0.0
    %2378 = vmatpush1.msra.mxu0 0.0
    %2379 = vmatprep.subr.mxu0 0.0
    %2380 = vmatpush1.msra.mxu0 0.0
    %2381 = vmatprep.subr.mxu0 0.0
    %2382 = vmatpush1.msra.mxu0 0.0
    %2383 = vmatprep.subr.mxu0 0.0
    %2384 = vmatpush1.msra.mxu0 0.0
    %2385 = vmatprep.subr.mxu0 0.0
    %2386 = vmatpush1.msra.mxu0 0.0
    %2387 = vmatprep.subr.mxu0 0.0
    %2388 = vmatpush1.msra.mxu0 0.0
    %2389 = vmatprep.subr.mxu0 0.0
    %2390 = vmatpush1.msra.mxu0 0.0
    %2391 = vmatprep.subr.mxu0 0.0
    %2392 = vmatpush1.msra.mxu0 %v2367
    %2393 = vmatprep.subr.mxu0 0.0
    %2394 = vmatpush1.msra.mxu0 %v2366
    %2395 = vmatprep.subr.mxu0 0.0
    %2396 = vmatpush1.msra.mxu0 %v2365
    %2397 = vmatprep.subr.mxu0 0.0
    %2398 = vmatpush1.msra.mxu0 %v2364
    %2399 = vmatprep.subr.mxu0 0.0
    %2400 = vmatpush1.msra.mxu0 %v2363
    %2401 = vmatprep.subr.mxu0 0.0
    %2402 = vmatpush1.msra.mxu0 %v2362
    %2403 = vmatprep.subr.mxu0 0.0
    %2404 = vmatpush1.msra.mxu0 %v2361
    %2405 = vmatprep.subr.mxu0 0.0
    %2406 = vmatpush1.msra.mxu0 %v2360
    %2407 = vmatprep.subr.mxu0 0.0
    %2408 = vmatpush2.msra.mxu0 0.0
    %2409 = vmatprep.subr.mxu0 0.0
    %2410 = vmatpush2.msra.mxu0 0.0
    %2411 = vmatprep.subr.mxu0 0.0
    %2412 = vmatpush2.msra.mxu0 0.0
    %2413 = vmatprep.subr.mxu0 0.0
    %2414 = vmatpush2.msra.mxu0 0.0
    %2415 = vmatprep.subr.mxu0 0.0
    %2416 = vmatpush2.msra.mxu0 0.0
    %2417 = vmatprep.subr.mxu0 0.0
    %2418 = vmatpush2.msra.mxu0 0.0
    %2419 = vmatprep.subr.mxu0 0.0
    %2420 = vmatpush2.msra.mxu0 0.0
    %2421 = vmatprep.subr.mxu0 0.0
    %2422 = vmatpush2.msra.mxu0 0.0
    %2423 = vmatprep.subr.mxu0 0.0
    %2424 = vmatpush2.msra.mxu0 0.0
    %2425 = vmatprep.subr.mxu0 0.0
    %2426 = vmatpush2.msra.mxu0 0.0
    %2427 = vmatprep.subr.mxu0 0.0
    %2428 = vmatpush2.msra.mxu0 0.0
    %2429 = vmatprep.subr.mxu0 0.0
    %2430 = vmatpush2.msra.mxu0 0.0
    %2431 = vmatprep.subr.mxu0 0.0
    %2432 = vmatpush2.msra.mxu0 0.0
    %2433 = vmatprep.subr.mxu0 0.0
    %2434 = vmatpush2.msra.mxu0 0.0
    %2435 = vmatprep.subr.mxu0 0.0
    %2436 = vmatpush2.msra.mxu0 0.0
    %2437 = vmatprep.subr.mxu0 0.0
    %2438 = vmatpush2.msra.mxu0 0.0
    %2439 = vmatprep.mubr.f32.mxu0 0.0
    %2440 = vmatmul.mubr.f32.gmra.mxu0 %v2280
    %v2441 = vpop.f32.mrf.mxu0
    %v2442 = vadd.f32 %v2373, %v2441
    %v2443 = vpop.f32.mrf.mxu0
    %2444 = vmatprep.mubr.f32.mxu0 0.0
    %2445 = vmatmul.mubr.f32.gmra.mxu0 %v2283
    %v2446 = vpop.f32.mrf.mxu0
    %v2447 = vadd.f32 %v2373, %v2446
    %v2448 = vpop.f32.mrf.mxu0
    %2449 = vdwg.mxu0
    %2450 = vxpose.xlu0.b32.start [1/16] %v2352, 128
    %2451 = vxpose.xlu0.b32.cont [2/16] %v2357, 128
    %2452 = vxpose.xlu0.b32.cont [3/16] 0.0, 128
    %2453 = vxpose.xlu0.b32.cont [4/16] 0.0, 128
    %2454 = vxpose.xlu0.b32.cont [5/16] 0.0, 128
    %2455 = vxpose.xlu0.b32.cont [6/16] 0.0, 128
    %2456 = vxpose.xlu0.b32.cont [7/16] 0.0, 128
    %2457 = vxpose.xlu0.b32.cont [8/16] 0.0, 128
    %2458 = vxpose.xlu0.b32.cont [9/16] 0.0, 128
    %2459 = vxpose.xlu0.b32.cont [10/16] 0.0, 128
    %2460 = vxpose.xlu0.b32.cont [11/16] 0.0, 128
    %2461 = vxpose.xlu0.b32.cont [12/16] 0.0, 128
    %2462 = vxpose.xlu0.b32.cont [13/16] 0.0, 128
    %2463 = vxpose.xlu0.b32.cont [14/16] 0.0, 128
    %2464 = vxpose.xlu0.b32.cont [15/16] 0.0, 128
    %2465 = vxpose.xlu0.b32.end [16/16] 0.0, 128
    %v2466 = vpop.trf.xlu0
    %v2467 = vpop.trf.xlu0
    %v2468 = vpop.trf.xlu0
    %v2469 = vpop.trf.xlu0
    %v2470 = vpop.trf.xlu0
    %v2471 = vpop.trf.xlu0
    %v2472 = vpop.trf.xlu0
    %v2473 = vpop.trf.xlu0
    %v2474 = vpop.trf.xlu0
    %v2475 = vpop.trf.xlu0
    %v2476 = vpop.trf.xlu0
    %v2477 = vpop.trf.xlu0
    %v2478 = vpop.trf.xlu0
    %v2479 = vpop.trf.xlu0
    %v2480 = vpop.trf.xlu0
    %v2481 = vpop.trf.xlu0
    %v2482 = vpack.c.bf16 %v2357, %v2352
    %s2483 = sld [smem:[#allocation5]]
    %2485 = vset.pattern.permute.xlu0 0
    %2486 = vperm.xlu0 %2485, %v2442
    %v2487 = vpop.permute.xlu0 %2486
    %2490 = vset.pattern.permute.xlu0 0
    %2491 = vperm.xlu0 %2490, %v2447
    %v2492 = vpop.permute.xlu0 %2491
    %v2494 = vlaneseq
    %v2495 = vshrl.u32 %v2494, 7
    %v2496 = vsub.s32 0, %v2495
    %v2497 = vrot.slane %v2466, %v2496
    %v2498 = vadd.f32 %v2487, %v2497
    %v2499 = vadd.f32 %v2492, %v2497
    %vm2500 = vcmp.gt.f32.partialorder %v2498, 0.0
    %vm2501 = vcmp.gt.f32.partialorder %v2499, 0.0
    %v2502 = vmul.f32 %v2498, 0.2
    %v2503 = vmul.f32 %v2499, 0.2
    %v2504 = vsel %vm2500, %v2498, %v2502
    %v2505 = vsel %vm2501, %v2499, %v2503
    %v2506 = vstv %s2483
    %v2507 = vmul.f32 %v2506, %v2504
    %v2508 = vmul.f32 %v2506, %v2505
    %v2509 = vadd.f32 %v76, %v2507
    %v2510 = vadd.f32 %v77, %v2508
    %s2511 = sld [smem:[#allocation5 + $0x1]]
    %2512 = vset.pattern.permute.xlu0 1
    %2513 = vperm.xlu0 %2512, %v2442
    %v2514 = vpop.permute.xlu0 %2513
    %2516 = vset.pattern.permute.xlu0 1
    %2517 = vperm.xlu0 %2516, %v2447
    %v2518 = vpop.permute.xlu0 %2517
    %v2520 = vlaneseq
    %v2521 = vshrl.u32 %v2520, 7
    %v2522 = vsub.s32 1, %v2521
    %v2523 = vrot.slane %v2466, %v2522
    %v2524 = vadd.f32 %v2514, %v2523
    %v2525 = vadd.f32 %v2518, %v2523
    %vm2526 = vcmp.gt.f32.partialorder %v2524, 0.0
    %vm2527 = vcmp.gt.f32.partialorder %v2525, 0.0
    %v2528 = vmul.f32 %v2524, 0.2
    %v2529 = vmul.f32 %v2525, 0.2
    %v2530 = vsel %vm2526, %v2524, %v2528
    %v2531 = vsel %vm2527, %v2525, %v2529
    %v2532 = vstv %s2511
    %v2533 = vmul.f32 %v2532, %v2530
    %v2534 = vmul.f32 %v2532, %v2531
    %v2535 = vadd.f32 %v2509, %v2533
    %v2536 = vadd.f32 %v2510, %v2534
    %s2537 = sld [smem:[#allocation5 + $0x2]]
    %2538 = vset.pattern.permute.xlu0 2
    %2539 = vperm.xlu0 %2538, %v2442
    %v2540 = vpop.permute.xlu0 %2539
    %2542 = vset.pattern.permute.xlu0 2
    %2543 = vperm.xlu0 %2542, %v2447
    %v2544 = vpop.permute.xlu0 %2543
    %v2546 = vlaneseq
    %v2547 = vshrl.u32 %v2546, 7
    %v2548 = vsub.s32 2, %v2547
    %v2549 = vrot.slane %v2466, %v2548
    %v2550 = vadd.f32 %v2540, %v2549
    %v2551 = vadd.f32 %v2544, %v2549
    %vm2552 = vcmp.gt.f32.partialorder %v2550, 0.0
    %vm2553 = vcmp.gt.f32.partialorder %v2551, 0.0
    %v2554 = vmul.f32 %v2550, 0.2
    %v2555 = vmul.f32 %v2551, 0.2
    %v2556 = vsel %vm2552, %v2550, %v2554
    %v2557 = vsel %vm2553, %v2551, %v2555
    %v2558 = vstv %s2537
    %v2559 = vmul.f32 %v2558, %v2556
    %v2560 = vmul.f32 %v2558, %v2557
    %v2561 = vadd.f32 %v2535, %v2559
    %v2562 = vadd.f32 %v2536, %v2560
    %s2563 = sld [smem:[#allocation5 + $0x3]]
    %2564 = vset.pattern.permute.xlu0 3
    %2565 = vperm.xlu0 %2564, %v2442
    %v2566 = vpop.permute.xlu0 %2565
    %2568 = vset.pattern.permute.xlu0 3
    %2569 = vperm.xlu0 %2568, %v2447
    %v2570 = vpop.permute.xlu0 %2569
    %v2572 = vlaneseq
    %v2573 = vshrl.u32 %v2572, 7
    %v2574 = vsub.s32 3, %v2573
    %v2575 = vrot.slane %v2466, %v2574
    %v2576 = vadd.f32 %v2566, %v2575
    %v2577 = vadd.f32 %v2570, %v2575
    %vm2578 = vcmp.gt.f32.partialorder %v2576, 0.0
    %vm2579 = vcmp.gt.f32.partialorder %v2577, 0.0
    %v2580 = vmul.f32 %v2576, 0.2
    %v2581 = vmul.f32 %v2577, 0.2
    %v2582 = vsel %vm2578, %v2576, %v2580
    %v2583 = vsel %vm2579, %v2577, %v2581
    %v2584 = vstv %s2563
    %v2585 = vmul.f32 %v2584, %v2582
    %v2586 = vmul.f32 %v2584, %v2583
    %v2587 = vadd.f32 %v2561, %v2585
    %v2588 = vadd.f32 %v2562, %v2586
    %s2589 = sld [smem:[#allocation5 + $0x4]]
    %2590 = vset.pattern.permute.xlu0 4
    %2591 = vperm.xlu0 %2590, %v2442
    %v2592 = vpop.permute.xlu0 %2591
    %2594 = vset.pattern.permute.xlu0 4
    %2595 = vperm.xlu0 %2594, %v2447
    %v2596 = vpop.permute.xlu0 %2595
    %v2598 = vlaneseq
    %v2599 = vshrl.u32 %v2598, 7
    %v2600 = vsub.s32 4, %v2599
    %v2601 = vrot.slane %v2466, %v2600
    %v2602 = vadd.f32 %v2592, %v2601
    %v2603 = vadd.f32 %v2596, %v2601
    %vm2604 = vcmp.gt.f32.partialorder %v2602, 0.0
    %vm2605 = vcmp.gt.f32.partialorder %v2603, 0.0
    %v2606 = vmul.f32 %v2602, 0.2
    %v2607 = vmul.f32 %v2603, 0.2
    %v2608 = vsel %vm2604, %v2602, %v2606
    %v2609 = vsel %vm2605, %v2603, %v2607
    %v2610 = vstv %s2589
    %v2611 = vmul.f32 %v2610, %v2608
    %v2612 = vmul.f32 %v2610, %v2609
    %v2613 = vadd.f32 %v2587, %v2611
    %v2614 = vadd.f32 %v2588, %v2612
    %s2615 = sld [smem:[#allocation5 + $0x5]]
    %2616 = vset.pattern.permute.xlu0 5
    %2617 = vperm.xlu0 %2616, %v2442
    %v2618 = vpop.permute.xlu0 %2617
    %2620 = vset.pattern.permute.xlu0 5
    %2621 = vperm.xlu0 %2620, %v2447
    %v2622 = vpop.permute.xlu0 %2621
    %v2624 = vlaneseq
    %v2625 = vshrl.u32 %v2624, 7
    %v2626 = vsub.s32 5, %v2625
    %v2627 = vrot.slane %v2466, %v2626
    %v2628 = vadd.f32 %v2618, %v2627
    %v2629 = vadd.f32 %v2622, %v2627
    %vm2630 = vcmp.gt.f32.partialorder %v2628, 0.0
    %vm2631 = vcmp.gt.f32.partialorder %v2629, 0.0
    %v2632 = vmul.f32 %v2628, 0.2
    %v2633 = vmul.f32 %v2629, 0.2
    %v2634 = vsel %vm2630, %v2628, %v2632
    %v2635 = vsel %vm2631, %v2629, %v2633
    %v2636 = vstv %s2615
    %v2637 = vmul.f32 %v2636, %v2634
    %v2638 = vmul.f32 %v2636, %v2635
    %v2639 = vadd.f32 %v2613, %v2637
    %v2640 = vadd.f32 %v2614, %v2638
    %s2641 = sld [smem:[#allocation5 + $0x6]]
    %2642 = vset.pattern.permute.xlu0 6
    %2643 = vperm.xlu0 %2642, %v2442
    %v2644 = vpop.permute.xlu0 %2643
    %2646 = vset.pattern.permute.xlu0 6
    %2647 = vperm.xlu0 %2646, %v2447
    %v2648 = vpop.permute.xlu0 %2647
    %v2650 = vlaneseq
    %v2651 = vshrl.u32 %v2650, 7
    %v2652 = vsub.s32 6, %v2651
    %v2653 = vrot.slane %v2466, %v2652
    %v2654 = vadd.f32 %v2644, %v2653
    %v2655 = vadd.f32 %v2648, %v2653
    %vm2656 = vcmp.gt.f32.partialorder %v2654, 0.0
    %vm2657 = vcmp.gt.f32.partialorder %v2655, 0.0
    %v2658 = vmul.f32 %v2654, 0.2
    %v2659 = vmul.f32 %v2655, 0.2
    %v2660 = vsel %vm2656, %v2654, %v2658
    %v2661 = vsel %vm2657, %v2655, %v2659
    %v2662 = vstv %s2641
    %v2663 = vmul.f32 %v2662, %v2660
    %v2664 = vmul.f32 %v2662, %v2661
    %v2665 = vadd.f32 %v2639, %v2663
    %v2666 = vadd.f32 %v2640, %v2664
    %s2667 = sld [smem:[#allocation5 + $0x7]]
    %2668 = vset.pattern.permute.xlu0 7
    %2669 = vperm.xlu0 %2668, %v2442
    %v2670 = vpop.permute.xlu0 %2669
    %2672 = vset.pattern.permute.xlu0 7
    %2673 = vperm.xlu0 %2672, %v2447
    %v2674 = vpop.permute.xlu0 %2673
    %v2676 = vlaneseq
    %v2677 = vshrl.u32 %v2676, 7
    %v2678 = vsub.s32 7, %v2677
    %v2679 = vrot.slane %v2466, %v2678
    %v2680 = vadd.f32 %v2670, %v2679
    %v2681 = vadd.f32 %v2674, %v2679
    %vm2682 = vcmp.gt.f32.partialorder %v2680, 0.0
    %vm2683 = vcmp.gt.f32.partialorder %v2681, 0.0
    %v2684 = vmul.f32 %v2680, 0.2
    %v2685 = vmul.f32 %v2681, 0.2
    %v2686 = vsel %vm2682, %v2680, %v2684
    %v2687 = vsel %vm2683, %v2681, %v2685
    %v2688 = vstv %s2667
    %v2689 = vmul.f32 %v2688, %v2686
    %v2690 = vmul.f32 %v2688, %v2687
    %v2691 = vadd.f32 %v2665, %v2689
    %v2692 = vadd.f32 %v2666, %v2690
    %s2693 = sld [smem:[#allocation5 + $0x8]]
    %2694 = vset.pattern.permute.xlu0 8
    %2695 = vperm.xlu0 %2694, %v2442
    %v2696 = vpop.permute.xlu0 %2695
    %2698 = vset.pattern.permute.xlu0 8
    %2699 = vperm.xlu0 %2698, %v2447
    %v2700 = vpop.permute.xlu0 %2699
    %v2702 = vlaneseq
    %v2703 = vshrl.u32 %v2702, 7
    %v2704 = vsub.s32 0, %v2703
    %v2705 = vrot.slane %v2467, %v2704
    %v2706 = vadd.f32 %v2696, %v2705
    %v2707 = vadd.f32 %v2700, %v2705
    %vm2708 = vcmp.gt.f32.partialorder %v2706, 0.0
    %vm2709 = vcmp.gt.f32.partialorder %v2707, 0.0
    %v2710 = vmul.f32 %v2706, 0.2
    %v2711 = vmul.f32 %v2707, 0.2
    %v2712 = vsel %vm2708, %v2706, %v2710
    %v2713 = vsel %vm2709, %v2707, %v2711
    %v2714 = vstv %s2693
    %v2715 = vmul.f32 %v2714, %v2712
    %v2716 = vmul.f32 %v2714, %v2713
    %v2717 = vadd.f32 %v2691, %v2715
    %v2718 = vadd.f32 %v2692, %v2716
    %s2719 = sld [smem:[#allocation5 + $0x9]]
    %2720 = vset.pattern.permute.xlu0 9
    %2721 = vperm.xlu0 %2720, %v2442
    %v2722 = vpop.permute.xlu0 %2721
    %2724 = vset.pattern.permute.xlu0 9
    %2725 = vperm.xlu0 %2724, %v2447
    %v2726 = vpop.permute.xlu0 %2725
    %v2728 = vlaneseq
    %v2729 = vshrl.u32 %v2728, 7
    %v2730 = vsub.s32 1, %v2729
    %v2731 = vrot.slane %v2467, %v2730
    %v2732 = vadd.f32 %v2722, %v2731
    %v2733 = vadd.f32 %v2726, %v2731
    %vm2734 = vcmp.gt.f32.partialorder %v2732, 0.0
    %vm2735 = vcmp.gt.f32.partialorder %v2733, 0.0
    %v2736 = vmul.f32 %v2732, 0.2
    %v2737 = vmul.f32 %v2733, 0.2
    %v2738 = vsel %vm2734, %v2732, %v2736
    %v2739 = vsel %vm2735, %v2733, %v2737
    %v2740 = vstv %s2719
    %v2741 = vmul.f32 %v2740, %v2738
    %v2742 = vmul.f32 %v2740, %v2739
    %v2743 = vadd.f32 %v2717, %v2741
    %v2744 = vadd.f32 %v2718, %v2742
    %s2745 = sld [smem:[#allocation5 + $0xa]]
    %2746 = vset.pattern.permute.xlu0 10
    %2747 = vperm.xlu0 %2746, %v2442
    %v2748 = vpop.permute.xlu0 %2747
    %2750 = vset.pattern.permute.xlu0 10
    %2751 = vperm.xlu0 %2750, %v2447
    %v2752 = vpop.permute.xlu0 %2751
    %v2754 = vlaneseq
    %v2755 = vshrl.u32 %v2754, 7
    %v2756 = vsub.s32 2, %v2755
    %v2757 = vrot.slane %v2467, %v2756
    %v2758 = vadd.f32 %v2748, %v2757
    %v2759 = vadd.f32 %v2752, %v2757
    %vm2760 = vcmp.gt.f32.partialorder %v2758, 0.0
    %vm2761 = vcmp.gt.f32.partialorder %v2759, 0.0
    %v2762 = vmul.f32 %v2758, 0.2
    %v2763 = vmul.f32 %v2759, 0.2
    %v2764 = vsel %vm2760, %v2758, %v2762
    %v2765 = vsel %vm2761, %v2759, %v2763
    %v2766 = vstv %s2745
    %v2767 = vmul.f32 %v2766, %v2764
    %v2768 = vmul.f32 %v2766, %v2765
    %v2769 = vadd.f32 %v2743, %v2767
    %v2770 = vadd.f32 %v2744, %v2768
    %s2771 = sld [smem:[#allocation5 + $0xb]]
    %2772 = vset.pattern.permute.xlu0 11
    %2773 = vperm.xlu0 %2772, %v2442
    %v2774 = vpop.permute.xlu0 %2773
    %2776 = vset.pattern.permute.xlu0 11
    %2777 = vperm.xlu0 %2776, %v2447
    %v2778 = vpop.permute.xlu0 %2777
    %v2780 = vlaneseq
    %v2781 = vshrl.u32 %v2780, 7
    %v2782 = vsub.s32 3, %v2781
    %v2783 = vrot.slane %v2467, %v2782
    %v2784 = vadd.f32 %v2774, %v2783
    %v2785 = vadd.f32 %v2778, %v2783
    %vm2786 = vcmp.gt.f32.partialorder %v2784, 0.0
    %vm2787 = vcmp.gt.f32.partialorder %v2785, 0.0
    %v2788 = vmul.f32 %v2784, 0.2
    %v2789 = vmul.f32 %v2785, 0.2
    %v2790 = vsel %vm2786, %v2784, %v2788
    %v2791 = vsel %vm2787, %v2785, %v2789
    %v2792 = vstv %s2771
    %v2793 = vmul.f32 %v2792, %v2790
    %v2794 = vmul.f32 %v2792, %v2791
    %v2795 = vadd.f32 %v2769, %v2793
    %v2796 = vadd.f32 %v2770, %v2794
    %s2797 = sld [smem:[#allocation5 + $0xc]]
    %2798 = vset.pattern.permute.xlu0 12
    %2799 = vperm.xlu0 %2798, %v2442
    %v2800 = vpop.permute.xlu0 %2799
    %2802 = vset.pattern.permute.xlu0 12
    %2803 = vperm.xlu0 %2802, %v2447
    %v2804 = vpop.permute.xlu0 %2803
    %v2806 = vlaneseq
    %v2807 = vshrl.u32 %v2806, 7
    %v2808 = vsub.s32 4, %v2807
    %v2809 = vrot.slane %v2467, %v2808
    %v2810 = vadd.f32 %v2800, %v2809
    %v2811 = vadd.f32 %v2804, %v2809
    %vm2812 = vcmp.gt.f32.partialorder %v2810, 0.0
    %vm2813 = vcmp.gt.f32.partialorder %v2811, 0.0
    %v2814 = vmul.f32 %v2810, 0.2
    %v2815 = vmul.f32 %v2811, 0.2
    %v2816 = vsel %vm2812, %v2810, %v2814
    %v2817 = vsel %vm2813, %v2811, %v2815
    %v2818 = vstv %s2797
    %v2819 = vmul.f32 %v2818, %v2816
    %v2820 = vmul.f32 %v2818, %v2817
    %v2821 = vadd.f32 %v2795, %v2819
    %v2822 = vadd.f32 %v2796, %v2820
    %s2823 = sld [smem:[#allocation5 + $0xd]]
    %2824 = vset.pattern.permute.xlu0 13
    %2825 = vperm.xlu0 %2824, %v2442
    %v2826 = vpop.permute.xlu0 %2825
    %2828 = vset.pattern.permute.xlu0 13
    %2829 = vperm.xlu0 %2828, %v2447
    %v2830 = vpop.permute.xlu0 %2829
    %v2832 = vlaneseq
    %v2833 = vshrl.u32 %v2832, 7
    %v2834 = vsub.s32 5, %v2833
    %v2835 = vrot.slane %v2467, %v2834
    %v2836 = vadd.f32 %v2826, %v2835
    %v2837 = vadd.f32 %v2830, %v2835
    %vm2838 = vcmp.gt.f32.partialorder %v2836, 0.0
    %vm2839 = vcmp.gt.f32.partialorder %v2837, 0.0
    %v2840 = vmul.f32 %v2836, 0.2
    %v2841 = vmul.f32 %v2837, 0.2
    %v2842 = vsel %vm2838, %v2836, %v2840
    %v2843 = vsel %vm2839, %v2837, %v2841
    %v2844 = vstv %s2823
    %v2845 = vmul.f32 %v2844, %v2842
    %v2846 = vmul.f32 %v2844, %v2843
    %v2847 = vadd.f32 %v2821, %v2845
    %v2848 = vadd.f32 %v2822, %v2846
    %s2849 = sld [smem:[#allocation5 + $0xe]]
    %2850 = vset.pattern.permute.xlu0 14
    %2851 = vperm.xlu0 %2850, %v2442
    %v2852 = vpop.permute.xlu0 %2851
    %2854 = vset.pattern.permute.xlu0 14
    %2855 = vperm.xlu0 %2854, %v2447
    %v2856 = vpop.permute.xlu0 %2855
    %v2858 = vlaneseq
    %v2859 = vshrl.u32 %v2858, 7
    %v2860 = vsub.s32 6, %v2859
    %v2861 = vrot.slane %v2467, %v2860
    %v2862 = vadd.f32 %v2852, %v2861
    %v2863 = vadd.f32 %v2856, %v2861
    %vm2864 = vcmp.gt.f32.partialorder %v2862, 0.0
    %vm2865 = vcmp.gt.f32.partialorder %v2863, 0.0
    %v2866 = vmul.f32 %v2862, 0.2
    %v2867 = vmul.f32 %v2863, 0.2
    %v2868 = vsel %vm2864, %v2862, %v2866
    %v2869 = vsel %vm2865, %v2863, %v2867
    %v2870 = vstv %s2849
    %v2871 = vmul.f32 %v2870, %v2868
    %v2872 = vmul.f32 %v2870, %v2869
    %v2873 = vadd.f32 %v2847, %v2871
    %v2874 = vadd.f32 %v2848, %v2872
    %s2875 = sld [smem:[#allocation5 + $0xf]]
    %2876 = vset.pattern.permute.xlu0 15
    %2877 = vperm.xlu0 %2876, %v2442
    %v2878 = vpop.permute.xlu0 %2877
    %2880 = vset.pattern.permute.xlu0 15
    %2881 = vperm.xlu0 %2880, %v2447
    %v2882 = vpop.permute.xlu0 %2881
    %v2884 = vlaneseq
    %v2885 = vshrl.u32 %v2884, 7
    %v2886 = vsub.s32 7, %v2885
    %v2887 = vrot.slane %v2467, %v2886
    %v2888 = vadd.f32 %v2878, %v2887
    %v2889 = vadd.f32 %v2882, %v2887
    %vm2890 = vcmp.gt.f32.partialorder %v2888, 0.0
    %vm2891 = vcmp.gt.f32.partialorder %v2889, 0.0
    %v2892 = vmul.f32 %v2888, 0.2
    %v2893 = vmul.f32 %v2889, 0.2
    %v2894 = vsel %vm2890, %v2888, %v2892
    %v2895 = vsel %vm2891, %v2889, %v2893
    %v2896 = vstv %s2875
    %v2897 = vmul.f32 %v2896, %v2894
    %v2898 = vmul.f32 %v2896, %v2895
    %v2899 = vadd.f32 %v2873, %v2897
    %v2900 = vadd.f32 %v2874, %v2898
    %v2901 = vsel %vm704, %v2899, -inf
    %2902 = vmax.xlane.f32.xlu0 %v2901
    %v2903 = vpop.xlane.xlu0 %2902
    %v2904 = vsel %vm704, %v2900, -inf
    %2905 = vmax.xlane.f32.xlu0 %v2904
    %v2906 = vpop.xlane.xlu0 %2905
    %v2907 = vsub.f32 %v2899, %v2903
    %v2908 = vsub.f32 %v2900, %v2906
    %v2909 = vmul.f32 %v2907, 1.442695
    %v2910 = vpow.pop %v2909
    %v2911 = vmul.f32 %v2908, 1.442695
    %v2912 = vpow.pop %v2911
    %v2913 = vsel %vm704, %v2910, 0.0
    %2914 = vadd.xlane.f32.xlu0 %v2913
    %v2915 = vpop.xlane.xlu0 %2914
    %v2916 = vsel %vm704, %v2912, 0.0
    %2917 = vadd.xlane.f32.xlu0 %v2916
    %v2918 = vpop.xlane.xlu0 %2917
    %v2919 = vpack.c.bf16 %v2912, %v2910
    %v2921 = vsel %vm704, %v2919, 0
    %2923 = vmatprep.subr.bf16.mxu0 0
    %2924 = vmatpush1.bf16.msra.mxu0 0
    %2925 = vmatprep.subr.bf16.mxu0 0
    %2926 = vmatpush1.bf16.msra.mxu0 0
    %2927 = vmatprep.subr.bf16.mxu0 0
    %2928 = vmatpush1.bf16.msra.mxu0 0
    %2929 = vmatprep.subr.bf16.mxu0 0
    %2930 = vmatpush1.bf16.msra.mxu0 0
    %2931 = vmatprep.subr.bf16.mxu0 0
    %2932 = vmatpush1.bf16.msra.mxu0 0
    %2933 = vmatprep.subr.bf16.mxu0 0
    %2934 = vmatpush1.bf16.msra.mxu0 0
    %2935 = vmatprep.subr.bf16.mxu0 0
    %2936 = vmatpush1.bf16.msra.mxu0 0
    %2937 = vmatprep.subr.bf16.mxu0 0
    %2938 = vmatpush1.bf16.msra.mxu0 %v2482
    %2939 = vmatprep.subr.bf16.mxu0 0
    %2940 = vmatpush2.bf16.msra.mxu0 0
    %2941 = vmatprep.subr.bf16.mxu0 0
    %2942 = vmatpush2.bf16.msra.mxu0 0
    %2943 = vmatprep.subr.bf16.mxu0 0
    %2944 = vmatpush2.bf16.msra.mxu0 0
    %2945 = vmatprep.subr.bf16.mxu0 0
    %2946 = vmatpush2.bf16.msra.mxu0 0
    %2947 = vmatprep.subr.bf16.mxu0 0
    %2948 = vmatpush2.bf16.msra.mxu0 0
    %2949 = vmatprep.subr.bf16.mxu0 0
    %2950 = vmatpush2.bf16.msra.mxu0 0
    %2951 = vmatprep.subr.bf16.mxu0 0
    %2952 = vmatpush2.bf16.msra.mxu0 0
    %2953 = vmatprep.subr.bf16.mxu0 0
    %2954 = vmatpush2.bf16.msra.mxu0 0
    %2955 = vmatprep.mubr.bf16.mxu0 0
    %2956 = vmatmul.mubr.bf16.gmra.mxu0 %v2921
    %v2957 = vpop.f32.mrf.mxu0
    %v2958 = vadd.f32 0.0, %v2957
    %v2959 = vpop.f32.mrf.mxu0
    %v2960 = vpop.f32.mrf.mxu0
    %v2961 = vadd.f32 0.0, %v2960
    %v2962 = vpop.f32.mrf.mxu0
    %2963 = vdwg.mxu0
    %v2964 = vrcp.pop %v2915
    %v2965 = vmul.f32 %v2958, %v2964
    %v2966 = vrcp.pop %v2918
    %v2967 = vmul.f32 %v2961, %v2966
    %2968 = vst.msk [vmem:[#allocation7] sm:$0xff] %vm704, %v2965
    %2969 = vst.msk [vmem:[#allocation7 + $0x8] sm:$0xff] %vm704, %v2967
    // Predicated region
    $region58: #{tpu_custom_call.1} parent=1 // pred_check
      _
    $region59: #{tpu_custom_call.1} parent=1 // pred_check_branch
      %2971 = sbr.rel (0) target = $region61
    $region60: #{tpu_custom_call.1} parent=1 // pred_region
      %s2973 = ssub.s32 256, 256
      %2974 = vsyncadd [#allocation3], %s2973
      %s2975 = sshll.u32 [#allocation7], 4
      %s2976 = int_to_ptr.vmem [resolvable:$true] %s2975
      %2981 = dma.vmem_to_hbm [thread:$0]  %s2976, 256, %s12, [#allocation3], 128, 128, 8
    $region61: #{tpu_custom_call.1} parent=1 // pred_fallthru
      _
    // Predicated region
    $region62: #{tpu_custom_call.1} parent=1 // pred_check
      _
    $region63: #{tpu_custom_call.1} parent=1 // pred_check_branch
      %2983 = sbr.rel (0) target = $region65
    $region64: #{tpu_custom_call.1} parent=1 // pred_region
      %2984 = dma.done [#allocation3], 256
    $region65: #{tpu_custom_call.1} parent=1 // pred_fallthru
      _
    %2985 = vsyncpa [#allocation3], 1
    %2986 = vsyncpa [#allocation4], 1
    %2987 = vsyncpa [#allocation6], 1

</llo_original>
